<compile_context>
chip_gen: v5e
topology: v5e:2x2
jax: 0.10.0
libtpu: 0.0.40
codegen_flags: <defaults>
</compile_context>

<pallas_src>
import functools

import jax
import jax.numpy as jnp
from jax.experimental import pallas as pl
from jax.experimental.pallas import tpu as pltpu


# ---------------------------------------------------------------------------
# Fused kernel: conv1+bn1+relu -> conv2+bn2 -> relu -> +residual
# ---------------------------------------------------------------------------
def _residual_block_kernel(x_ref, w1_ref, s1_ref, b1_ref,
                           w2_ref, s2_ref, b2_ref,
                           out_ref, pbuf_ref, *, ksize, pad):
    """One image per grid step; both convs + BN + ReLU + residual stay in VMEM.

    x_ref:    (1, H, W, C)       UNPADDED input block (compute dtype)
    w*_ref:   (KH*KW, C, C)      per-tap (Cin, Cout) conv weights
    s*/b*:    (1, C)             folded BN scale / bias (f32)
    out_ref:  (1, H, W, C)       f32 output block
    pbuf_ref: (H + 2*pad, W, C)  VMEM scratch, padded along H only; shared by
                                 the conv1 input and the conv1-output re-pad.
    """
    KH, KW = ksize
    _, H, W, C = out_ref.shape
    Hp = H + 2 * pad
    cdtype = pbuf_ref.dtype

    x = x_ref[0]                                          # (H, W, C)

    # Column index (constant along lanes) used to invalidate the wrapped
    # column of each pltpu.roll-realized kw tap; built once, used by both convs.
    col = jax.lax.broadcasted_iota(jnp.int32, (Hp, W, C), 1)

    def conv_taps(w_ref):
        """KHxKW 'same' conv of pbuf_ref as KH*KW accumulating tap matmuls.

        Row (kh) taps are plain row slices of the H-padded scratch; column
        (kw) taps are sublane rolls on the XLU plus a border mask, so no
        W-padded buffer (and no masked partial store) is ever materialized.
        """
        ypad = pbuf_ref[...]                              # (Hp, W, C)
        shifted = []
        for kw in range(KW):
            d = kw - pad                                  # column offset
            if d == 0:
                shifted.append(ypad)
            else:
                rolled = pltpu.roll(ypad, shift=(-d) % W, axis=1)
                valid = jnp.logical_and(col + d >= 0, col + d < W)
                shifted.append(jnp.where(valid, rolled, jnp.zeros_like(rolled)))
        acc = jnp.zeros((H * W, C), jnp.float32)
        for kh in range(KH):
            for kw in range(KW):
                tap = shifted[kw][kh:kh + H].reshape(H * W, C)
                acc = acc + jnp.dot(tap, w_ref[kh * KW + kw],
                                    preferred_element_type=jnp.float32)
        return acc

    # ---- in-kernel spatial padding of the input: zero ONLY the 2*pad halo
    #      rows (not the whole buffer) and store the unpadded block into the
    #      sublane-aligned interior (full-lane vst, no masking).
    if pad:
        zrow = jnp.zeros((pad, W, C), cdtype)
        pbuf_ref[0:pad] = zrow
        pbuf_ref[pad + H:Hp] = zrow
    pbuf_ref[pad:pad + H] = x

    # ---- conv1 + bn1 + relu (BN folded to scale/bias; epilogue in f32)
    y1 = jnp.maximum(conv_taps(w1_ref) * s1_ref[...] + b1_ref[...], 0.0)

    # ---- re-pad the conv1 activation in the SAME scratch (halo rows are
    #      still zero, interior fully overwritten) -- it never touches HBM.
    pbuf_ref[pad:pad + H] = y1.reshape(H, W, C).astype(cdtype)

    # ---- conv2 + bn2, ReLU BEFORE the residual add (matches the PyTorch module)
    y2 = jnp.maximum(conv_taps(w2_ref) * s2_ref[...] + b2_ref[...], 0.0)
    out = y2 + x.astype(jnp.float32).reshape(H * W, C)
    out_ref[...] = out.reshape(1, H, W, C)


# ---------------------------------------------------------------------------
# pallas_call wrapper (batch-parallel grid, one image per grid step)
# ---------------------------------------------------------------------------
def _run_block(x, w1, s1, b1, w2, s2, b2, *, ksize, pad):
    N, H, W, C = x.shape
    KH, KW = ksize
    Hp = H + 2 * pad

    flops = 2 * 2 * N * H * W * KH * KW * C * C           # both convs
    bytes_accessed = int(x.size * x.dtype.itemsize
                         + (w1.size + w2.size) * w1.dtype.itemsize
                         + 4 * (s1.size + b1.size + s2.size + b2.size)
                         + 4 * N * H * W * C)

    # Weight / BN operands have constant index maps: Pallas does not re-DMA an
    # unchanged block and their double-buffer is ~1 MB, so default buffering is
    # fine here.  (If VMEM-bound at large C, add pipeline_mode=pl.Buffered(1).)
    grid_spec = pltpu.PrefetchScalarGridSpec(
        num_scalar_prefetch=0,
        grid=(N,),
        in_specs=[
            pl.BlockSpec((1, H, W, C), lambda n: (n, 0, 0, 0)),
            pl.BlockSpec((KH * KW, C, C), lambda n: (0, 0, 0)),
            pl.BlockSpec((1, C), lambda n: (0, 0)),
            pl.BlockSpec((1, C), lambda n: (0, 0)),
            pl.BlockSpec((KH * KW, C, C), lambda n: (0, 0, 0)),
            pl.BlockSpec((1, C), lambda n: (0, 0)),
            pl.BlockSpec((1, C), lambda n: (0, 0)),
        ],
        out_specs=pl.BlockSpec((1, H, W, C), lambda n: (n, 0, 0, 0)),
        scratch_shapes=[pltpu.VMEM((Hp, W, C), x.dtype)],
    )

    # TODO(synk): for feature maps large enough that whole-image (Hp, W, C)
    # blocks stop fitting v7x's 64 MiB VMEM (roughly > 64x64 at C >= 256 in
    # f32), add a row-block grid axis with a 1-row halo (manual DMA of the
    # halo rows); at the CIFAR-scale maps this block sees, whole-image blocks
    # fit easily and the batch axis already gives megacore parallelism.
    return pl.pallas_call(
        functools.partial(_residual_block_kernel, ksize=ksize, pad=pad),
        out_shape=jax.ShapeDtypeStruct((N, H, W, C), jnp.float32),
        grid_spec=grid_spec,
        compiler_params=pltpu.CompilerParams(
            dimension_semantics=("parallel",),
            vmem_limit_bytes=64 * 1024 * 1024),
        cost_estimate=pl.CostEstimate(flops=flops, transcendentals=0,
                                      bytes_accessed=bytes_accessed),
    )(x, w1, s1, b1, w2, s2, b2)


# ---------------------------------------------------------------------------
# One-time parameter preparation (weight layout + BN folding + lane padding)
# ---------------------------------------------------------------------------
def _fold_bn(gamma, beta, mean, var, cpad, eps=1e-5):
    scale = gamma / jnp.sqrt(var + eps)
    bias = beta - mean * scale
    scale = jnp.pad(scale, (0, cpad - scale.shape[0])).reshape(1, cpad)
    bias = jnp.pad(bias, (0, cpad - bias.shape[0])).reshape(1, cpad)
    return scale.astype(jnp.float32), bias.astype(jnp.float32)


def _prep_conv_weight(w_oihw, cpad, dtype):
    cout, cin, kh, kw = w_oihw.shape
    w = jnp.transpose(w_oihw, (2, 3, 1, 0))                       # (kh,kw,cin,cout)
    w = jnp.pad(w, ((0, 0), (0, 0), (0, cpad - cin), (0, cpad - cout)))
    return w.reshape(kh * kw, cpad, cpad).astype(dtype)           # one (C,C) per tap


def prepare_residual_block(params, compute_dtype=jnp.float32, eps=1e-5):
    """Run once; keeps the per-forward path free of layout/folding work."""
    cout, cin, kh, kw = params["w1"].shape
    assert cin == cout, "stride=1 residual add requires in_channels == out_channels"
    cpad = max(128, -(-int(cout) // 128) * 128)                   # lane-pad channels
    s1, b1 = _fold_bn(params["bn1_gamma"], params["bn1_beta"],
                      params["bn1_mean"], params["bn1_var"], cpad, eps)
    s2, b2 = _fold_bn(params["bn2_gamma"], params["bn2_beta"],
                      params["bn2_mean"], params["bn2_var"], cpad, eps)
    # TODO(synk): for tiny Cin (e.g. 4) a flattened contraction (KH*KW*Cin=36
    # zero-padded to a single 128-lane MXU pass) would cut MXU work ~9x versus
    # nine Cpad-deep tap matmuls; it is irrelevant once Cin >= 128 (the real
    # ResNet regime) and the toy problem is launch-bound, so the tap layout,
    # which is the right structure at real channel counts, is used throughout.
    return {
        "w1": _prep_conv_weight(params["w1"], cpad, compute_dtype),
        "w2": _prep_conv_weight(params["w2"], cpad, compute_dtype),
        "s1": s1, "b1": b1, "s2": s2, "b2": b2,
        "cpad": cpad, "cout": int(cout), "ksize": (int(kh), int(kw)),
        "compute_dtype": compute_dtype,
    }


# ---------------------------------------------------------------------------
# ResidualBlock forward (stride=1, so the module's downsample branch is None)
# ---------------------------------------------------------------------------
def residual_block_forward_nhwc(x_nhwc, prep, padding):
    """Fast path for stacked blocks: NHWC, channel-padded activations in/out.

    x_nhwc: (N, H, W, Cpad) any float dtype -> (N, H, W, Cpad) float32.
    """
    N, H, W, C = x_nhwc.shape
    KH, KW = prep["ksize"]
    assert C == prep["cpad"]
    assert 2 * padding == KH - 1 and 2 * padding == KW - 1, \
        "residual add needs 'same' padding"
    x = x_nhwc.astype(prep["compute_dtype"])
    return _run_block(x, prep["w1"], prep["s1"], prep["b1"],
                      prep["w2"], prep["s2"], prep["b2"],
                      ksize=prep["ksize"], pad=padding)


def residual_block_forward(x_nchw, prep, padding):
    """PyTorch-shaped interface: (N, Cin, H, W) f32 -> (N, Cout, H, W) f32."""
    N, Cin, H, W = x_nchw.shape
    C = prep["cpad"]
    # NCHW -> NHWC + channel lane-padding (one fused XLA layout op; spatial
    # padding is done inside the kernel, so there is no padded-activation
    # round trip through HBM).
    x = jnp.transpose(x_nchw, (0, 2, 3, 1))
    x = jnp.pad(x, ((0, 0), (0, 0), (0, 0), (0, C - Cin)))
    out = residual_block_forward_nhwc(x, prep, padding)
    out = out[..., :prep["cout"]]                    # drop channel lane padding
    return jnp.transpose(out, (0, 3, 1, 2))          # -> NCHW


# ---------------------------------------------------------------------------
# Pure-JAX reference (matches the PyTorch module: relu BEFORE the residual add)
# ---------------------------------------------------------------------------
def _ref_forward(x_nchw, params, padding):
    def conv(x, w):
        return jax.lax.conv_general_dilated(
            x, w, window_strides=(1, 1),
            padding=[(padding, padding), (padding, padding)],
            dimension_numbers=("NCHW", "OIHW", "NCHW"),
            precision=jax.lax.Precision.HIGHEST)

    def bn(x, g, b, m, v, eps=1e-5):
        g, b, m, v = (t.reshape(1, -1, 1, 1) for t in (g, b, m, v))
        return (x - m) / jnp.sqrt(v + eps) * g + b

    residual = x_nchw
    out = jax.nn.relu(bn(conv(x_nchw, params["w1"]), params["bn1_gamma"],
                         params["bn1_beta"], params["bn1_mean"], params["bn1_var"]))
    out = bn(conv(out, params["w2"]), params["bn2_gamma"], params["bn2_beta"],
             params["bn2_mean"], params["bn2_var"])
    out = jax.nn.relu(out)
    return out + residual


# ---------------------------------------------------------------------------
# Main
# ---------------------------------------------------------------------------
if __name__ == "__main__":
    key = jax.random.PRNGKey(0)
    N, C, H, W = 2, 4, 16, 16          # in_channels = out_channels = 4
    K, PAD, STRIDE = 3, 1, 1           # stride=1 -> no downsample branch

    ks = jax.random.split(key, 9)
    params = {
        "w1": 0.1 * jax.random.normal(ks[0], (C, C, K, K), jnp.float32),
        "w2": 0.1 * jax.random.normal(ks[1], (C, C, K, K), jnp.float32),
        "bn1_gamma": 1.0 + 0.1 * jax.random.normal(ks[2], (C,), jnp.float32),
        "bn1_beta": 0.1 * jax.random.normal(ks[3], (C,), jnp.float32),
        "bn1_mean": 0.05 * jax.random.normal(ks[4], (C,), jnp.float32),
        "bn1_var": jnp.abs(1.0 + 0.1 * jax.random.normal(ks[5], (C,), jnp.float32)),
        "bn2_gamma": 1.0 + 0.1 * jax.random.normal(ks[6], (C,), jnp.float32),
        "bn2_beta": 0.1 * jax.random.normal(ks[7], (C,), jnp.float32),
        "bn2_mean": jnp.zeros((C,), jnp.float32),
        "bn2_var": jnp.ones((C,), jnp.float32),
    }
    x = jax.random.normal(ks[8], (N, C, H, W), jnp.float32)

    ref = jax.block_until_ready(_ref_forward(x, params, PAD))

    # f32 operands: tolerance covers the default (non-HIGHEST) MXU matmul
    # precision for f32 inputs.  bf16 operands (f32 accumulation / epilogue):
    # looser tolerance per bf16 rounding of inputs and weights.
    for dtype, tol in ((jnp.float32, 1e-2), (jnp.bfloat16, 5e-2)):
        prep = prepare_residual_block(params, compute_dtype=dtype)   # one-time
        out = jax.block_until_ready(residual_block_forward(x, prep, PAD))
        assert out.shape == (N, C, H, W), out.shape
        err = float(jnp.max(jnp.abs(out - ref)))
        assert jnp.allclose(out, ref, atol=tol, rtol=tol), (str(dtype), err)

    print("KERNEL_OK")
</pallas_src>

<mosaic_0001>
module attributes {stable_mosaic.version = 11 : i64} {
  func.func @_residual_block_kernel(%arg0: i32, %arg1: memref<1x16x16x128xf32, #tpu.memory_space<vmem>>, %arg2: memref<9x128x128xf32, #tpu.memory_space<vmem>>, %arg3: memref<1x128xf32, #tpu.memory_space<vmem>>, %arg4: memref<1x128xf32, #tpu.memory_space<vmem>>, %arg5: memref<9x128x128xf32, #tpu.memory_space<vmem>>, %arg6: memref<1x128xf32, #tpu.memory_space<vmem>>, %arg7: memref<1x128xf32, #tpu.memory_space<vmem>>, %arg8: memref<1x16x16x128xf32, #tpu.memory_space<vmem>>, %arg9: memref<18x16x128xf32, #tpu.memory_space<vmem>>) attributes {dimension_semantics = [#tpu.dimension_semantics<parallel>], iteration_bounds = array<i64: 2>, scalar_prefetch = 0 : i64, scratch_operands = 1 : i64, tpu.core_type = #tpu.core_type<tc>, window_params = [{transform_indices = @transform_0, window_bounds = array<i64: 1, 16, 16, 128>}, {pipeline_mode = #tpu.pipeline_mode<synchronous>, transform_indices = @transform_1, window_bounds = array<i64: 9, 128, 128>}, {pipeline_mode = #tpu.pipeline_mode<synchronous>, transform_indices = @transform_2, window_bounds = array<i64: 1, 128>}, {pipeline_mode = #tpu.pipeline_mode<synchronous>, transform_indices = @transform_3, window_bounds = array<i64: 1, 128>}, {pipeline_mode = #tpu.pipeline_mode<synchronous>, transform_indices = @transform_4, window_bounds = array<i64: 9, 128, 128>}, {pipeline_mode = #tpu.pipeline_mode<synchronous>, transform_indices = @transform_5, window_bounds = array<i64: 1, 128>}, {pipeline_mode = #tpu.pipeline_mode<synchronous>, transform_indices = @transform_6, window_bounds = array<i64: 1, 128>}, {transform_indices = @transform_7, window_bounds = array<i64: 1, 16, 16, 128>}]} {
    %c0 = arith.constant 0 : index
    %c0_0 = arith.constant 0 : index
    %c0_1 = arith.constant 0 : index
    %c0_2 = arith.constant 0 : index
    %0 = vector.load %arg1[%c0, %c0_0, %c0_1, %c0_2] : memref<1x16x16x128xf32, #tpu.memory_space<vmem>>, vector<1x16x16x128xf32>
    %1 = vector.shape_cast %0 : vector<1x16x16x128xf32> to vector<16x16x128xf32>
    %2 = tpu.iota {dimensions = array<i32: 1>} : vector<18x16x128xi32>
    %cst = arith.constant 0.000000e+00 : f32
    %3 = vector.broadcast %cst : f32 to vector<1x16x128xf32>
    %c0_3 = arith.constant 0 : index
    %c0_4 = arith.constant 0 : index
    %c0_5 = arith.constant 0 : index
    %4 = vector.load %arg9[%c0_3, %c0_4, %c0_5] : memref<18x16x128xf32, #tpu.memory_space<vmem>>, vector<1x16x128xf32>
    tpu.vector_store %arg9[%c0_3, %c0_4, %c0_5], %3 {strides = array<i32>} : memref<18x16x128xf32, #tpu.memory_space<vmem>>, vector<1x16x128xf32>,
    %c17 = arith.constant 17 : index
    %c0_6 = arith.constant 0 : index
    %c0_7 = arith.constant 0 : index
    %5 = vector.load %arg9[%c17, %c0_6, %c0_7] : memref<18x16x128xf32, #tpu.memory_space<vmem>>, vector<1x16x128xf32>
    tpu.vector_store %arg9[%c17, %c0_6, %c0_7], %3 {strides = array<i32>} : memref<18x16x128xf32, #tpu.memory_space<vmem>>, vector<1x16x128xf32>,
    %c1 = arith.constant 1 : index
    %c0_8 = arith.constant 0 : index
    %c0_9 = arith.constant 0 : index
    %6 = vector.load %arg9[%c1, %c0_8, %c0_9] : memref<18x16x128xf32, #tpu.memory_space<vmem>>, vector<16x16x128xf32>
    tpu.vector_store %arg9[%c1, %c0_8, %c0_9], %1 {strides = array<i32>} : memref<18x16x128xf32, #tpu.memory_space<vmem>>, vector<16x16x128xf32>,
    %c0_10 = arith.constant 0 : index
    %c0_11 = arith.constant 0 : index
    %c0_12 = arith.constant 0 : index
    %7 = vector.load %arg9[%c0_10, %c0_11, %c0_12] : memref<18x16x128xf32, #tpu.memory_space<vmem>>, vector<18x16x128xf32>
    %c1_i32 = arith.constant 1 : i32
    %8 = tpu.dynamic_rotate %7 by %c1_i32 dim 1 : vector<18x16x128xf32>, i32 -> vector<18x16x128xf32>
    %c-1_i32 = arith.constant -1 : i32
    %9 = vector.broadcast %c-1_i32 : i32 to vector<18x16x128xi32>
    %10 = arith.addi %2, %9 : vector<18x16x128xi32>
    %c0_i32 = arith.constant 0 : i32
    %11 = vector.broadcast %c0_i32 : i32 to vector<18x16x128xi32>
    %12 = arith.cmpi sge, %10, %11 : vector<18x16x128xi32>
    %c-1_i32_13 = arith.constant -1 : i32
    %13 = vector.broadcast %c-1_i32_13 : i32 to vector<18x16x128xi32>
    %14 = arith.addi %2, %13 : vector<18x16x128xi32>
    %c16_i32 = arith.constant 16 : i32
    %15 = vector.broadcast %c16_i32 : i32 to vector<18x16x128xi32>
    %16 = arith.cmpi slt, %14, %15 : vector<18x16x128xi32>
    %17 = arith.andi %12, %16 : vector<18x16x128xi1>
    %cst_14 = arith.constant 0.000000e+00 : f32
    %18 = vector.broadcast %cst_14 : f32 to vector<18x16x128xf32>
    %19 = arith.select %17, %8, %18 : vector<18x16x128xi1>, vector<18x16x128xf32>
    %c15_i32 = arith.constant 15 : i32
    %20 = tpu.dynamic_rotate %7 by %c15_i32 dim 1 : vector<18x16x128xf32>, i32 -> vector<18x16x128xf32>
    %c1_i32_15 = arith.constant 1 : i32
    %21 = vector.broadcast %c1_i32_15 : i32 to vector<18x16x128xi32>
    %22 = arith.addi %2, %21 : vector<18x16x128xi32>
    %c0_i32_16 = arith.constant 0 : i32
    %23 = vector.broadcast %c0_i32_16 : i32 to vector<18x16x128xi32>
    %24 = arith.cmpi sge, %22, %23 : vector<18x16x128xi32>
    %c1_i32_17 = arith.constant 1 : i32
    %25 = vector.broadcast %c1_i32_17 : i32 to vector<18x16x128xi32>
    %26 = arith.addi %2, %25 : vector<18x16x128xi32>
    %c16_i32_18 = arith.constant 16 : i32
    %27 = vector.broadcast %c16_i32_18 : i32 to vector<18x16x128xi32>
    %28 = arith.cmpi slt, %26, %27 : vector<18x16x128xi32>
    %29 = arith.andi %24, %28 : vector<18x16x128xi1>
    %cst_19 = arith.constant 0.000000e+00 : f32
    %30 = vector.broadcast %cst_19 : f32 to vector<18x16x128xf32>
    %31 = arith.select %29, %20, %30 : vector<18x16x128xi1>, vector<18x16x128xf32>
    %cst_20 = arith.constant 0.000000e+00 : f32
    %32 = vector.broadcast %cst_20 : f32 to vector<256x128xf32>
    %33 = vector.extract_strided_slice %19 {offsets = [0, 0, 0], sizes = [16, 16, 128], strides = [1, 1, 1]} : vector<18x16x128xf32> to vector<16x16x128xf32>
    %34 = vector.shape_cast %33 : vector<16x16x128xf32> to vector<256x128xf32>
    %c0_21 = arith.constant 0 : index
    %c0_22 = arith.constant 0 : index
    %c0_23 = arith.constant 0 : index
    %35 = vector.load %arg2[%c0_21, %c0_22, %c0_23] : memref<9x128x128xf32, #tpu.memory_space<vmem>>, vector<1x128x128xf32>
    %36 = vector.shape_cast %35 : vector<1x128x128xf32> to vector<128x128xf32>
    %cst_24 = arith.constant dense<0.000000e+00> : vector<256x128xf32>
    %37 = tpu.matmul %34, %36, %cst_24 {dimension_numbers = #tpu.dot_dimension_numbers<[1], [0], [0], [1], [0, 0, 1, 1], [], []>} : vector<256x128xf32>, vector<128x128xf32>, vector<256x128xf32> -> vector<256x128xf32>
    %38 = arith.addf %32, %37 : vector<256x128xf32>
    %39 = vector.extract_strided_slice %7 {offsets = [0, 0, 0], sizes = [16, 16, 128], strides = [1, 1, 1]} : vector<18x16x128xf32> to vector<16x16x128xf32>
    %40 = vector.shape_cast %39 : vector<16x16x128xf32> to vector<256x128xf32>
    %c1_25 = arith.constant 1 : index
    %c0_26 = arith.constant 0 : index
    %c0_27 = arith.constant 0 : index
    %41 = vector.load %arg2[%c1_25, %c0_26, %c0_27] : memref<9x128x128xf32, #tpu.memory_space<vmem>>, vector<1x128x128xf32>
    %42 = vector.shape_cast %41 : vector<1x128x128xf32> to vector<128x128xf32>
    %cst_28 = arith.constant dense<0.000000e+00> : vector<256x128xf32>
    %43 = tpu.matmul %40, %42, %cst_28 {dimension_numbers = #tpu.dot_dimension_numbers<[1], [0], [0], [1], [0, 0, 1, 1], [], []>} : vector<256x128xf32>, vector<128x128xf32>, vector<256x128xf32> -> vector<256x128xf32>
    %44 = arith.addf %38, %43 : vector<256x128xf32>
    %45 = vector.extract_strided_slice %31 {offsets = [0, 0, 0], sizes = [16, 16, 128], strides = [1, 1, 1]} : vector<18x16x128xf32> to vector<16x16x128xf32>
    %46 = vector.shape_cast %45 : vector<16x16x128xf32> to vector<256x128xf32>
    %c2 = arith.constant 2 : index
    %c0_29 = arith.constant 0 : index
    %c0_30 = arith.constant 0 : index
    %47 = vector.load %arg2[%c2, %c0_29, %c0_30] : memref<9x128x128xf32, #tpu.memory_space<vmem>>, vector<1x128x128xf32>
    %48 = vector.shape_cast %47 : vector<1x128x128xf32> to vector<128x128xf32>
    %cst_31 = arith.constant dense<0.000000e+00> : vector<256x128xf32>
    %49 = tpu.matmul %46, %48, %cst_31 {dimension_numbers = #tpu.dot_dimension_numbers<[1], [0], [0], [1], [0, 0, 1, 1], [], []>} : vector<256x128xf32>, vector<128x128xf32>, vector<256x128xf32> -> vector<256x128xf32>
    %50 = arith.addf %44, %49 : vector<256x128xf32>
    %51 = vector.extract_strided_slice %19 {offsets = [1, 0, 0], sizes = [16, 16, 128], strides = [1, 1, 1]} : vector<18x16x128xf32> to vector<16x16x128xf32>
    %52 = vector.shape_cast %51 : vector<16x16x128xf32> to vector<256x128xf32>
    %c3 = arith.constant 3 : index
    %c0_32 = arith.constant 0 : index
    %c0_33 = arith.constant 0 : index
    %53 = vector.load %arg2[%c3, %c0_32, %c0_33] : memref<9x128x128xf32, #tpu.memory_space<vmem>>, vector<1x128x128xf32>
    %54 = vector.shape_cast %53 : vector<1x128x128xf32> to vector<128x128xf32>
    %cst_34 = arith.constant dense<0.000000e+00> : vector<256x128xf32>
    %55 = tpu.matmul %52, %54, %cst_34 {dimension_numbers = #tpu.dot_dimension_numbers<[1], [0], [0], [1], [0, 0, 1, 1], [], []>} : vector<256x128xf32>, vector<128x128xf32>, vector<256x128xf32> -> vector<256x128xf32>
    %56 = arith.addf %50, %55 : vector<256x128xf32>
    %57 = vector.extract_strided_slice %7 {offsets = [1, 0, 0], sizes = [16, 16, 128], strides = [1, 1, 1]} : vector<18x16x128xf32> to vector<16x16x128xf32>
    %58 = vector.shape_cast %57 : vector<16x16x128xf32> to vector<256x128xf32>
    %c4 = arith.constant 4 : index
    %c0_35 = arith.constant 0 : index
    %c0_36 = arith.constant 0 : index
    %59 = vector.load %arg2[%c4, %c0_35, %c0_36] : memref<9x128x128xf32, #tpu.memory_space<vmem>>, vector<1x128x128xf32>
    %60 = vector.shape_cast %59 : vector<1x128x128xf32> to vector<128x128xf32>
    %cst_37 = arith.constant dense<0.000000e+00> : vector<256x128xf32>
    %61 = tpu.matmul %58, %60, %cst_37 {dimension_numbers = #tpu.dot_dimension_numbers<[1], [0], [0], [1], [0, 0, 1, 1], [], []>} : vector<256x128xf32>, vector<128x128xf32>, vector<256x128xf32> -> vector<256x128xf32>
    %62 = arith.addf %56, %61 : vector<256x128xf32>
    %63 = vector.extract_strided_slice %31 {offsets = [1, 0, 0], sizes = [16, 16, 128], strides = [1, 1, 1]} : vector<18x16x128xf32> to vector<16x16x128xf32>
    %64 = vector.shape_cast %63 : vector<16x16x128xf32> to vector<256x128xf32>
    %c5 = arith.constant 5 : index
    %c0_38 = arith.constant 0 : index
    %c0_39 = arith.constant 0 : index
    %65 = vector.load %arg2[%c5, %c0_38, %c0_39] : memref<9x128x128xf32, #tpu.memory_space<vmem>>, vector<1x128x128xf32>
    %66 = vector.shape_cast %65 : vector<1x128x128xf32> to vector<128x128xf32>
    %cst_40 = arith.constant dense<0.000000e+00> : vector<256x128xf32>
    %67 = tpu.matmul %64, %66, %cst_40 {dimension_numbers = #tpu.dot_dimension_numbers<[1], [0], [0], [1], [0, 0, 1, 1], [], []>} : vector<256x128xf32>, vector<128x128xf32>, vector<256x128xf32> -> vector<256x128xf32>
    %68 = arith.addf %62, %67 : vector<256x128xf32>
    %69 = vector.extract_strided_slice %19 {offsets = [2, 0, 0], sizes = [16, 16, 128], strides = [1, 1, 1]} : vector<18x16x128xf32> to vector<16x16x128xf32>
    %70 = vector.shape_cast %69 : vector<16x16x128xf32> to vector<256x128xf32>
    %c6 = arith.constant 6 : index
    %c0_41 = arith.constant 0 : index
    %c0_42 = arith.constant 0 : index
    %71 = vector.load %arg2[%c6, %c0_41, %c0_42] : memref<9x128x128xf32, #tpu.memory_space<vmem>>, vector<1x128x128xf32>
    %72 = vector.shape_cast %71 : vector<1x128x128xf32> to vector<128x128xf32>
    %cst_43 = arith.constant dense<0.000000e+00> : vector<256x128xf32>
    %73 = tpu.matmul %70, %72, %cst_43 {dimension_numbers = #tpu.dot_dimension_numbers<[1], [0], [0], [1], [0, 0, 1, 1], [], []>} : vector<256x128xf32>, vector<128x128xf32>, vector<256x128xf32> -> vector<256x128xf32>
    %74 = arith.addf %68, %73 : vector<256x128xf32>
    %75 = vector.extract_strided_slice %7 {offsets = [2, 0, 0], sizes = [16, 16, 128], strides = [1, 1, 1]} : vector<18x16x128xf32> to vector<16x16x128xf32>
    %76 = vector.shape_cast %75 : vector<16x16x128xf32> to vector<256x128xf32>
    %c7 = arith.constant 7 : index
    %c0_44 = arith.constant 0 : index
    %c0_45 = arith.constant 0 : index
    %77 = vector.load %arg2[%c7, %c0_44, %c0_45] : memref<9x128x128xf32, #tpu.memory_space<vmem>>, vector<1x128x128xf32>
    %78 = vector.shape_cast %77 : vector<1x128x128xf32> to vector<128x128xf32>
    %cst_46 = arith.constant dense<0.000000e+00> : vector<256x128xf32>
    %79 = tpu.matmul %76, %78, %cst_46 {dimension_numbers = #tpu.dot_dimension_numbers<[1], [0], [0], [1], [0, 0, 1, 1], [], []>} : vector<256x128xf32>, vector<128x128xf32>, vector<256x128xf32> -> vector<256x128xf32>
    %80 = arith.addf %74, %79 : vector<256x128xf32>
    %81 = vector.extract_strided_slice %31 {offsets = [2, 0, 0], sizes = [16, 16, 128], strides = [1, 1, 1]} : vector<18x16x128xf32> to vector<16x16x128xf32>
    %82 = vector.shape_cast %81 : vector<16x16x128xf32> to vector<256x128xf32>
    %c8 = arith.constant 8 : index
    %c0_47 = arith.constant 0 : index
    %c0_48 = arith.constant 0 : index
    %83 = vector.load %arg2[%c8, %c0_47, %c0_48] : memref<9x128x128xf32, #tpu.memory_space<vmem>>, vector<1x128x128xf32>
    %84 = vector.shape_cast %83 : vector<1x128x128xf32> to vector<128x128xf32>
    %cst_49 = arith.constant dense<0.000000e+00> : vector<256x128xf32>
    %85 = tpu.matmul %82, %84, %cst_49 {dimension_numbers = #tpu.dot_dimension_numbers<[1], [0], [0], [1], [0, 0, 1, 1], [], []>} : vector<256x128xf32>, vector<128x128xf32>, vector<256x128xf32> -> vector<256x128xf32>
    %86 = arith.addf %80, %85 : vector<256x128xf32>
    %c0_50 = arith.constant 0 : index
    %c0_51 = arith.constant 0 : index
    %87 = vector.load %arg3[%c0_50, %c0_51] : memref<1x128xf32, #tpu.memory_space<vmem>>, vector<1x128xf32>
    %88 = vector.broadcast %87 : vector<1x128xf32> to vector<256x128xf32>
    %89 = arith.mulf %86, %88 : vector<256x128xf32>
    %c0_52 = arith.constant 0 : index
    %c0_53 = arith.constant 0 : index
    %90 = vector.load %arg4[%c0_52, %c0_53] : memref<1x128xf32, #tpu.memory_space<vmem>>, vector<1x128xf32>
    %91 = vector.broadcast %90 : vector<1x128xf32> to vector<256x128xf32>
    %92 = arith.addf %89, %91 : vector<256x128xf32>
    %cst_54 = arith.constant 0.000000e+00 : f32
    %93 = vector.broadcast %cst_54 : f32 to vector<256x128xf32>
    %94 = arith.maximumf %92, %93 : vector<256x128xf32>
    %95 = vector.shape_cast %94 : vector<256x128xf32> to vector<16x16x128xf32>
    %c1_55 = arith.constant 1 : index
    %c0_56 = arith.constant 0 : index
    %c0_57 = arith.constant 0 : index
    %96 = vector.load %arg9[%c1_55, %c0_56, %c0_57] : memref<18x16x128xf32, #tpu.memory_space<vmem>>, vector<16x16x128xf32>
    tpu.vector_store %arg9[%c1_55, %c0_56, %c0_57], %95 {strides = array<i32>} : memref<18x16x128xf32, #tpu.memory_space<vmem>>, vector<16x16x128xf32>,
    %c0_58 = arith.constant 0 : index
    %c0_59 = arith.constant 0 : index
    %c0_60 = arith.constant 0 : index
    %97 = vector.load %arg9[%c0_58, %c0_59, %c0_60] : memref<18x16x128xf32, #tpu.memory_space<vmem>>, vector<18x16x128xf32>
    %c1_i32_61 = arith.constant 1 : i32
    %98 = tpu.dynamic_rotate %97 by %c1_i32_61 dim 1 : vector<18x16x128xf32>, i32 -> vector<18x16x128xf32>
    %c-1_i32_62 = arith.constant -1 : i32
    %99 = vector.broadcast %c-1_i32_62 : i32 to vector<18x16x128xi32>
    %100 = arith.addi %2, %99 : vector<18x16x128xi32>
    %c0_i32_63 = arith.constant 0 : i32
    %101 = vector.broadcast %c0_i32_63 : i32 to vector<18x16x128xi32>
    %102 = arith.cmpi sge, %100, %101 : vector<18x16x128xi32>
    %c-1_i32_64 = arith.constant -1 : i32
    %103 = vector.broadcast %c-1_i32_64 : i32 to vector<18x16x128xi32>
    %104 = arith.addi %2, %103 : vector<18x16x128xi32>
    %c16_i32_65 = arith.constant 16 : i32
    %105 = vector.broadcast %c16_i32_65 : i32 to vector<18x16x128xi32>
    %106 = arith.cmpi slt, %104, %105 : vector<18x16x128xi32>
    %107 = arith.andi %102, %106 : vector<18x16x128xi1>
    %cst_66 = arith.constant 0.000000e+00 : f32
    %108 = vector.broadcast %cst_66 : f32 to vector<18x16x128xf32>
    %109 = arith.select %107, %98, %108 : vector<18x16x128xi1>, vector<18x16x128xf32>
    %c15_i32_67 = arith.constant 15 : i32
    %110 = tpu.dynamic_rotate %97 by %c15_i32_67 dim 1 : vector<18x16x128xf32>, i32 -> vector<18x16x128xf32>
    %c1_i32_68 = arith.constant 1 : i32
    %111 = vector.broadcast %c1_i32_68 : i32 to vector<18x16x128xi32>
    %112 = arith.addi %2, %111 : vector<18x16x128xi32>
    %c0_i32_69 = arith.constant 0 : i32
    %113 = vector.broadcast %c0_i32_69 : i32 to vector<18x16x128xi32>
    %114 = arith.cmpi sge, %112, %113 : vector<18x16x128xi32>
    %c1_i32_70 = arith.constant 1 : i32
    %115 = vector.broadcast %c1_i32_70 : i32 to vector<18x16x128xi32>
    %116 = arith.addi %2, %115 : vector<18x16x128xi32>
    %c16_i32_71 = arith.constant 16 : i32
    %117 = vector.broadcast %c16_i32_71 : i32 to vector<18x16x128xi32>
    %118 = arith.cmpi slt, %116, %117 : vector<18x16x128xi32>
    %119 = arith.andi %114, %118 : vector<18x16x128xi1>
    %cst_72 = arith.constant 0.000000e+00 : f32
    %120 = vector.broadcast %cst_72 : f32 to vector<18x16x128xf32>
    %121 = arith.select %119, %110, %120 : vector<18x16x128xi1>, vector<18x16x128xf32>
    %cst_73 = arith.constant 0.000000e+00 : f32
    %122 = vector.broadcast %cst_73 : f32 to vector<256x128xf32>
    %123 = vector.extract_strided_slice %109 {offsets = [0, 0, 0], sizes = [16, 16, 128], strides = [1, 1, 1]} : vector<18x16x128xf32> to vector<16x16x128xf32>
    %124 = vector.shape_cast %123 : vector<16x16x128xf32> to vector<256x128xf32>
    %c0_74 = arith.constant 0 : index
    %c0_75 = arith.constant 0 : index
    %c0_76 = arith.constant 0 : index
    %125 = vector.load %arg5[%c0_74, %c0_75, %c0_76] : memref<9x128x128xf32, #tpu.memory_space<vmem>>, vector<1x128x128xf32>
    %126 = vector.shape_cast %125 : vector<1x128x128xf32> to vector<128x128xf32>
    %cst_77 = arith.constant dense<0.000000e+00> : vector<256x128xf32>
    %127 = tpu.matmul %124, %126, %cst_77 {dimension_numbers = #tpu.dot_dimension_numbers<[1], [0], [0], [1], [0, 0, 1, 1], [], []>} : vector<256x128xf32>, vector<128x128xf32>, vector<256x128xf32> -> vector<256x128xf32>
    %128 = arith.addf %122, %127 : vector<256x128xf32>
    %129 = vector.extract_strided_slice %97 {offsets = [0, 0, 0], sizes = [16, 16, 128], strides = [1, 1, 1]} : vector<18x16x128xf32> to vector<16x16x128xf32>
    %130 = vector.shape_cast %129 : vector<16x16x128xf32> to vector<256x128xf32>
    %c1_78 = arith.constant 1 : index
    %c0_79 = arith.constant 0 : index
    %c0_80 = arith.constant 0 : index
    %131 = vector.load %arg5[%c1_78, %c0_79, %c0_80] : memref<9x128x128xf32, #tpu.memory_space<vmem>>, vector<1x128x128xf32>
    %132 = vector.shape_cast %131 : vector<1x128x128xf32> to vector<128x128xf32>
    %cst_81 = arith.constant dense<0.000000e+00> : vector<256x128xf32>
    %133 = tpu.matmul %130, %132, %cst_81 {dimension_numbers = #tpu.dot_dimension_numbers<[1], [0], [0], [1], [0, 0, 1, 1], [], []>} : vector<256x128xf32>, vector<128x128xf32>, vector<256x128xf32> -> vector<256x128xf32>
    %134 = arith.addf %128, %133 : vector<256x128xf32>
    %135 = vector.extract_strided_slice %121 {offsets = [0, 0, 0], sizes = [16, 16, 128], strides = [1, 1, 1]} : vector<18x16x128xf32> to vector<16x16x128xf32>
    %136 = vector.shape_cast %135 : vector<16x16x128xf32> to vector<256x128xf32>
    %c2_82 = arith.constant 2 : index
    %c0_83 = arith.constant 0 : index
    %c0_84 = arith.constant 0 : index
    %137 = vector.load %arg5[%c2_82, %c0_83, %c0_84] : memref<9x128x128xf32, #tpu.memory_space<vmem>>, vector<1x128x128xf32>
    %138 = vector.shape_cast %137 : vector<1x128x128xf32> to vector<128x128xf32>
    %cst_85 = arith.constant dense<0.000000e+00> : vector<256x128xf32>
    %139 = tpu.matmul %136, %138, %cst_85 {dimension_numbers = #tpu.dot_dimension_numbers<[1], [0], [0], [1], [0, 0, 1, 1], [], []>} : vector<256x128xf32>, vector<128x128xf32>, vector<256x128xf32> -> vector<256x128xf32>
    %140 = arith.addf %134, %139 : vector<256x128xf32>
    %141 = vector.extract_strided_slice %109 {offsets = [1, 0, 0], sizes = [16, 16, 128], strides = [1, 1, 1]} : vector<18x16x128xf32> to vector<16x16x128xf32>
    %142 = vector.shape_cast %141 : vector<16x16x128xf32> to vector<256x128xf32>
    %c3_86 = arith.constant 3 : index
    %c0_87 = arith.constant 0 : index
    %c0_88 = arith.constant 0 : index
    %143 = vector.load %arg5[%c3_86, %c0_87, %c0_88] : memref<9x128x128xf32, #tpu.memory_space<vmem>>, vector<1x128x128xf32>
    %144 = vector.shape_cast %143 : vector<1x128x128xf32> to vector<128x128xf32>
    %cst_89 = arith.constant dense<0.000000e+00> : vector<256x128xf32>
    %145 = tpu.matmul %142, %144, %cst_89 {dimension_numbers = #tpu.dot_dimension_numbers<[1], [0], [0], [1], [0, 0, 1, 1], [], []>} : vector<256x128xf32>, vector<128x128xf32>, vector<256x128xf32> -> vector<256x128xf32>
    %146 = arith.addf %140, %145 : vector<256x128xf32>
    %147 = vector.extract_strided_slice %97 {offsets = [1, 0, 0], sizes = [16, 16, 128], strides = [1, 1, 1]} : vector<18x16x128xf32> to vector<16x16x128xf32>
    %148 = vector.shape_cast %147 : vector<16x16x128xf32> to vector<256x128xf32>
    %c4_90 = arith.constant 4 : index
    %c0_91 = arith.constant 0 : index
    %c0_92 = arith.constant 0 : index
    %149 = vector.load %arg5[%c4_90, %c0_91, %c0_92] : memref<9x128x128xf32, #tpu.memory_space<vmem>>, vector<1x128x128xf32>
    %150 = vector.shape_cast %149 : vector<1x128x128xf32> to vector<128x128xf32>
    %cst_93 = arith.constant dense<0.000000e+00> : vector<256x128xf32>
    %151 = tpu.matmul %148, %150, %cst_93 {dimension_numbers = #tpu.dot_dimension_numbers<[1], [0], [0], [1], [0, 0, 1, 1], [], []>} : vector<256x128xf32>, vector<128x128xf32>, vector<256x128xf32> -> vector<256x128xf32>
    %152 = arith.addf %146, %151 : vector<256x128xf32>
    %153 = vector.extract_strided_slice %121 {offsets = [1, 0, 0], sizes = [16, 16, 128], strides = [1, 1, 1]} : vector<18x16x128xf32> to vector<16x16x128xf32>
    %154 = vector.shape_cast %153 : vector<16x16x128xf32> to vector<256x128xf32>
    %c5_94 = arith.constant 5 : index
    %c0_95 = arith.constant 0 : index
    %c0_96 = arith.constant 0 : index
    %155 = vector.load %arg5[%c5_94, %c0_95, %c0_96] : memref<9x128x128xf32, #tpu.memory_space<vmem>>, vector<1x128x128xf32>
    %156 = vector.shape_cast %155 : vector<1x128x128xf32> to vector<128x128xf32>
    %cst_97 = arith.constant dense<0.000000e+00> : vector<256x128xf32>
    %157 = tpu.matmul %154, %156, %cst_97 {dimension_numbers = #tpu.dot_dimension_numbers<[1], [0], [0], [1], [0, 0, 1, 1], [], []>} : vector<256x128xf32>, vector<128x128xf32>, vector<256x128xf32> -> vector<256x128xf32>
    %158 = arith.addf %152, %157 : vector<256x128xf32>
    %159 = vector.extract_strided_slice %109 {offsets = [2, 0, 0], sizes = [16, 16, 128], strides = [1, 1, 1]} : vector<18x16x128xf32> to vector<16x16x128xf32>
    %160 = vector.shape_cast %159 : vector<16x16x128xf32> to vector<256x128xf32>
    %c6_98 = arith.constant 6 : index
    %c0_99 = arith.constant 0 : index
    %c0_100 = arith.constant 0 : index
    %161 = vector.load %arg5[%c6_98, %c0_99, %c0_100] : memref<9x128x128xf32, #tpu.memory_space<vmem>>, vector<1x128x128xf32>
    %162 = vector.shape_cast %161 : vector<1x128x128xf32> to vector<128x128xf32>
    %cst_101 = arith.constant dense<0.000000e+00> : vector<256x128xf32>
    %163 = tpu.matmul %160, %162, %cst_101 {dimension_numbers = #tpu.dot_dimension_numbers<[1], [0], [0], [1], [0, 0, 1, 1], [], []>} : vector<256x128xf32>, vector<128x128xf32>, vector<256x128xf32> -> vector<256x128xf32>
    %164 = arith.addf %158, %163 : vector<256x128xf32>
    %165 = vector.extract_strided_slice %97 {offsets = [2, 0, 0], sizes = [16, 16, 128], strides = [1, 1, 1]} : vector<18x16x128xf32> to vector<16x16x128xf32>
    %166 = vector.shape_cast %165 : vector<16x16x128xf32> to vector<256x128xf32>
    %c7_102 = arith.constant 7 : index
    %c0_103 = arith.constant 0 : index
    %c0_104 = arith.constant 0 : index
    %167 = vector.load %arg5[%c7_102, %c0_103, %c0_104] : memref<9x128x128xf32, #tpu.memory_space<vmem>>, vector<1x128x128xf32>
    %168 = vector.shape_cast %167 : vector<1x128x128xf32> to vector<128x128xf32>
    %cst_105 = arith.constant dense<0.000000e+00> : vector<256x128xf32>
    %169 = tpu.matmul %166, %168, %cst_105 {dimension_numbers = #tpu.dot_dimension_numbers<[1], [0], [0], [1], [0, 0, 1, 1], [], []>} : vector<256x128xf32>, vector<128x128xf32>, vector<256x128xf32> -> vector<256x128xf32>
    %170 = arith.addf %164, %169 : vector<256x128xf32>
    %171 = vector.extract_strided_slice %121 {offsets = [2, 0, 0], sizes = [16, 16, 128], strides = [1, 1, 1]} : vector<18x16x128xf32> to vector<16x16x128xf32>
    %172 = vector.shape_cast %171 : vector<16x16x128xf32> to vector<256x128xf32>
    %c8_106 = arith.constant 8 : index
    %c0_107 = arith.constant 0 : index
    %c0_108 = arith.constant 0 : index
    %173 = vector.load %arg5[%c8_106, %c0_107, %c0_108] : memref<9x128x128xf32, #tpu.memory_space<vmem>>, vector<1x128x128xf32>
    %174 = vector.shape_cast %173 : vector<1x128x128xf32> to vector<128x128xf32>
    %cst_109 = arith.constant dense<0.000000e+00> : vector<256x128xf32>
    %175 = tpu.matmul %172, %174, %cst_109 {dimension_numbers = #tpu.dot_dimension_numbers<[1], [0], [0], [1], [0, 0, 1, 1], [], []>} : vector<256x128xf32>, vector<128x128xf32>, vector<256x128xf32> -> vector<256x128xf32>
    %176 = arith.addf %170, %175 : vector<256x128xf32>
    %c0_110 = arith.constant 0 : index
    %c0_111 = arith.constant 0 : index
    %177 = vector.load %arg6[%c0_110, %c0_111] : memref<1x128xf32, #tpu.memory_space<vmem>>, vector<1x128xf32>
    %178 = vector.broadcast %177 : vector<1x128xf32> to vector<256x128xf32>
    %179 = arith.mulf %176, %178 : vector<256x128xf32>
    %c0_112 = arith.constant 0 : index
    %c0_113 = arith.constant 0 : index
    %180 = vector.load %arg7[%c0_112, %c0_113] : memref<1x128xf32, #tpu.memory_space<vmem>>, vector<1x128xf32>
    %181 = vector.broadcast %180 : vector<1x128xf32> to vector<256x128xf32>
    %182 = arith.addf %179, %181 : vector<256x128xf32>
    %cst_114 = arith.constant 0.000000e+00 : f32
    %183 = vector.broadcast %cst_114 : f32 to vector<256x128xf32>
    %184 = arith.maximumf %182, %183 : vector<256x128xf32>
    %185 = vector.shape_cast %1 : vector<16x16x128xf32> to vector<256x128xf32>
    %186 = arith.addf %184, %185 : vector<256x128xf32>
    %187 = vector.shape_cast %186 : vector<256x128xf32> to vector<1x16x16x128xf32>
    %c0_115 = arith.constant 0 : index
    %c0_116 = arith.constant 0 : index
    %c0_117 = arith.constant 0 : index
    %c0_118 = arith.constant 0 : index
    %188 = vector.load %arg8[%c0_115, %c0_116, %c0_117, %c0_118] : memref<1x16x16x128xf32, #tpu.memory_space<vmem>>, vector<1x16x16x128xf32>
    tpu.vector_store %arg8[%c0_115, %c0_116, %c0_117, %c0_118], %187 {strides = array<i32>} : memref<1x16x16x128xf32, #tpu.memory_space<vmem>>, vector<1x16x16x128xf32>,
    return
  }
  func.func @transform_0(%arg0: i32) -> (i32, i32, i32, i32) {
    %c0_i32 = arith.constant 0 : i32
    %c0_i32_0 = arith.constant 0 : i32
    %c0_i32_1 = arith.constant 0 : i32
    %c0_i32_2 = arith.constant 0 : i32
    return %arg0, %c0_i32, %c0_i32_0, %c0_i32_1 : i32, i32, i32, i32
  }
  func.func @transform_1(%arg0: i32) -> (i32, i32, i32) {
    %c0_i32 = arith.constant 0 : i32
    %c0_i32_0 = arith.constant 0 : i32
    %c0_i32_1 = arith.constant 0 : i32
    %c0_i32_2 = arith.constant 0 : i32
    return %c0_i32, %c0_i32_0, %c0_i32_1 : i32, i32, i32
  }
  func.func @transform_2(%arg0: i32) -> (i32, i32) {
    %c0_i32 = arith.constant 0 : i32
    %c0_i32_0 = arith.constant 0 : i32
    %c0_i32_1 = arith.constant 0 : i32
    return %c0_i32, %c0_i32_0 : i32, i32
  }
  func.func @transform_3(%arg0: i32) -> (i32, i32) {
    %c0_i32 = arith.constant 0 : i32
    %c0_i32_0 = arith.constant 0 : i32
    %c0_i32_1 = arith.constant 0 : i32
    return %c0_i32, %c0_i32_0 : i32, i32
  }
  func.func @transform_4(%arg0: i32) -> (i32, i32, i32) {
    %c0_i32 = arith.constant 0 : i32
    %c0_i32_0 = arith.constant 0 : i32
    %c0_i32_1 = arith.constant 0 : i32
    %c0_i32_2 = arith.constant 0 : i32
    return %c0_i32, %c0_i32_0, %c0_i32_1 : i32, i32, i32
  }
  func.func @transform_5(%arg0: i32) -> (i32, i32) {
    %c0_i32 = arith.constant 0 : i32
    %c0_i32_0 = arith.constant 0 : i32
    %c0_i32_1 = arith.constant 0 : i32
    return %c0_i32, %c0_i32_0 : i32, i32
  }
  func.func @transform_6(%arg0: i32) -> (i32, i32) {
    %c0_i32 = arith.constant 0 : i32
    %c0_i32_0 = arith.constant 0 : i32
    %c0_i32_1 = arith.constant 0 : i32
    return %c0_i32, %c0_i32_0 : i32, i32
  }
  func.func @transform_7(%arg0: i32) -> (i32, i32, i32, i32) {
    %c0_i32 = arith.constant 0 : i32
    %c0_i32_0 = arith.constant 0 : i32
    %c0_i32_1 = arith.constant 0 : i32
    %c0_i32_2 = arith.constant 0 : i32
    return %arg0, %c0_i32, %c0_i32_0, %c0_i32_1 : i32, i32, i32, i32
  }
}

</mosaic_0001>

<llo_original>
// kernel: tpu_custom_call.1
$region0: #{tpu_custom_call.1}
  #allocation0 [shape = 'u32[]', space=smem, size = 0x4, offset = 0x4, fixed_abs, tag = 'smem constant byte address 0x4 - core index']
  #allocation1 [shape = 'u32[72,128]{1,0:T(1,128)}', space=vmem, size = 0x9000, scoped, tag = 'internal scratch']
  #allocation2 [shape = 'f32[18,16,128]{2,1,0:T(8,128)}', space=vmem, size = 0x24000, scoped, tag = 'scratch operand']
  %s0 = inlined_call_operand.hbm [shape: f32[2,16,16,128], index: 0, kind: input, shape index: {}]
  %s1 = inlined_call_operand.hbm [shape: f32[9,128,128], index: 1, kind: input, shape index: {}]
  %s2 = inlined_call_operand.vmem [shape: f32[1,128], index: 2, kind: input, shape index: {}]
  %s3 = inlined_call_operand.vmem [shape: f32[1,128], index: 3, kind: input, shape index: {}]
  %s4 = inlined_call_operand.hbm [shape: f32[9,128,128], index: 4, kind: input, shape index: {}]
  %s5 = inlined_call_operand.vmem [shape: f32[1,128], index: 5, kind: input, shape index: {}]
  %s6 = inlined_call_operand.vmem [shape: f32[1,128], index: 6, kind: input, shape index: {}]
  %s7 = inlined_call_operand.hbm [shape: f32[2,16,16,128], index: 7, kind: output, shape index: {}]
  %s8 = sld [smem:[#allocation0]]
  $region73: #{tpu_custom_call.1} parent=0
    _
  %s10 = ssub.s32 1, %s8
  %s11 = scalar_select 0, %s10, %s8
  $region1: #{tpu_custom_call.1} parent=0
    #allocation3 [shape = 'u8[262144]{0}', space=vmem, size = 0x40000, scoped, tag = 'input window, operand 0']
    #allocation4 [shape = 's32[2]{0}', space=sflag, size = 0x8, scoped, tag = 'scoped memory for tpu_custom_call.1']
    #allocation5 [shape = 's32[2]{0}', space=sflag, size = 0x8, scoped, tag = 'scoped memory for tpu_custom_call.1']
    #allocation6 [shape = 'u8[589824]{0}', space=vmem, size = 0x90000, scoped, tag = 'input window, operand 1, single buffered']
    #allocation7 [shape = 's32[1]{0}', space=sflag, size = 0x4, scoped, tag = 'scoped memory for tpu_custom_call.1']
    #allocation8 [shape = 'u8[589824]{0}', space=vmem, size = 0x90000, scoped, tag = 'input window, operand 4, single buffered']
    #allocation9 [shape = 'u8[262144]{0}', space=vmem, size = 0x40000, scoped, tag = 'output window, operand 0']
    %12 = vsyncpa [#allocation4], 0
    %s13 = scalar_lea.sflag [#allocation4], 1
    %14 = vsyncpa %s13, 0
    %15 = vsyncpa [#allocation7], 0
    %16 = vsyncpa [#allocation5], 0
    %s17 = scalar_lea.sflag [#allocation5], 1
    %18 = vsyncpa %s17, 0
    loop: start=0, step=1, limit=4
    $region2: #{tpu_custom_call.1} parent=1 // loop_pre_header
      _
    $region3: #{tpu_custom_call.1} parent=1 // loop_header
      %s20 = sphi 0, %s24
      %p21 = scmp.ge.s32.totalorder %s20, 4
      %s30 = sphi 0, %s32
      %s33 = sphi 0, %s30
      %s34 = sphi 0, %s33
      %s50 = sphi 0, %s34
      %s54 = sphi 0, %s54
      %s56 = sphi 0, %s54
      %s57 = sphi 0, %s56
      %s71 = sphi 0, %s57
      %s75 = sphi 0, %s75
      %s77 = sphi 0, %s75
      %s78 = sphi 0, %s77
      %s92 = sphi 0, %s78
      %s96 = sphi 0, %s96
      %s98 = sphi 0, %s96
      %s99 = sphi 0, %s98
      %s113 = sphi 0, %s99
      %s117 = sphi 0, %s117
      %s119 = sphi 0, %s117
      %s120 = sphi 0, %s119
      %s134 = sphi 0, %s120
      %s138 = sphi 0, %s138
      %s140 = sphi 0, %s138
      %s141 = sphi 0, %s140
      %s155 = sphi 0, %s141
      %s159 = sphi 0, %s159
      %s161 = sphi 0, %s159
      %s162 = sphi 0, %s161
      %s176 = sphi 0, %s162
      %s182 = sphi 0, %s184
      %s185 = sphi 0, %s182
      %s186 = sphi 0, %s185
      %s202 = sphi 0, %s186
    $region4: #{tpu_custom_call.1} parent=1 // loop_header_branch
      %23 = sbr.rel (%p21) target = $region8
    $region5: #{tpu_custom_call.1} parent=1 // loop_body
      %s25 = ssub.s32 %s20, 1
      %s26 = ssub.s32 %s20, 2
      %s27 = sadd.s32 %s20, 1
      %s28 = ssub.s32 %s20, %s27
      %p29 = scmp.eq.s32.totalorder %s28, 0
      %s31 = sadd.s32 %s30, 1
      %s32 = scalar_select %p29, %s30, %s31
      %p35 = pneg %p29
      %p36 = scmp.eq.s32.totalorder %s20, 1
      %p37 = por %p35, %p36
      %p38 = scmp.ne.s32.totalorder %s30, %s33
      %p39 = scmp.eq.s32.totalorder %s20, 0
      %p40 = por %p38, %p39
      %p41 = scmp.ne.s32.totalorder %s30, %s33
      %p42 = scmp.eq.s32.totalorder %s25, 1
      %p43 = por %p41, %p42
      %p44 = scmp.ne.s32.totalorder %s33, %s34
      %p45 = scmp.eq.s32.totalorder %s25, 0
      %p46 = por %p44, %p45
      %p47 = scmp.ne.s32.totalorder %s33, %s34
      %p48 = scmp.eq.s32.totalorder %s26, 1
      %p49 = por %p47, %p48
      %p51 = scmp.ne.s32.totalorder %s34, %s50
      %p52 = scmp.eq.s32.totalorder %s26, 0
      %p53 = por %p51, %p52
      %s55 = sadd.s32 %s54, 1
      %p58 = scmp.eq.s32.totalorder %s20, 1
      %p59 = scmp.ne.s32.totalorder %s54, %s56
      %p60 = scmp.eq.s32.totalorder %s20, 0
      %p61 = por %p59, %p60
      %p62 = scmp.ne.s32.totalorder %s54, %s56
      %p63 = scmp.eq.s32.totalorder %s25, 1
      %p64 = por %p62, %p63
      %p65 = scmp.ne.s32.totalorder %s56, %s57
      %p66 = scmp.eq.s32.totalorder %s25, 0
      %p67 = por %p65, %p66
      %p68 = scmp.ne.s32.totalorder %s56, %s57
      %p69 = scmp.eq.s32.totalorder %s26, 1
      %p70 = por %p68, %p69
      %p72 = scmp.ne.s32.totalorder %s57, %s71
      %p73 = scmp.eq.s32.totalorder %s26, 0
      %p74 = por %p72, %p73
      %s76 = sadd.s32 %s75, 1
      %p79 = scmp.eq.s32.totalorder %s20, 1
      %p80 = scmp.ne.s32.totalorder %s75, %s77
      %p81 = scmp.eq.s32.totalorder %s20, 0
      %p82 = por %p80, %p81
      %p83 = scmp.ne.s32.totalorder %s75, %s77
      %p84 = scmp.eq.s32.totalorder %s25, 1
      %p85 = por %p83, %p84
      %p86 = scmp.ne.s32.totalorder %s77, %s78
      %p87 = scmp.eq.s32.totalorder %s25, 0
      %p88 = por %p86, %p87
      %p89 = scmp.ne.s32.totalorder %s77, %s78
      %p90 = scmp.eq.s32.totalorder %s26, 1
      %p91 = por %p89, %p90
      %p93 = scmp.ne.s32.totalorder %s78, %s92
      %p94 = scmp.eq.s32.totalorder %s26, 0
      %p95 = por %p93, %p94
      %s97 = sadd.s32 %s96, 1
      %p100 = scmp.eq.s32.totalorder %s20, 1
      %p101 = scmp.ne.s32.totalorder %s96, %s98
      %p102 = scmp.eq.s32.totalorder %s20, 0
      %p103 = por %p101, %p102
      %p104 = scmp.ne.s32.totalorder %s96, %s98
      %p105 = scmp.eq.s32.totalorder %s25, 1
      %p106 = por %p104, %p105
      %p107 = scmp.ne.s32.totalorder %s98, %s99
      %p108 = scmp.eq.s32.totalorder %s25, 0
      %p109 = por %p107, %p108
      %p110 = scmp.ne.s32.totalorder %s98, %s99
      %p111 = scmp.eq.s32.totalorder %s26, 1
      %p112 = por %p110, %p111
      %p114 = scmp.ne.s32.totalorder %s99, %s113
      %p115 = scmp.eq.s32.totalorder %s26, 0
      %p116 = por %p114, %p115
      %s118 = sadd.s32 %s117, 1
      %p121 = scmp.eq.s32.totalorder %s20, 1
      %p122 = scmp.ne.s32.totalorder %s117, %s119
      %p123 = scmp.eq.s32.totalorder %s20, 0
      %p124 = por %p122, %p123
      %p125 = scmp.ne.s32.totalorder %s117, %s119
      %p126 = scmp.eq.s32.totalorder %s25, 1
      %p127 = por %p125, %p126
      %p128 = scmp.ne.s32.totalorder %s119, %s120
      %p129 = scmp.eq.s32.totalorder %s25, 0
      %p130 = por %p128, %p129
      %p131 = scmp.ne.s32.totalorder %s119, %s120
      %p132 = scmp.eq.s32.totalorder %s26, 1
      %p133 = por %p131, %p132
      %p135 = scmp.ne.s32.totalorder %s120, %s134
      %p136 = scmp.eq.s32.totalorder %s26, 0
      %p137 = por %p135, %p136
      %s139 = sadd.s32 %s138, 1
      %p142 = scmp.eq.s32.totalorder %s20, 1
      %p143 = scmp.ne.s32.totalorder %s138, %s140
      %p144 = scmp.eq.s32.totalorder %s20, 0
      %p145 = por %p143, %p144
      %p146 = scmp.ne.s32.totalorder %s138, %s140
      %p147 = scmp.eq.s32.totalorder %s25, 1
      %p148 = por %p146, %p147
      %p149 = scmp.ne.s32.totalorder %s140, %s141
      %p150 = scmp.eq.s32.totalorder %s25, 0
      %p151 = por %p149, %p150
      %p152 = scmp.ne.s32.totalorder %s140, %s141
      %p153 = scmp.eq.s32.totalorder %s26, 1
      %p154 = por %p152, %p153
      %p156 = scmp.ne.s32.totalorder %s141, %s155
      %p157 = scmp.eq.s32.totalorder %s26, 0
      %p158 = por %p156, %p157
      %s160 = sadd.s32 %s159, 1
      %p163 = scmp.eq.s32.totalorder %s20, 1
      %p164 = scmp.ne.s32.totalorder %s159, %s161
      %p165 = scmp.eq.s32.totalorder %s20, 0
      %p166 = por %p164, %p165
      %p167 = scmp.ne.s32.totalorder %s159, %s161
      %p168 = scmp.eq.s32.totalorder %s25, 1
      %p169 = por %p167, %p168
      %p170 = scmp.ne.s32.totalorder %s161, %s162
      %p171 = scmp.eq.s32.totalorder %s25, 0
      %p172 = por %p170, %p171
      %p173 = scmp.ne.s32.totalorder %s161, %s162
      %p174 = scmp.eq.s32.totalorder %s26, 1
      %p175 = por %p173, %p174
      %p177 = scmp.ne.s32.totalorder %s162, %s176
      %p178 = scmp.eq.s32.totalorder %s26, 0
      %p179 = por %p177, %p178
      %s180 = ssub.s32 %s20, %s27
      %p181 = scmp.eq.s32.totalorder %s180, 0
      %s183 = sadd.s32 %s182, 1
      %s184 = scalar_select %p181, %s182, %s183
      %p187 = pneg %p181
      %p188 = scmp.eq.s32.totalorder %s20, 1
      %p189 = por %p187, %p188
      %p190 = scmp.ne.s32.totalorder %s182, %s185
      %p191 = scmp.eq.s32.totalorder %s20, 0
      %p192 = por %p190, %p191
      %p193 = scmp.ne.s32.totalorder %s182, %s185
      %p194 = scmp.eq.s32.totalorder %s25, 1
      %p195 = por %p193, %p194
      %p196 = scmp.ne.s32.totalorder %s185, %s186
      %p197 = scmp.eq.s32.totalorder %s25, 0
      %p198 = por %p196, %p197
      %p199 = scmp.ne.s32.totalorder %s185, %s186
      %p200 = scmp.eq.s32.totalorder %s26, 1
      %p201 = por %p199, %p200
      %p203 = scmp.ne.s32.totalorder %s186, %s202
      %p204 = scmp.eq.s32.totalorder %s26, 0
      %p205 = por %p203, %p204
      %p206 = scmp.le.s32.totalorder 1, %s20
      %p207 = scmp.lt.s32.totalorder %s20, 3
      %p208 = pnand %p206, %p207
      %p209 = pneg %p208
      // Predicated region
      $region9: #{tpu_custom_call.1} parent=5 // pred_check
        _
      $region10: #{tpu_custom_call.1} parent=5 // pred_check_branch
        %211 = sbr.rel (%p208) target = $region12
      $region11: #{tpu_custom_call.1} parent=5 // pred_region
        %s212 = ssub.s32 %s20, 1
        // Predicated region
        $region13: #{tpu_custom_call.1} parent=11 // pred_check
          %p213 = pneg %p67
        $region14: #{tpu_custom_call.1} parent=11 // pred_check_branch
          %215 = sbr.rel (%p213) target = $region16
        $region15: #{tpu_custom_call.1} parent=11 // pred_region
          %217 = vsyncadd [#allocation7], 0
          %s218 = sshll.u32 %s1, 4
          %s219 = int_to_ptr.hbm [resolvable:$true] %s218
          %s220 = sshll.u32 [#allocation6], 4
          %s221 = int_to_ptr.vmem [resolvable:$true] %s220
          %226 = dma.hbm_to_vmem [thread:$0]  %s219, 18432, %s221, [#allocation7], 128, 128, 8
        $region16: #{tpu_custom_call.1} parent=11 // pred_fallthru
          _
        // Predicated region
        $region17: #{tpu_custom_call.1} parent=11 // pred_check
          %p227 = pneg %p88
        $region18: #{tpu_custom_call.1} parent=11 // pred_check_branch
          %229 = sbr.rel (%p227) target = $region20
        $region19: #{tpu_custom_call.1} parent=11 // pred_region
          _
        $region20: #{tpu_custom_call.1} parent=11 // pred_fallthru
          _
        // Predicated region
        $region21: #{tpu_custom_call.1} parent=11 // pred_check
          %p230 = pneg %p109
        $region22: #{tpu_custom_call.1} parent=11 // pred_check_branch
          %232 = sbr.rel (%p230) target = $region24
        $region23: #{tpu_custom_call.1} parent=11 // pred_region
          _
        $region24: #{tpu_custom_call.1} parent=11 // pred_fallthru
          _
        // Predicated region
        $region25: #{tpu_custom_call.1} parent=11 // pred_check
          %p233 = pneg %p130
        $region26: #{tpu_custom_call.1} parent=11 // pred_check_branch
          %235 = sbr.rel (%p233) target = $region28
        $region27: #{tpu_custom_call.1} parent=11 // pred_region
          %237 = vsyncadd [#allocation7], 0
          %s238 = sshll.u32 %s4, 4
          %s239 = int_to_ptr.hbm [resolvable:$true] %s238
          %s240 = sshll.u32 [#allocation8], 4
          %s241 = int_to_ptr.vmem [resolvable:$true] %s240
          %246 = dma.hbm_to_vmem [thread:$0]  %s239, 18432, %s241, [#allocation7], 128, 128, 8
        $region28: #{tpu_custom_call.1} parent=11 // pred_fallthru
          _
        // Predicated region
        $region29: #{tpu_custom_call.1} parent=11 // pred_check
          %p247 = pneg %p151
        $region30: #{tpu_custom_call.1} parent=11 // pred_check_branch
          %249 = sbr.rel (%p247) target = $region32
        $region31: #{tpu_custom_call.1} parent=11 // pred_region
          _
        $region32: #{tpu_custom_call.1} parent=11 // pred_fallthru
          _
        // Predicated region
        $region33: #{tpu_custom_call.1} parent=11 // pred_check
          %p250 = pneg %p172
        $region34: #{tpu_custom_call.1} parent=11 // pred_check_branch
          %252 = sbr.rel (%p250) target = $region36
        $region35: #{tpu_custom_call.1} parent=11 // pred_region
          _
        $region36: #{tpu_custom_call.1} parent=11 // pred_fallthru
          _
      $region12: #{tpu_custom_call.1} parent=5 // pred_fallthru
        _
      %p253 = scmp.lt.s32.totalorder %s20, 2
      // Predicated region
      $region37: #{tpu_custom_call.1} parent=5 // pred_check
        %p254 = pneg %p253
      $region38: #{tpu_custom_call.1} parent=5 // pred_check_branch
        %256 = sbr.rel (%p254) target = $region40
      $region39: #{tpu_custom_call.1} parent=5 // pred_region
        // Predicated region
        $region41: #{tpu_custom_call.1} parent=39 // pred_check
          %p257 = pneg %p40
        $region42: #{tpu_custom_call.1} parent=39 // pred_check_branch
          %259 = sbr.rel (%p257) target = $region44
        $region43: #{tpu_custom_call.1} parent=39 // pred_region
          %s260 = sand.u32 %s30, 1
          %s261 = scalar_lea.sflag [#allocation4], %s260
          %s262 = sand.u32 %s30, 1
          %s263 = smul.addr %s262, 256
          %s264 = scalar_lea.vmem [#allocation3], %s263
          %266 = vsyncadd %s261, 0
          %s267 = smul.addr %s20, 32
          %s268 = smul.addr %s267, 8
          %s269 = scalar_lea.hbm %s0, %s268
          %s270 = sshll.u32 %s269, 4
          %s271 = int_to_ptr.hbm [resolvable:$true] %s270
          %s272 = sshll.u32 %s264, 4
          %s273 = int_to_ptr.vmem [resolvable:$true] %s272
          %278 = dma.hbm_to_vmem [thread:$0]  %s271, 4096, %s273, %s261, 128, 128, 8
        $region44: #{tpu_custom_call.1} parent=39 // pred_fallthru
          _
      $region40: #{tpu_custom_call.1} parent=5 // pred_fallthru
        _
      %p279 = scmp.le.s32.totalorder 1, %s20
      %p280 = scmp.lt.s32.totalorder %s20, 3
      %p281 = pnand %p279, %p280
      %p282 = pneg %p281
      // Predicated region
      $region45: #{tpu_custom_call.1} parent=5 // pred_check
        _
      $region46: #{tpu_custom_call.1} parent=5 // pred_check_branch
        %284 = sbr.rel (%p281) target = $region48
      $region47: #{tpu_custom_call.1} parent=5 // pred_region
        %s285 = ssub.s32 %s20, 1
        %s286 = sand.u32 %s33, 1
        %s287 = scalar_lea.sflag [#allocation4], %s286
        %s288 = sand.u32 %s33, 1
        %s289 = smul.addr %s288, 256
        %s290 = scalar_lea.vmem [#allocation3], %s289
        // Predicated region
        $region49: #{tpu_custom_call.1} parent=47 // pred_check
          %p291 = pneg %p46
        $region50: #{tpu_custom_call.1} parent=47 // pred_check_branch
          %293 = sbr.rel (%p291) target = $region52
        $region51: #{tpu_custom_call.1} parent=47 // pred_region
          %295 = dma.done %s287, 4096
        $region52: #{tpu_custom_call.1} parent=47 // pred_fallthru
          _
        // Predicated region
        $region53: #{tpu_custom_call.1} parent=47 // pred_check
          %p296 = pneg %p67
        $region54: #{tpu_custom_call.1} parent=47 // pred_check_branch
          %298 = sbr.rel (%p296) target = $region56
        $region55: #{tpu_custom_call.1} parent=47 // pred_region
          %300 = dma.done [#allocation7], 18432
        $region56: #{tpu_custom_call.1} parent=47 // pred_fallthru
          _
        // Predicated region
        $region57: #{tpu_custom_call.1} parent=47 // pred_check
          %p301 = pneg %p130
        $region58: #{tpu_custom_call.1} parent=47 // pred_check_branch
          %303 = sbr.rel (%p301) target = $region60
        $region59: #{tpu_custom_call.1} parent=47 // pred_region
          %305 = dma.done [#allocation7], 18432
        $region60: #{tpu_custom_call.1} parent=47 // pred_fallthru
          _
        %s306 = sand.u32 %s33, 1
        %s307 = scalar_lea.sflag [#allocation4], %s306
        %s308 = sand.u32 %s33, 1
        %s309 = smul.addr %s308, 256
        %s310 = scalar_lea.vmem [#allocation3], %s309
        %p311 = pneg %p46
        %p312 = pneg %p43
        %p313 = pneg %p67
        %p314 = pneg %p64
        %p315 = pneg %p88
        %p316 = pneg %p85
        %p317 = pneg %p109
        %p318 = pneg %p106
        %p319 = pneg %p130
        %p320 = pneg %p127
        %p321 = pneg %p151
        %p322 = pneg %p148
        %p323 = pneg %p172
        %p324 = pneg %p169
        %p325 = pneg %p198
        %p326 = pneg %p195
        %s327 = sand.u32 %s185, 1
        %s328 = scalar_lea.sflag [#allocation5], %s327
        %s329 = sand.u32 %s185, 1
        %s330 = smul.addr %s329, 256
        %s331 = scalar_lea.vmem [#allocation9], %s330
        %v332 = vld [vmem:[%s290] sm:$0xff]
        %v333 = vld [vmem:[%s290 + $0x8] sm:$0xff]
        %v334 = vld [vmem:[%s290 + $0x10] sm:$0xff]
        %v335 = vld [vmem:[%s290 + $0x18] sm:$0xff]
        %v336 = vld [vmem:[%s290 + $0x20] sm:$0xff]
        %v337 = vld [vmem:[%s290 + $0x28] sm:$0xff]
        %v338 = vld [vmem:[%s290 + $0x30] sm:$0xff]
        %v339 = vld [vmem:[%s290 + $0x38] sm:$0xff]
        %v340 = vld [vmem:[%s290 + $0x40] sm:$0xff]
        %v341 = vld [vmem:[%s290 + $0x48] sm:$0xff]
        %v342 = vld [vmem:[%s290 + $0x50] sm:$0xff]
        %v343 = vld [vmem:[%s290 + $0x58] sm:$0xff]
        %v344 = vld [vmem:[%s290 + $0x60] sm:$0xff]
        %v345 = vld [vmem:[%s290 + $0x68] sm:$0xff]
        %v346 = vld [vmem:[%s290 + $0x70] sm:$0xff]
        %v347 = vld [vmem:[%s290 + $0x78] sm:$0xff]
        %v348 = vld [vmem:[%s290 + $0x80] sm:$0xff]
        %v349 = vld [vmem:[%s290 + $0x88] sm:$0xff]
        %v350 = vld [vmem:[%s290 + $0x90] sm:$0xff]
        %v351 = vld [vmem:[%s290 + $0x98] sm:$0xff]
        %v352 = vld [vmem:[%s290 + $0xa0] sm:$0xff]
        %v353 = vld [vmem:[%s290 + $0xa8] sm:$0xff]
        %v354 = vld [vmem:[%s290 + $0xb0] sm:$0xff]
        %v355 = vld [vmem:[%s290 + $0xb8] sm:$0xff]
        %v356 = vld [vmem:[%s290 + $0xc0] sm:$0xff]
        %v357 = vld [vmem:[%s290 + $0xc8] sm:$0xff]
        %v358 = vld [vmem:[%s290 + $0xd0] sm:$0xff]
        %v359 = vld [vmem:[%s290 + $0xd8] sm:$0xff]
        %v360 = vld [vmem:[%s290 + $0xe0] sm:$0xff]
        %v361 = vld [vmem:[%s290 + $0xe8] sm:$0xff]
        %v362 = vld [vmem:[%s290 + $0xf0] sm:$0xff]
        %v363 = vld [vmem:[%s290 + $0xf8] sm:$0xff]
        %v364 = vlaneseq
        %v365 = vshrl.u32 %v364, 7
        %v366 = vadd.s32 %v365, 8
        %367 = vst [vmem:[#allocation2] sm:$0xff] 0.0
        %368 = vst [vmem:[#allocation2 + $0x8] sm:$0xff] 0.0
        %s369 = scalar_lea.vmem [#allocation2], 272
        %370 = vst [vmem:[%s369] sm:$0xff] 0.0
        %371 = vst [vmem:[%s369 + $0x8] sm:$0xff] 0.0
        %s372 = scalar_lea.vmem [#allocation2], 16
        %373 = vst [vmem:[%s372] sm:$0xff] %v332
        %374 = vst [vmem:[%s372 + $0x8] sm:$0xff] %v333
        %375 = vst [vmem:[%s372 + $0x10] sm:$0xff] %v334
        %376 = vst [vmem:[%s372 + $0x18] sm:$0xff] %v335
        %377 = vst [vmem:[%s372 + $0x20] sm:$0xff] %v336
        %378 = vst [vmem:[%s372 + $0x28] sm:$0xff] %v337
        %379 = vst [vmem:[%s372 + $0x30] sm:$0xff] %v338
        %380 = vst [vmem:[%s372 + $0x38] sm:$0xff] %v339
        %381 = vst [vmem:[%s372 + $0x40] sm:$0xff] %v340
        %382 = vst [vmem:[%s372 + $0x48] sm:$0xff] %v341
        %383 = vst [vmem:[%s372 + $0x50] sm:$0xff] %v342
        %384 = vst [vmem:[%s372 + $0x58] sm:$0xff] %v343
        %385 = vst [vmem:[%s372 + $0x60] sm:$0xff] %v344
        %386 = vst [vmem:[%s372 + $0x68] sm:$0xff] %v345
        %387 = vst [vmem:[%s372 + $0x70] sm:$0xff] %v346
        %388 = vst [vmem:[%s372 + $0x78] sm:$0xff] %v347
        %389 = vst [vmem:[%s372 + $0x80] sm:$0xff] %v348
        %390 = vst [vmem:[%s372 + $0x88] sm:$0xff] %v349
        %391 = vst [vmem:[%s372 + $0x90] sm:$0xff] %v350
        %392 = vst [vmem:[%s372 + $0x98] sm:$0xff] %v351
        %393 = vst [vmem:[%s372 + $0xa0] sm:$0xff] %v352
        %394 = vst [vmem:[%s372 + $0xa8] sm:$0xff] %v353
        %395 = vst [vmem:[%s372 + $0xb0] sm:$0xff] %v354
        %396 = vst [vmem:[%s372 + $0xb8] sm:$0xff] %v355
        %397 = vst [vmem:[%s372 + $0xc0] sm:$0xff] %v356
        %398 = vst [vmem:[%s372 + $0xc8] sm:$0xff] %v357
        %399 = vst [vmem:[%s372 + $0xd0] sm:$0xff] %v358
        %400 = vst [vmem:[%s372 + $0xd8] sm:$0xff] %v359
        %401 = vst [vmem:[%s372 + $0xe0] sm:$0xff] %v360
        %402 = vst [vmem:[%s372 + $0xe8] sm:$0xff] %v361
        %403 = vst [vmem:[%s372 + $0xf0] sm:$0xff] %v362
        %404 = vst [vmem:[%s372 + $0xf8] sm:$0xff] %v363
        %v405 = vld [vmem:[#allocation2] sm:$0xff]
        %v406 = vld [vmem:[#allocation2 + $0x8] sm:$0xff]
        %v407 = vld [vmem:[#allocation2 + $0x10] sm:$0xff]
        %v408 = vld [vmem:[#allocation2 + $0x18] sm:$0xff]
        %v409 = vld [vmem:[#allocation2 + $0x20] sm:$0xff]
        %v410 = vld [vmem:[#allocation2 + $0x28] sm:$0xff]
        %v411 = vld [vmem:[#allocation2 + $0x30] sm:$0xff]
        %v412 = vld [vmem:[#allocation2 + $0x38] sm:$0xff]
        %v413 = vld [vmem:[#allocation2 + $0x40] sm:$0xff]
        %v414 = vld [vmem:[#allocation2 + $0x48] sm:$0xff]
        %v415 = vld [vmem:[#allocation2 + $0x50] sm:$0xff]
        %v416 = vld [vmem:[#allocation2 + $0x58] sm:$0xff]
        %v417 = vld [vmem:[#allocation2 + $0x60] sm:$0xff]
        %v418 = vld [vmem:[#allocation2 + $0x68] sm:$0xff]
        %v419 = vld [vmem:[#allocation2 + $0x70] sm:$0xff]
        %v420 = vld [vmem:[#allocation2 + $0x78] sm:$0xff]
        %v421 = vld [vmem:[#allocation2 + $0x80] sm:$0xff]
        %v422 = vld [vmem:[#allocation2 + $0x88] sm:$0xff]
        %v423 = vld [vmem:[#allocation2 + $0x90] sm:$0xff]
        %v424 = vld [vmem:[#allocation2 + $0x98] sm:$0xff]
        %v425 = vld [vmem:[#allocation2 + $0xa0] sm:$0xff]
        %v426 = vld [vmem:[#allocation2 + $0xa8] sm:$0xff]
        %v427 = vld [vmem:[#allocation2 + $0xb0] sm:$0xff]
        %v428 = vld [vmem:[#allocation2 + $0xb8] sm:$0xff]
        %v429 = vld [vmem:[#allocation2 + $0xc0] sm:$0xff]
        %v430 = vld [vmem:[#allocation2 + $0xc8] sm:$0xff]
        %v431 = vld [vmem:[#allocation2 + $0xd0] sm:$0xff]
        %v432 = vld [vmem:[#allocation2 + $0xd8] sm:$0xff]
        %v433 = vld [vmem:[#allocation2 + $0xe0] sm:$0xff]
        %v434 = vld [vmem:[#allocation2 + $0xe8] sm:$0xff]
        %v435 = vld [vmem:[#allocation2 + $0xf0] sm:$0xff]
        %v436 = vld [vmem:[#allocation2 + $0xf8] sm:$0xff]
        %v437 = vld [vmem:[#allocation2 + $0x100] sm:$0xff]
        %v438 = vld [vmem:[#allocation2 + $0x108] sm:$0xff]
        %v439 = vld [vmem:[#allocation2 + $0x110] sm:$0xff]
        %v440 = vld [vmem:[#allocation2 + $0x118] sm:$0xff]
        %v441 = vrot.slane %v405, 7
        %v442 = vrot.slane %v407, 7
        %v443 = vrot.slane %v409, 7
        %v444 = vrot.slane %v411, 7
        %v445 = vrot.slane %v413, 7
        %v446 = vrot.slane %v415, 7
        %v447 = vrot.slane %v417, 7
        %v448 = vrot.slane %v419, 7
        %v449 = vrot.slane %v421, 7
        %v450 = vrot.slane %v423, 7
        %v451 = vrot.slane %v425, 7
        %v452 = vrot.slane %v427, 7
        %v453 = vrot.slane %v429, 7
        %v454 = vrot.slane %v431, 7
        %v455 = vrot.slane %v433, 7
        %v456 = vrot.slane %v435, 7
        %v457 = vrot.slane %v437, 7
        %v458 = vrot.slane %v439, 7
        %v459 = vrot.slane %v406, 7
        %v460 = vrot.slane %v408, 7
        %v461 = vrot.slane %v410, 7
        %v462 = vrot.slane %v412, 7
        %v463 = vrot.slane %v414, 7
        %v464 = vrot.slane %v416, 7
        %v465 = vrot.slane %v418, 7
        %v466 = vrot.slane %v420, 7
        %v467 = vrot.slane %v422, 7
        %v468 = vrot.slane %v424, 7
        %v469 = vrot.slane %v426, 7
        %v470 = vrot.slane %v428, 7
        %v471 = vrot.slane %v430, 7
        %v472 = vrot.slane %v432, 7
        %v473 = vrot.slane %v434, 7
        %v474 = vrot.slane %v436, 7
        %v475 = vrot.slane %v438, 7
        %v476 = vrot.slane %v440, 7
        %vm477 = vcmp.lt.s32.totalorder %v365, 1
        %v478 = vsel %vm477, %v441, %v459
        %v479 = vsel %vm477, %v442, %v460
        %v480 = vsel %vm477, %v443, %v461
        %v481 = vsel %vm477, %v444, %v462
        %v482 = vsel %vm477, %v445, %v463
        %v483 = vsel %vm477, %v446, %v464
        %v484 = vsel %vm477, %v447, %v465
        %v485 = vsel %vm477, %v448, %v466
        %v486 = vsel %vm477, %v449, %v467
        %v487 = vsel %vm477, %v450, %v468
        %v488 = vsel %vm477, %v451, %v469
        %v489 = vsel %vm477, %v452, %v470
        %v490 = vsel %vm477, %v453, %v471
        %v491 = vsel %vm477, %v454, %v472
        %v492 = vsel %vm477, %v455, %v473
        %v493 = vsel %vm477, %v456, %v474
        %v494 = vsel %vm477, %v457, %v475
        %v495 = vsel %vm477, %v458, %v476
        %v496 = vsel %vm477, %v459, %v441
        %v497 = vsel %vm477, %v460, %v442
        %v498 = vsel %vm477, %v461, %v443
        %v499 = vsel %vm477, %v462, %v444
        %v500 = vsel %vm477, %v463, %v445
        %v501 = vsel %vm477, %v464, %v446
        %v502 = vsel %vm477, %v465, %v447
        %v503 = vsel %vm477, %v466, %v448
        %v504 = vsel %vm477, %v467, %v449
        %v505 = vsel %vm477, %v468, %v450
        %v506 = vsel %vm477, %v469, %v451
        %v507 = vsel %vm477, %v470, %v452
        %v508 = vsel %vm477, %v471, %v453
        %v509 = vsel %vm477, %v472, %v454
        %v510 = vsel %vm477, %v473, %v455
        %v511 = vsel %vm477, %v474, %v456
        %v512 = vsel %vm477, %v475, %v457
        %v513 = vsel %vm477, %v476, %v458
        %v514 = vadd.s32 %v365, 4294967295
        %v515 = vadd.s32 %v366, 4294967295
        %vm516 = vcmp.ge.s32.totalorder %v514, 0
        %vm517 = vcmp.ge.s32.totalorder %v515, 0
        %vm518 = vcmp.lt.s32.totalorder %v514, 16
        %vm519 = vcmp.lt.s32.totalorder %v515, 16
        %vm520 = vmand %vm516, %vm518
        %vm521 = vmand %vm517, %vm519
        %v522 = vsel %vm520, %v496, 0.0
        %v523 = vsel %vm521, %v478, 0.0
        %v524 = vsel %vm520, %v497, 0.0
        %v525 = vsel %vm521, %v479, 0.0
        %v526 = vsel %vm520, %v498, 0.0
        %v527 = vsel %vm521, %v480, 0.0
        %v528 = vsel %vm520, %v499, 0.0
        %v529 = vsel %vm521, %v481, 0.0
        %v530 = vsel %vm520, %v500, 0.0
        %v531 = vsel %vm521, %v482, 0.0
        %v532 = vsel %vm520, %v501, 0.0
        %v533 = vsel %vm521, %v483, 0.0
        %v534 = vsel %vm520, %v502, 0.0
        %v535 = vsel %vm521, %v484, 0.0
        %v536 = vsel %vm520, %v503, 0.0
        %v537 = vsel %vm521, %v485, 0.0
        %v538 = vsel %vm520, %v504, 0.0
        %v539 = vsel %vm521, %v486, 0.0
        %v540 = vsel %vm520, %v505, 0.0
        %v541 = vsel %vm521, %v487, 0.0
        %v542 = vsel %vm520, %v506, 0.0
        %v543 = vsel %vm521, %v488, 0.0
        %v544 = vsel %vm520, %v507, 0.0
        %v545 = vsel %vm521, %v489, 0.0
        %v546 = vsel %vm520, %v508, 0.0
        %v547 = vsel %vm521, %v490, 0.0
        %v548 = vsel %vm520, %v509, 0.0
        %v549 = vsel %vm521, %v491, 0.0
        %v550 = vsel %vm520, %v510, 0.0
        %v551 = vsel %vm521, %v492, 0.0
        %v552 = vsel %vm520, %v511, 0.0
        %v553 = vsel %vm521, %v493, 0.0
        %v554 = vsel %vm520, %v512, 0.0
        %v555 = vsel %vm521, %v494, 0.0
        %v556 = vsel %vm520, %v513, 0.0
        %v557 = vsel %vm521, %v495, 0.0
        %v558 = vrot.slane %v405, 1
        %v559 = vrot.slane %v407, 1
        %v560 = vrot.slane %v409, 1
        %v561 = vrot.slane %v411, 1
        %v562 = vrot.slane %v413, 1
        %v563 = vrot.slane %v415, 1
        %v564 = vrot.slane %v417, 1
        %v565 = vrot.slane %v419, 1
        %v566 = vrot.slane %v421, 1
        %v567 = vrot.slane %v423, 1
        %v568 = vrot.slane %v425, 1
        %v569 = vrot.slane %v427, 1
        %v570 = vrot.slane %v429, 1
        %v571 = vrot.slane %v431, 1
        %v572 = vrot.slane %v433, 1
        %v573 = vrot.slane %v435, 1
        %v574 = vrot.slane %v437, 1
        %v575 = vrot.slane %v439, 1
        %v576 = vrot.slane %v406, 1
        %v577 = vrot.slane %v408, 1
        %v578 = vrot.slane %v410, 1
        %v579 = vrot.slane %v412, 1
        %v580 = vrot.slane %v414, 1
        %v581 = vrot.slane %v416, 1
        %v582 = vrot.slane %v418, 1
        %v583 = vrot.slane %v420, 1
        %v584 = vrot.slane %v422, 1
        %v585 = vrot.slane %v424, 1
        %v586 = vrot.slane %v426, 1
        %v587 = vrot.slane %v428, 1
        %v588 = vrot.slane %v430, 1
        %v589 = vrot.slane %v432, 1
        %v590 = vrot.slane %v434, 1
        %v591 = vrot.slane %v436, 1
        %v592 = vrot.slane %v438, 1
        %v593 = vrot.slane %v440, 1
        %vm594 = vcmp.lt.s32.totalorder %v365, 7
        %v595 = vsel %vm594, %v558, %v576
        %v596 = vsel %vm594, %v559, %v577
        %v597 = vsel %vm594, %v560, %v578
        %v598 = vsel %vm594, %v561, %v579
        %v599 = vsel %vm594, %v562, %v580
        %v600 = vsel %vm594, %v563, %v581
        %v601 = vsel %vm594, %v564, %v582
        %v602 = vsel %vm594, %v565, %v583
        %v603 = vsel %vm594, %v566, %v584
        %v604 = vsel %vm594, %v567, %v585
        %v605 = vsel %vm594, %v568, %v586
        %v606 = vsel %vm594, %v569, %v587
        %v607 = vsel %vm594, %v570, %v588
        %v608 = vsel %vm594, %v571, %v589
        %v609 = vsel %vm594, %v572, %v590
        %v610 = vsel %vm594, %v573, %v591
        %v611 = vsel %vm594, %v574, %v592
        %v612 = vsel %vm594, %v575, %v593
        %v613 = vsel %vm594, %v576, %v558
        %v614 = vsel %vm594, %v577, %v559
        %v615 = vsel %vm594, %v578, %v560
        %v616 = vsel %vm594, %v579, %v561
        %v617 = vsel %vm594, %v580, %v562
        %v618 = vsel %vm594, %v581, %v563
        %v619 = vsel %vm594, %v582, %v564
        %v620 = vsel %vm594, %v583, %v565
        %v621 = vsel %vm594, %v584, %v566
        %v622 = vsel %vm594, %v585, %v567
        %v623 = vsel %vm594, %v586, %v568
        %v624 = vsel %vm594, %v587, %v569
        %v625 = vsel %vm594, %v588, %v570
        %v626 = vsel %vm594, %v589, %v571
        %v627 = vsel %vm594, %v590, %v572
        %v628 = vsel %vm594, %v591, %v573
        %v629 = vsel %vm594, %v592, %v574
        %v630 = vsel %vm594, %v593, %v575
        %v631 = vadd.s32 %v365, 1
        %v632 = vadd.s32 %v366, 1
        %vm633 = vcmp.ge.s32.totalorder %v631, 0
        %vm634 = vcmp.ge.s32.totalorder %v632, 0
        %vm635 = vcmp.lt.s32.totalorder %v631, 16
        %vm636 = vcmp.lt.s32.totalorder %v632, 16
        %vm637 = vmand %vm633, %vm635
        %vm638 = vmand %vm634, %vm636
        %v639 = vsel %vm637, %v595, 0.0
        %v640 = vsel %vm638, %v613, 0.0
        %v641 = vsel %vm637, %v596, 0.0
        %v642 = vsel %vm638, %v614, 0.0
        %v643 = vsel %vm637, %v597, 0.0
        %v644 = vsel %vm638, %v615, 0.0
        %v645 = vsel %vm637, %v598, 0.0
        %v646 = vsel %vm638, %v616, 0.0
        %v647 = vsel %vm637, %v599, 0.0
        %v648 = vsel %vm638, %v617, 0.0
        %v649 = vsel %vm637, %v600, 0.0
        %v650 = vsel %vm638, %v618, 0.0
        %v651 = vsel %vm637, %v601, 0.0
        %v652 = vsel %vm638, %v619, 0.0
        %v653 = vsel %vm637, %v602, 0.0
        %v654 = vsel %vm638, %v620, 0.0
        %v655 = vsel %vm637, %v603, 0.0
        %v656 = vsel %vm638, %v621, 0.0
        %v657 = vsel %vm637, %v604, 0.0
        %v658 = vsel %vm638, %v622, 0.0
        %v659 = vsel %vm637, %v605, 0.0
        %v660 = vsel %vm638, %v623, 0.0
        %v661 = vsel %vm637, %v606, 0.0
        %v662 = vsel %vm638, %v624, 0.0
        %v663 = vsel %vm637, %v607, 0.0
        %v664 = vsel %vm638, %v625, 0.0
        %v665 = vsel %vm637, %v608, 0.0
        %v666 = vsel %vm638, %v626, 0.0
        %v667 = vsel %vm637, %v609, 0.0
        %v668 = vsel %vm638, %v627, 0.0
        %v669 = vsel %vm637, %v610, 0.0
        %v670 = vsel %vm638, %v628, 0.0
        %v671 = vsel %vm637, %v611, 0.0
        %v672 = vsel %vm638, %v629, 0.0
        %v673 = vsel %vm637, %v612, 0.0
        %v674 = vsel %vm638, %v630, 0.0
        %v675 = vld [vmem:[#allocation6] sm:$0xff]
        %v676 = vld [vmem:[#allocation6 + $0x8] sm:$0xff]
        %v677 = vld [vmem:[#allocation6 + $0x10] sm:$0xff]
        %v678 = vld [vmem:[#allocation6 + $0x18] sm:$0xff]
        %v679 = vld [vmem:[#allocation6 + $0x20] sm:$0xff]
        %v680 = vld [vmem:[#allocation6 + $0x28] sm:$0xff]
        %v681 = vld [vmem:[#allocation6 + $0x30] sm:$0xff]
        %v682 = vld [vmem:[#allocation6 + $0x38] sm:$0xff]
        %v683 = vld [vmem:[#allocation6 + $0x40] sm:$0xff]
        %v684 = vld [vmem:[#allocation6 + $0x48] sm:$0xff]
        %v685 = vld [vmem:[#allocation6 + $0x50] sm:$0xff]
        %v686 = vld [vmem:[#allocation6 + $0x58] sm:$0xff]
        %v687 = vld [vmem:[#allocation6 + $0x60] sm:$0xff]
        %v688 = vld [vmem:[#allocation6 + $0x68] sm:$0xff]
        %v689 = vld [vmem:[#allocation6 + $0x70] sm:$0xff]
        %v690 = vld [vmem:[#allocation6 + $0x78] sm:$0xff]
        %s691 = scalar_lea.vmem [#allocation6], 128
        %v692 = vld [vmem:[%s691] sm:$0xff]
        %v693 = vld [vmem:[%s691 + $0x8] sm:$0xff]
        %v694 = vld [vmem:[%s691 + $0x10] sm:$0xff]
        %v695 = vld [vmem:[%s691 + $0x18] sm:$0xff]
        %v696 = vld [vmem:[%s691 + $0x20] sm:$0xff]
        %v697 = vld [vmem:[%s691 + $0x28] sm:$0xff]
        %v698 = vld [vmem:[%s691 + $0x30] sm:$0xff]
        %v699 = vld [vmem:[%s691 + $0x38] sm:$0xff]
        %v700 = vld [vmem:[%s691 + $0x40] sm:$0xff]
        %v701 = vld [vmem:[%s691 + $0x48] sm:$0xff]
        %v702 = vld [vmem:[%s691 + $0x50] sm:$0xff]
        %v703 = vld [vmem:[%s691 + $0x58] sm:$0xff]
        %v704 = vld [vmem:[%s691 + $0x60] sm:$0xff]
        %v705 = vld [vmem:[%s691 + $0x68] sm:$0xff]
        %v706 = vld [vmem:[%s691 + $0x70] sm:$0xff]
        %v707 = vld [vmem:[%s691 + $0x78] sm:$0xff]
        %708 = vmatpush.msra.mxu0 %v707
        %709 = vmatpush.msra.mxu0 %v706
        %710 = vmatpush.msra.mxu0 %v705
        %711 = vmatpush.msra.mxu0 %v704
        %712 = vmatpush.msra.mxu0 %v703
        %713 = vmatpush.msra.mxu0 %v702
        %714 = vmatpush.msra.mxu0 %v701
        %715 = vmatpush.msra.mxu0 %v700
        %716 = vmatpush.msra.mxu0 %v699
        %717 = vmatpush.msra.mxu0 %v698
        %718 = vmatpush.msra.mxu0 %v697
        %719 = vmatpush.msra.mxu0 %v696
        %720 = vmatpush.msra.mxu0 %v695
        %721 = vmatpush.msra.mxu0 %v694
        %722 = vmatpush.msra.mxu0 %v693
        %723 = vmatpush.msra.mxu0 %v692
        %724 = vmatmul.f32.gmra.mxu0 %v405
        %v725 = vpop.f32.mrf.mxu0
        %v726 = vadd.f32 0.0, %v725
        %727 = vmatmul.f32.gmra.mxu0 %v406
        %v728 = vpop.f32.mrf.mxu0
        %v729 = vadd.f32 0.0, %v728
        %730 = vmatmul.f32.gmra.mxu0 %v407
        %v731 = vpop.f32.mrf.mxu0
        %v732 = vadd.f32 0.0, %v731
        %733 = vmatmul.f32.gmra.mxu0 %v408
        %v734 = vpop.f32.mrf.mxu0
        %v735 = vadd.f32 0.0, %v734
        %736 = vmatmul.f32.gmra.mxu0 %v409
        %v737 = vpop.f32.mrf.mxu0
        %v738 = vadd.f32 0.0, %v737
        %739 = vmatmul.f32.gmra.mxu0 %v410
        %v740 = vpop.f32.mrf.mxu0
        %v741 = vadd.f32 0.0, %v740
        %742 = vmatmul.f32.gmra.mxu0 %v411
        %v743 = vpop.f32.mrf.mxu0
        %v744 = vadd.f32 0.0, %v743
        %745 = vmatmul.f32.gmra.mxu0 %v412
        %v746 = vpop.f32.mrf.mxu0
        %v747 = vadd.f32 0.0, %v746
        %748 = vmatmul.f32.gmra.mxu0 %v413
        %v749 = vpop.f32.mrf.mxu0
        %v750 = vadd.f32 0.0, %v749
        %751 = vmatmul.f32.gmra.mxu0 %v414
        %v752 = vpop.f32.mrf.mxu0
        %v753 = vadd.f32 0.0, %v752
        %754 = vmatmul.f32.gmra.mxu0 %v415
        %v755 = vpop.f32.mrf.mxu0
        %v756 = vadd.f32 0.0, %v755
        %757 = vmatmul.f32.gmra.mxu0 %v416
        %v758 = vpop.f32.mrf.mxu0
        %v759 = vadd.f32 0.0, %v758
        %760 = vmatmul.f32.gmra.mxu0 %v417
        %v761 = vpop.f32.mrf.mxu0
        %v762 = vadd.f32 0.0, %v761
        %763 = vmatmul.f32.gmra.mxu0 %v418
        %v764 = vpop.f32.mrf.mxu0
        %v765 = vadd.f32 0.0, %v764
        %766 = vmatmul.f32.gmra.mxu0 %v419
        %v767 = vpop.f32.mrf.mxu0
        %v768 = vadd.f32 0.0, %v767
        %769 = vmatmul.f32.gmra.mxu0 %v420
        %v770 = vpop.f32.mrf.mxu0
        %v771 = vadd.f32 0.0, %v770
        %772 = vmatmul.f32.gmra.mxu0 %v421
        %v773 = vpop.f32.mrf.mxu0
        %v774 = vadd.f32 0.0, %v773
        %775 = vmatmul.f32.gmra.mxu0 %v422
        %v776 = vpop.f32.mrf.mxu0
        %v777 = vadd.f32 0.0, %v776
        %778 = vmatmul.f32.gmra.mxu0 %v423
        %v779 = vpop.f32.mrf.mxu0
        %v780 = vadd.f32 0.0, %v779
        %781 = vmatmul.f32.gmra.mxu0 %v424
        %v782 = vpop.f32.mrf.mxu0
        %v783 = vadd.f32 0.0, %v782
        %784 = vmatmul.f32.gmra.mxu0 %v425
        %v785 = vpop.f32.mrf.mxu0
        %v786 = vadd.f32 0.0, %v785
        %787 = vmatmul.f32.gmra.mxu0 %v426
        %v788 = vpop.f32.mrf.mxu0
        %v789 = vadd.f32 0.0, %v788
        %790 = vmatmul.f32.gmra.mxu0 %v427
        %v791 = vpop.f32.mrf.mxu0
        %v792 = vadd.f32 0.0, %v791
        %793 = vmatmul.f32.gmra.mxu0 %v428
        %v794 = vpop.f32.mrf.mxu0
        %v795 = vadd.f32 0.0, %v794
        %796 = vmatmul.f32.gmra.mxu0 %v429
        %v797 = vpop.f32.mrf.mxu0
        %v798 = vadd.f32 0.0, %v797
        %799 = vmatmul.f32.gmra.mxu0 %v430
        %v800 = vpop.f32.mrf.mxu0
        %v801 = vadd.f32 0.0, %v800
        %802 = vmatmul.f32.gmra.mxu0 %v431
        %v803 = vpop.f32.mrf.mxu0
        %v804 = vadd.f32 0.0, %v803
        %805 = vmatmul.f32.gmra.mxu0 %v432
        %v806 = vpop.f32.mrf.mxu0
        %v807 = vadd.f32 0.0, %v806
        %808 = vmatmul.f32.gmra.mxu0 %v433
        %v809 = vpop.f32.mrf.mxu0
        %v810 = vadd.f32 0.0, %v809
        %811 = vmatmul.f32.gmra.mxu0 %v434
        %v812 = vpop.f32.mrf.mxu0
        %v813 = vadd.f32 0.0, %v812
        %814 = vmatmul.f32.gmra.mxu0 %v435
        %v815 = vpop.f32.mrf.mxu0
        %v816 = vadd.f32 0.0, %v815
        %817 = vmatmul.f32.gmra.mxu0 %v436
        %v818 = vpop.f32.mrf.mxu0
        %v819 = vadd.f32 0.0, %v818
        %820 = vdwg.mxu0
        %821 = vmatpush.msra.mxu0 %v690
        %822 = vmatpush.msra.mxu0 %v689
        %823 = vmatpush.msra.mxu0 %v688
        %824 = vmatpush.msra.mxu0 %v687
        %825 = vmatpush.msra.mxu0 %v686
        %826 = vmatpush.msra.mxu0 %v685
        %827 = vmatpush.msra.mxu0 %v684
        %828 = vmatpush.msra.mxu0 %v683
        %829 = vmatpush.msra.mxu0 %v682
        %830 = vmatpush.msra.mxu0 %v681
        %831 = vmatpush.msra.mxu0 %v680
        %832 = vmatpush.msra.mxu0 %v679
        %833 = vmatpush.msra.mxu0 %v678
        %834 = vmatpush.msra.mxu0 %v677
        %835 = vmatpush.msra.mxu0 %v676
        %836 = vmatpush.msra.mxu0 %v675
        %837 = vmatmul.f32.gmra.mxu0 %v522
        %v838 = vpop.f32.mrf.mxu0
        %v839 = vadd.f32 %v726, %v838
        %840 = vmatmul.f32.gmra.mxu0 %v523
        %v841 = vpop.f32.mrf.mxu0
        %v842 = vadd.f32 %v729, %v841
        %843 = vmatmul.f32.gmra.mxu0 %v524
        %v844 = vpop.f32.mrf.mxu0
        %v845 = vadd.f32 %v732, %v844
        %846 = vmatmul.f32.gmra.mxu0 %v525
        %v847 = vpop.f32.mrf.mxu0
        %v848 = vadd.f32 %v735, %v847
        %849 = vmatmul.f32.gmra.mxu0 %v526
        %v850 = vpop.f32.mrf.mxu0
        %v851 = vadd.f32 %v738, %v850
        %852 = vmatmul.f32.gmra.mxu0 %v527
        %v853 = vpop.f32.mrf.mxu0
        %v854 = vadd.f32 %v741, %v853
        %855 = vmatmul.f32.gmra.mxu0 %v528
        %v856 = vpop.f32.mrf.mxu0
        %v857 = vadd.f32 %v744, %v856
        %858 = vmatmul.f32.gmra.mxu0 %v529
        %v859 = vpop.f32.mrf.mxu0
        %v860 = vadd.f32 %v747, %v859
        %861 = vmatmul.f32.gmra.mxu0 %v530
        %v862 = vpop.f32.mrf.mxu0
        %v863 = vadd.f32 %v750, %v862
        %864 = vmatmul.f32.gmra.mxu0 %v531
        %v865 = vpop.f32.mrf.mxu0
        %v866 = vadd.f32 %v753, %v865
        %867 = vmatmul.f32.gmra.mxu0 %v532
        %v868 = vpop.f32.mrf.mxu0
        %v869 = vadd.f32 %v756, %v868
        %870 = vmatmul.f32.gmra.mxu0 %v533
        %v871 = vpop.f32.mrf.mxu0
        %v872 = vadd.f32 %v759, %v871
        %873 = vmatmul.f32.gmra.mxu0 %v534
        %v874 = vpop.f32.mrf.mxu0
        %v875 = vadd.f32 %v762, %v874
        %876 = vmatmul.f32.gmra.mxu0 %v535
        %v877 = vpop.f32.mrf.mxu0
        %v878 = vadd.f32 %v765, %v877
        %879 = vmatmul.f32.gmra.mxu0 %v536
        %v880 = vpop.f32.mrf.mxu0
        %v881 = vadd.f32 %v768, %v880
        %882 = vmatmul.f32.gmra.mxu0 %v537
        %v883 = vpop.f32.mrf.mxu0
        %v884 = vadd.f32 %v771, %v883
        %885 = vmatmul.f32.gmra.mxu0 %v538
        %v886 = vpop.f32.mrf.mxu0
        %v887 = vadd.f32 %v774, %v886
        %888 = vmatmul.f32.gmra.mxu0 %v539
        %v889 = vpop.f32.mrf.mxu0
        %v890 = vadd.f32 %v777, %v889
        %891 = vmatmul.f32.gmra.mxu0 %v540
        %v892 = vpop.f32.mrf.mxu0
        %v893 = vadd.f32 %v780, %v892
        %894 = vmatmul.f32.gmra.mxu0 %v541
        %v895 = vpop.f32.mrf.mxu0
        %v896 = vadd.f32 %v783, %v895
        %897 = vmatmul.f32.gmra.mxu0 %v542
        %v898 = vpop.f32.mrf.mxu0
        %v899 = vadd.f32 %v786, %v898
        %900 = vmatmul.f32.gmra.mxu0 %v543
        %v901 = vpop.f32.mrf.mxu0
        %v902 = vadd.f32 %v789, %v901
        %903 = vmatmul.f32.gmra.mxu0 %v544
        %v904 = vpop.f32.mrf.mxu0
        %v905 = vadd.f32 %v792, %v904
        %906 = vmatmul.f32.gmra.mxu0 %v545
        %v907 = vpop.f32.mrf.mxu0
        %v908 = vadd.f32 %v795, %v907
        %909 = vmatmul.f32.gmra.mxu0 %v546
        %v910 = vpop.f32.mrf.mxu0
        %v911 = vadd.f32 %v798, %v910
        %912 = vmatmul.f32.gmra.mxu0 %v547
        %v913 = vpop.f32.mrf.mxu0
        %v914 = vadd.f32 %v801, %v913
        %915 = vmatmul.f32.gmra.mxu0 %v548
        %v916 = vpop.f32.mrf.mxu0
        %v917 = vadd.f32 %v804, %v916
        %918 = vmatmul.f32.gmra.mxu0 %v549
        %v919 = vpop.f32.mrf.mxu0
        %v920 = vadd.f32 %v807, %v919
        %921 = vmatmul.f32.gmra.mxu0 %v550
        %v922 = vpop.f32.mrf.mxu0
        %v923 = vadd.f32 %v810, %v922
        %924 = vmatmul.f32.gmra.mxu0 %v551
        %v925 = vpop.f32.mrf.mxu0
        %v926 = vadd.f32 %v813, %v925
        %927 = vmatmul.f32.gmra.mxu0 %v552
        %v928 = vpop.f32.mrf.mxu0
        %v929 = vadd.f32 %v816, %v928
        %930 = vmatmul.f32.gmra.mxu0 %v553
        %v931 = vpop.f32.mrf.mxu0
        %v932 = vadd.f32 %v819, %v931
        %933 = vdwg.mxu0
        %s934 = scalar_lea.vmem [#allocation6], 256
        %v935 = vld [vmem:[%s934] sm:$0xff]
        %v936 = vld [vmem:[%s934 + $0x8] sm:$0xff]
        %v937 = vld [vmem:[%s934 + $0x10] sm:$0xff]
        %v938 = vld [vmem:[%s934 + $0x18] sm:$0xff]
        %v939 = vld [vmem:[%s934 + $0x20] sm:$0xff]
        %v940 = vld [vmem:[%s934 + $0x28] sm:$0xff]
        %v941 = vld [vmem:[%s934 + $0x30] sm:$0xff]
        %v942 = vld [vmem:[%s934 + $0x38] sm:$0xff]
        %v943 = vld [vmem:[%s934 + $0x40] sm:$0xff]
        %v944 = vld [vmem:[%s934 + $0x48] sm:$0xff]
        %v945 = vld [vmem:[%s934 + $0x50] sm:$0xff]
        %v946 = vld [vmem:[%s934 + $0x58] sm:$0xff]
        %v947 = vld [vmem:[%s934 + $0x60] sm:$0xff]
        %v948 = vld [vmem:[%s934 + $0x68] sm:$0xff]
        %v949 = vld [vmem:[%s934 + $0x70] sm:$0xff]
        %v950 = vld [vmem:[%s934 + $0x78] sm:$0xff]
        %951 = vmatpush.msra.mxu0 %v950
        %952 = vmatpush.msra.mxu0 %v949
        %953 = vmatpush.msra.mxu0 %v948
        %954 = vmatpush.msra.mxu0 %v947
        %955 = vmatpush.msra.mxu0 %v946
        %956 = vmatpush.msra.mxu0 %v945
        %957 = vmatpush.msra.mxu0 %v944
        %958 = vmatpush.msra.mxu0 %v943
        %959 = vmatpush.msra.mxu0 %v942
        %960 = vmatpush.msra.mxu0 %v941
        %961 = vmatpush.msra.mxu0 %v940
        %962 = vmatpush.msra.mxu0 %v939
        %963 = vmatpush.msra.mxu0 %v938
        %964 = vmatpush.msra.mxu0 %v937
        %965 = vmatpush.msra.mxu0 %v936
        %966 = vmatpush.msra.mxu0 %v935
        %967 = vmatmul.f32.gmra.mxu0 %v639
        %v968 = vpop.f32.mrf.mxu0
        %v969 = vadd.f32 0.0, %v968
        %970 = vmatmul.f32.gmra.mxu0 %v640
        %v971 = vpop.f32.mrf.mxu0
        %v972 = vadd.f32 0.0, %v971
        %973 = vmatmul.f32.gmra.mxu0 %v641
        %v974 = vpop.f32.mrf.mxu0
        %v975 = vadd.f32 0.0, %v974
        %976 = vmatmul.f32.gmra.mxu0 %v642
        %v977 = vpop.f32.mrf.mxu0
        %v978 = vadd.f32 0.0, %v977
        %979 = vmatmul.f32.gmra.mxu0 %v643
        %v980 = vpop.f32.mrf.mxu0
        %v981 = vadd.f32 0.0, %v980
        %982 = vmatmul.f32.gmra.mxu0 %v644
        %v983 = vpop.f32.mrf.mxu0
        %v984 = vadd.f32 0.0, %v983
        %985 = vmatmul.f32.gmra.mxu0 %v645
        %v986 = vpop.f32.mrf.mxu0
        %v987 = vadd.f32 0.0, %v986
        %988 = vmatmul.f32.gmra.mxu0 %v646
        %v989 = vpop.f32.mrf.mxu0
        %v990 = vadd.f32 0.0, %v989
        %991 = vmatmul.f32.gmra.mxu0 %v647
        %v992 = vpop.f32.mrf.mxu0
        %v993 = vadd.f32 0.0, %v992
        %994 = vmatmul.f32.gmra.mxu0 %v648
        %v995 = vpop.f32.mrf.mxu0
        %v996 = vadd.f32 0.0, %v995
        %997 = vmatmul.f32.gmra.mxu0 %v649
        %v998 = vpop.f32.mrf.mxu0
        %v999 = vadd.f32 0.0, %v998
        %1000 = vmatmul.f32.gmra.mxu0 %v650
        %v1001 = vpop.f32.mrf.mxu0
        %v1002 = vadd.f32 0.0, %v1001
        %1003 = vmatmul.f32.gmra.mxu0 %v651
        %v1004 = vpop.f32.mrf.mxu0
        %v1005 = vadd.f32 0.0, %v1004
        %1006 = vmatmul.f32.gmra.mxu0 %v652
        %v1007 = vpop.f32.mrf.mxu0
        %v1008 = vadd.f32 0.0, %v1007
        %1009 = vmatmul.f32.gmra.mxu0 %v653
        %v1010 = vpop.f32.mrf.mxu0
        %v1011 = vadd.f32 0.0, %v1010
        %1012 = vmatmul.f32.gmra.mxu0 %v654
        %v1013 = vpop.f32.mrf.mxu0
        %v1014 = vadd.f32 0.0, %v1013
        %1015 = vmatmul.f32.gmra.mxu0 %v655
        %v1016 = vpop.f32.mrf.mxu0
        %v1017 = vadd.f32 0.0, %v1016
        %1018 = vmatmul.f32.gmra.mxu0 %v656
        %v1019 = vpop.f32.mrf.mxu0
        %v1020 = vadd.f32 0.0, %v1019
        %1021 = vmatmul.f32.gmra.mxu0 %v657
        %v1022 = vpop.f32.mrf.mxu0
        %v1023 = vadd.f32 0.0, %v1022
        %1024 = vmatmul.f32.gmra.mxu0 %v658
        %v1025 = vpop.f32.mrf.mxu0
        %v1026 = vadd.f32 0.0, %v1025
        %1027 = vmatmul.f32.gmra.mxu0 %v659
        %v1028 = vpop.f32.mrf.mxu0
        %v1029 = vadd.f32 0.0, %v1028
        %1030 = vmatmul.f32.gmra.mxu0 %v660
        %v1031 = vpop.f32.mrf.mxu0
        %v1032 = vadd.f32 0.0, %v1031
        %1033 = vmatmul.f32.gmra.mxu0 %v661
        %v1034 = vpop.f32.mrf.mxu0
        %v1035 = vadd.f32 0.0, %v1034
        %1036 = vmatmul.f32.gmra.mxu0 %v662
        %v1037 = vpop.f32.mrf.mxu0
        %v1038 = vadd.f32 0.0, %v1037
        %1039 = vmatmul.f32.gmra.mxu0 %v663
        %v1040 = vpop.f32.mrf.mxu0
        %v1041 = vadd.f32 0.0, %v1040
        %1042 = vmatmul.f32.gmra.mxu0 %v664
        %v1043 = vpop.f32.mrf.mxu0
        %v1044 = vadd.f32 0.0, %v1043
        %1045 = vmatmul.f32.gmra.mxu0 %v665
        %v1046 = vpop.f32.mrf.mxu0
        %v1047 = vadd.f32 0.0, %v1046
        %1048 = vmatmul.f32.gmra.mxu0 %v666
        %v1049 = vpop.f32.mrf.mxu0
        %v1050 = vadd.f32 0.0, %v1049
        %1051 = vmatmul.f32.gmra.mxu0 %v667
        %v1052 = vpop.f32.mrf.mxu0
        %v1053 = vadd.f32 0.0, %v1052
        %1054 = vmatmul.f32.gmra.mxu0 %v668
        %v1055 = vpop.f32.mrf.mxu0
        %v1056 = vadd.f32 0.0, %v1055
        %1057 = vmatmul.f32.gmra.mxu0 %v669
        %v1058 = vpop.f32.mrf.mxu0
        %v1059 = vadd.f32 0.0, %v1058
        %1060 = vmatmul.f32.gmra.mxu0 %v670
        %v1061 = vpop.f32.mrf.mxu0
        %v1062 = vadd.f32 0.0, %v1061
        %1063 = vdwg.mxu0
        %v1064 = vadd.f32 %v839, %v969
        %v1065 = vadd.f32 %v842, %v972
        %v1066 = vadd.f32 %v845, %v975
        %v1067 = vadd.f32 %v848, %v978
        %v1068 = vadd.f32 %v851, %v981
        %v1069 = vadd.f32 %v854, %v984
        %v1070 = vadd.f32 %v857, %v987
        %v1071 = vadd.f32 %v860, %v990
        %v1072 = vadd.f32 %v863, %v993
        %v1073 = vadd.f32 %v866, %v996
        %v1074 = vadd.f32 %v869, %v999
        %v1075 = vadd.f32 %v872, %v1002
        %v1076 = vadd.f32 %v875, %v1005
        %v1077 = vadd.f32 %v878, %v1008
        %v1078 = vadd.f32 %v881, %v1011
        %v1079 = vadd.f32 %v884, %v1014
        %v1080 = vadd.f32 %v887, %v1017
        %v1081 = vadd.f32 %v890, %v1020
        %v1082 = vadd.f32 %v893, %v1023
        %v1083 = vadd.f32 %v896, %v1026
        %v1084 = vadd.f32 %v899, %v1029
        %v1085 = vadd.f32 %v902, %v1032
        %v1086 = vadd.f32 %v905, %v1035
        %v1087 = vadd.f32 %v908, %v1038
        %v1088 = vadd.f32 %v911, %v1041
        %v1089 = vadd.f32 %v914, %v1044
        %v1090 = vadd.f32 %v917, %v1047
        %v1091 = vadd.f32 %v920, %v1050
        %v1092 = vadd.f32 %v923, %v1053
        %v1093 = vadd.f32 %v926, %v1056
        %v1094 = vadd.f32 %v929, %v1059
        %v1095 = vadd.f32 %v932, %v1062
        %s1096 = scalar_lea.vmem [#allocation6], 384
        %v1097 = vld [vmem:[%s1096] sm:$0xff]
        %v1098 = vld [vmem:[%s1096 + $0x8] sm:$0xff]
        %v1099 = vld [vmem:[%s1096 + $0x10] sm:$0xff]
        %v1100 = vld [vmem:[%s1096 + $0x18] sm:$0xff]
        %v1101 = vld [vmem:[%s1096 + $0x20] sm:$0xff]
        %v1102 = vld [vmem:[%s1096 + $0x28] sm:$0xff]
        %v1103 = vld [vmem:[%s1096 + $0x30] sm:$0xff]
        %v1104 = vld [vmem:[%s1096 + $0x38] sm:$0xff]
        %v1105 = vld [vmem:[%s1096 + $0x40] sm:$0xff]
        %v1106 = vld [vmem:[%s1096 + $0x48] sm:$0xff]
        %v1107 = vld [vmem:[%s1096 + $0x50] sm:$0xff]
        %v1108 = vld [vmem:[%s1096 + $0x58] sm:$0xff]
        %v1109 = vld [vmem:[%s1096 + $0x60] sm:$0xff]
        %v1110 = vld [vmem:[%s1096 + $0x68] sm:$0xff]
        %v1111 = vld [vmem:[%s1096 + $0x70] sm:$0xff]
        %v1112 = vld [vmem:[%s1096 + $0x78] sm:$0xff]
        %1113 = vmatpush.msra.mxu0 %v1112
        %1114 = vmatpush.msra.mxu0 %v1111
        %1115 = vmatpush.msra.mxu0 %v1110
        %1116 = vmatpush.msra.mxu0 %v1109
        %1117 = vmatpush.msra.mxu0 %v1108
        %1118 = vmatpush.msra.mxu0 %v1107
        %1119 = vmatpush.msra.mxu0 %v1106
        %1120 = vmatpush.msra.mxu0 %v1105
        %1121 = vmatpush.msra.mxu0 %v1104
        %1122 = vmatpush.msra.mxu0 %v1103
        %1123 = vmatpush.msra.mxu0 %v1102
        %1124 = vmatpush.msra.mxu0 %v1101
        %1125 = vmatpush.msra.mxu0 %v1100
        %1126 = vmatpush.msra.mxu0 %v1099
        %1127 = vmatpush.msra.mxu0 %v1098
        %1128 = vmatpush.msra.mxu0 %v1097
        %1129 = vmatmul.f32.gmra.mxu0 %v524
        %v1130 = vpop.f32.mrf.mxu0
        %v1131 = vadd.f32 0.0, %v1130
        %1132 = vmatmul.f32.gmra.mxu0 %v525
        %v1133 = vpop.f32.mrf.mxu0
        %v1134 = vadd.f32 0.0, %v1133
        %1135 = vmatmul.f32.gmra.mxu0 %v526
        %v1136 = vpop.f32.mrf.mxu0
        %v1137 = vadd.f32 0.0, %v1136
        %1138 = vmatmul.f32.gmra.mxu0 %v527
        %v1139 = vpop.f32.mrf.mxu0
        %v1140 = vadd.f32 0.0, %v1139
        %1141 = vmatmul.f32.gmra.mxu0 %v528
        %v1142 = vpop.f32.mrf.mxu0
        %v1143 = vadd.f32 0.0, %v1142
        %1144 = vmatmul.f32.gmra.mxu0 %v529
        %v1145 = vpop.f32.mrf.mxu0
        %v1146 = vadd.f32 0.0, %v1145
        %1147 = vmatmul.f32.gmra.mxu0 %v530
        %v1148 = vpop.f32.mrf.mxu0
        %v1149 = vadd.f32 0.0, %v1148
        %1150 = vmatmul.f32.gmra.mxu0 %v531
        %v1151 = vpop.f32.mrf.mxu0
        %v1152 = vadd.f32 0.0, %v1151
        %1153 = vmatmul.f32.gmra.mxu0 %v532
        %v1154 = vpop.f32.mrf.mxu0
        %v1155 = vadd.f32 0.0, %v1154
        %1156 = vmatmul.f32.gmra.mxu0 %v533
        %v1157 = vpop.f32.mrf.mxu0
        %v1158 = vadd.f32 0.0, %v1157
        %1159 = vmatmul.f32.gmra.mxu0 %v534
        %v1160 = vpop.f32.mrf.mxu0
        %v1161 = vadd.f32 0.0, %v1160
        %1162 = vmatmul.f32.gmra.mxu0 %v535
        %v1163 = vpop.f32.mrf.mxu0
        %v1164 = vadd.f32 0.0, %v1163
        %1165 = vmatmul.f32.gmra.mxu0 %v536
        %v1166 = vpop.f32.mrf.mxu0
        %v1167 = vadd.f32 0.0, %v1166
        %1168 = vmatmul.f32.gmra.mxu0 %v537
        %v1169 = vpop.f32.mrf.mxu0
        %v1170 = vadd.f32 0.0, %v1169
        %1171 = vmatmul.f32.gmra.mxu0 %v538
        %v1172 = vpop.f32.mrf.mxu0
        %v1173 = vadd.f32 0.0, %v1172
        %1174 = vmatmul.f32.gmra.mxu0 %v539
        %v1175 = vpop.f32.mrf.mxu0
        %v1176 = vadd.f32 0.0, %v1175
        %1177 = vmatmul.f32.gmra.mxu0 %v540
        %v1178 = vpop.f32.mrf.mxu0
        %v1179 = vadd.f32 0.0, %v1178
        %1180 = vmatmul.f32.gmra.mxu0 %v541
        %v1181 = vpop.f32.mrf.mxu0
        %v1182 = vadd.f32 0.0, %v1181
        %1183 = vmatmul.f32.gmra.mxu0 %v542
        %v1184 = vpop.f32.mrf.mxu0
        %v1185 = vadd.f32 0.0, %v1184
        %1186 = vmatmul.f32.gmra.mxu0 %v543
        %v1187 = vpop.f32.mrf.mxu0
        %v1188 = vadd.f32 0.0, %v1187
        %1189 = vmatmul.f32.gmra.mxu0 %v544
        %v1190 = vpop.f32.mrf.mxu0
        %v1191 = vadd.f32 0.0, %v1190
        %1192 = vmatmul.f32.gmra.mxu0 %v545
        %v1193 = vpop.f32.mrf.mxu0
        %v1194 = vadd.f32 0.0, %v1193
        %1195 = vmatmul.f32.gmra.mxu0 %v546
        %v1196 = vpop.f32.mrf.mxu0
        %v1197 = vadd.f32 0.0, %v1196
        %1198 = vmatmul.f32.gmra.mxu0 %v547
        %v1199 = vpop.f32.mrf.mxu0
        %v1200 = vadd.f32 0.0, %v1199
        %1201 = vmatmul.f32.gmra.mxu0 %v548
        %v1202 = vpop.f32.mrf.mxu0
        %v1203 = vadd.f32 0.0, %v1202
        %1204 = vmatmul.f32.gmra.mxu0 %v549
        %v1205 = vpop.f32.mrf.mxu0
        %v1206 = vadd.f32 0.0, %v1205
        %1207 = vmatmul.f32.gmra.mxu0 %v550
        %v1208 = vpop.f32.mrf.mxu0
        %v1209 = vadd.f32 0.0, %v1208
        %1210 = vmatmul.f32.gmra.mxu0 %v551
        %v1211 = vpop.f32.mrf.mxu0
        %v1212 = vadd.f32 0.0, %v1211
        %1213 = vmatmul.f32.gmra.mxu0 %v552
        %v1214 = vpop.f32.mrf.mxu0
        %v1215 = vadd.f32 0.0, %v1214
        %1216 = vmatmul.f32.gmra.mxu0 %v553
        %v1217 = vpop.f32.mrf.mxu0
        %v1218 = vadd.f32 0.0, %v1217
        %1219 = vmatmul.f32.gmra.mxu0 %v554
        %v1220 = vpop.f32.mrf.mxu0
        %v1221 = vadd.f32 0.0, %v1220
        %1222 = vmatmul.f32.gmra.mxu0 %v555
        %v1223 = vpop.f32.mrf.mxu0
        %v1224 = vadd.f32 0.0, %v1223
        %1225 = vdwg.mxu0
        %v1226 = vadd.f32 %v1064, %v1131
        %v1227 = vadd.f32 %v1065, %v1134
        %v1228 = vadd.f32 %v1066, %v1137
        %v1229 = vadd.f32 %v1067, %v1140
        %v1230 = vadd.f32 %v1068, %v1143
        %v1231 = vadd.f32 %v1069, %v1146
        %v1232 = vadd.f32 %v1070, %v1149
        %v1233 = vadd.f32 %v1071, %v1152
        %v1234 = vadd.f32 %v1072, %v1155
        %v1235 = vadd.f32 %v1073, %v1158
        %v1236 = vadd.f32 %v1074, %v1161
        %v1237 = vadd.f32 %v1075, %v1164
        %v1238 = vadd.f32 %v1076, %v1167
        %v1239 = vadd.f32 %v1077, %v1170
        %v1240 = vadd.f32 %v1078, %v1173
        %v1241 = vadd.f32 %v1079, %v1176
        %v1242 = vadd.f32 %v1080, %v1179
        %v1243 = vadd.f32 %v1081, %v1182
        %v1244 = vadd.f32 %v1082, %v1185
        %v1245 = vadd.f32 %v1083, %v1188
        %v1246 = vadd.f32 %v1084, %v1191
        %v1247 = vadd.f32 %v1085, %v1194
        %v1248 = vadd.f32 %v1086, %v1197
        %v1249 = vadd.f32 %v1087, %v1200
        %v1250 = vadd.f32 %v1088, %v1203
        %v1251 = vadd.f32 %v1089, %v1206
        %v1252 = vadd.f32 %v1090, %v1209
        %v1253 = vadd.f32 %v1091, %v1212
        %v1254 = vadd.f32 %v1092, %v1215
        %v1255 = vadd.f32 %v1093, %v1218
        %v1256 = vadd.f32 %v1094, %v1221
        %v1257 = vadd.f32 %v1095, %v1224
        %s1258 = scalar_lea.vmem [#allocation6], 512
        %v1259 = vld [vmem:[%s1258] sm:$0xff]
        %v1260 = vld [vmem:[%s1258 + $0x8] sm:$0xff]
        %v1261 = vld [vmem:[%s1258 + $0x10] sm:$0xff]
        %v1262 = vld [vmem:[%s1258 + $0x18] sm:$0xff]
        %v1263 = vld [vmem:[%s1258 + $0x20] sm:$0xff]
        %v1264 = vld [vmem:[%s1258 + $0x28] sm:$0xff]
        %v1265 = vld [vmem:[%s1258 + $0x30] sm:$0xff]
        %v1266 = vld [vmem:[%s1258 + $0x38] sm:$0xff]
        %v1267 = vld [vmem:[%s1258 + $0x40] sm:$0xff]
        %v1268 = vld [vmem:[%s1258 + $0x48] sm:$0xff]
        %v1269 = vld [vmem:[%s1258 + $0x50] sm:$0xff]
        %v1270 = vld [vmem:[%s1258 + $0x58] sm:$0xff]
        %v1271 = vld [vmem:[%s1258 + $0x60] sm:$0xff]
        %v1272 = vld [vmem:[%s1258 + $0x68] sm:$0xff]
        %v1273 = vld [vmem:[%s1258 + $0x70] sm:$0xff]
        %v1274 = vld [vmem:[%s1258 + $0x78] sm:$0xff]
        %1275 = vmatpush.msra.mxu0 %v1274
        %1276 = vmatpush.msra.mxu0 %v1273
        %1277 = vmatpush.msra.mxu0 %v1272
        %1278 = vmatpush.msra.mxu0 %v1271
        %1279 = vmatpush.msra.mxu0 %v1270
        %1280 = vmatpush.msra.mxu0 %v1269
        %1281 = vmatpush.msra.mxu0 %v1268
        %1282 = vmatpush.msra.mxu0 %v1267
        %1283 = vmatpush.msra.mxu0 %v1266
        %1284 = vmatpush.msra.mxu0 %v1265
        %1285 = vmatpush.msra.mxu0 %v1264
        %1286 = vmatpush.msra.mxu0 %v1263
        %1287 = vmatpush.msra.mxu0 %v1262
        %1288 = vmatpush.msra.mxu0 %v1261
        %1289 = vmatpush.msra.mxu0 %v1260
        %1290 = vmatpush.msra.mxu0 %v1259
        %1291 = vmatmul.f32.gmra.mxu0 %v407
        %v1292 = vpop.f32.mrf.mxu0
        %v1293 = vadd.f32 0.0, %v1292
        %1294 = vmatmul.f32.gmra.mxu0 %v408
        %v1295 = vpop.f32.mrf.mxu0
        %v1296 = vadd.f32 0.0, %v1295
        %1297 = vmatmul.f32.gmra.mxu0 %v409
        %v1298 = vpop.f32.mrf.mxu0
        %v1299 = vadd.f32 0.0, %v1298
        %1300 = vmatmul.f32.gmra.mxu0 %v410
        %v1301 = vpop.f32.mrf.mxu0
        %v1302 = vadd.f32 0.0, %v1301
        %1303 = vmatmul.f32.gmra.mxu0 %v411
        %v1304 = vpop.f32.mrf.mxu0
        %v1305 = vadd.f32 0.0, %v1304
        %1306 = vmatmul.f32.gmra.mxu0 %v412
        %v1307 = vpop.f32.mrf.mxu0
        %v1308 = vadd.f32 0.0, %v1307
        %1309 = vmatmul.f32.gmra.mxu0 %v413
        %v1310 = vpop.f32.mrf.mxu0
        %v1311 = vadd.f32 0.0, %v1310
        %1312 = vmatmul.f32.gmra.mxu0 %v414
        %v1313 = vpop.f32.mrf.mxu0
        %v1314 = vadd.f32 0.0, %v1313
        %1315 = vmatmul.f32.gmra.mxu0 %v415
        %v1316 = vpop.f32.mrf.mxu0
        %v1317 = vadd.f32 0.0, %v1316
        %1318 = vmatmul.f32.gmra.mxu0 %v416
        %v1319 = vpop.f32.mrf.mxu0
        %v1320 = vadd.f32 0.0, %v1319
        %1321 = vmatmul.f32.gmra.mxu0 %v417
        %v1322 = vpop.f32.mrf.mxu0
        %v1323 = vadd.f32 0.0, %v1322
        %1324 = vmatmul.f32.gmra.mxu0 %v418
        %v1325 = vpop.f32.mrf.mxu0
        %v1326 = vadd.f32 0.0, %v1325
        %1327 = vmatmul.f32.gmra.mxu0 %v419
        %v1328 = vpop.f32.mrf.mxu0
        %v1329 = vadd.f32 0.0, %v1328
        %1330 = vmatmul.f32.gmra.mxu0 %v420
        %v1331 = vpop.f32.mrf.mxu0
        %v1332 = vadd.f32 0.0, %v1331
        %1333 = vmatmul.f32.gmra.mxu0 %v421
        %v1334 = vpop.f32.mrf.mxu0
        %v1335 = vadd.f32 0.0, %v1334
        %1336 = vmatmul.f32.gmra.mxu0 %v422
        %v1337 = vpop.f32.mrf.mxu0
        %v1338 = vadd.f32 0.0, %v1337
        %1339 = vmatmul.f32.gmra.mxu0 %v423
        %v1340 = vpop.f32.mrf.mxu0
        %v1341 = vadd.f32 0.0, %v1340
        %1342 = vmatmul.f32.gmra.mxu0 %v424
        %v1343 = vpop.f32.mrf.mxu0
        %v1344 = vadd.f32 0.0, %v1343
        %1345 = vmatmul.f32.gmra.mxu0 %v425
        %v1346 = vpop.f32.mrf.mxu0
        %v1347 = vadd.f32 0.0, %v1346
        %1348 = vmatmul.f32.gmra.mxu0 %v426
        %v1349 = vpop.f32.mrf.mxu0
        %v1350 = vadd.f32 0.0, %v1349
        %1351 = vmatmul.f32.gmra.mxu0 %v427
        %v1352 = vpop.f32.mrf.mxu0
        %v1353 = vadd.f32 0.0, %v1352
        %1354 = vmatmul.f32.gmra.mxu0 %v428
        %v1355 = vpop.f32.mrf.mxu0
        %v1356 = vadd.f32 0.0, %v1355
        %1357 = vmatmul.f32.gmra.mxu0 %v429
        %v1358 = vpop.f32.mrf.mxu0
        %v1359 = vadd.f32 0.0, %v1358
        %1360 = vmatmul.f32.gmra.mxu0 %v430
        %v1361 = vpop.f32.mrf.mxu0
        %v1362 = vadd.f32 0.0, %v1361
        %1363 = vmatmul.f32.gmra.mxu0 %v431
        %v1364 = vpop.f32.mrf.mxu0
        %v1365 = vadd.f32 0.0, %v1364
        %1366 = vmatmul.f32.gmra.mxu0 %v432
        %v1367 = vpop.f32.mrf.mxu0
        %v1368 = vadd.f32 0.0, %v1367
        %1369 = vmatmul.f32.gmra.mxu0 %v433
        %v1370 = vpop.f32.mrf.mxu0
        %v1371 = vadd.f32 0.0, %v1370
        %1372 = vmatmul.f32.gmra.mxu0 %v434
        %v1373 = vpop.f32.mrf.mxu0
        %v1374 = vadd.f32 0.0, %v1373
        %1375 = vmatmul.f32.gmra.mxu0 %v435
        %v1376 = vpop.f32.mrf.mxu0
        %v1377 = vadd.f32 0.0, %v1376
        %1378 = vmatmul.f32.gmra.mxu0 %v436
        %v1379 = vpop.f32.mrf.mxu0
        %v1380 = vadd.f32 0.0, %v1379
        %1381 = vmatmul.f32.gmra.mxu0 %v437
        %v1382 = vpop.f32.mrf.mxu0
        %v1383 = vadd.f32 0.0, %v1382
        %1384 = vmatmul.f32.gmra.mxu0 %v438
        %v1385 = vpop.f32.mrf.mxu0
        %v1386 = vadd.f32 0.0, %v1385
        %1387 = vdwg.mxu0
        %v1388 = vadd.f32 %v1226, %v1293
        %v1389 = vadd.f32 %v1227, %v1296
        %v1390 = vadd.f32 %v1228, %v1299
        %v1391 = vadd.f32 %v1229, %v1302
        %v1392 = vadd.f32 %v1230, %v1305
        %v1393 = vadd.f32 %v1231, %v1308
        %v1394 = vadd.f32 %v1232, %v1311
        %v1395 = vadd.f32 %v1233, %v1314
        %v1396 = vadd.f32 %v1234, %v1317
        %v1397 = vadd.f32 %v1235, %v1320
        %v1398 = vadd.f32 %v1236, %v1323
        %v1399 = vadd.f32 %v1237, %v1326
        %v1400 = vadd.f32 %v1238, %v1329
        %v1401 = vadd.f32 %v1239, %v1332
        %v1402 = vadd.f32 %v1240, %v1335
        %v1403 = vadd.f32 %v1241, %v1338
        %v1404 = vadd.f32 %v1242, %v1341
        %v1405 = vadd.f32 %v1243, %v1344
        %v1406 = vadd.f32 %v1244, %v1347
        %v1407 = vadd.f32 %v1245, %v1350
        %v1408 = vadd.f32 %v1246, %v1353
        %v1409 = vadd.f32 %v1247, %v1356
        %v1410 = vadd.f32 %v1248, %v1359
        %v1411 = vadd.f32 %v1249, %v1362
        %v1412 = vadd.f32 %v1250, %v1365
        %v1413 = vadd.f32 %v1251, %v1368
        %v1414 = vadd.f32 %v1252, %v1371
        %v1415 = vadd.f32 %v1253, %v1374
        %v1416 = vadd.f32 %v1254, %v1377
        %v1417 = vadd.f32 %v1255, %v1380
        %v1418 = vadd.f32 %v1256, %v1383
        %v1419 = vadd.f32 %v1257, %v1386
        %s1420 = scalar_lea.vmem [#allocation6], 640
        %v1421 = vld [vmem:[%s1420] sm:$0xff]
        %v1422 = vld [vmem:[%s1420 + $0x8] sm:$0xff]
        %v1423 = vld [vmem:[%s1420 + $0x10] sm:$0xff]
        %v1424 = vld [vmem:[%s1420 + $0x18] sm:$0xff]
        %v1425 = vld [vmem:[%s1420 + $0x20] sm:$0xff]
        %v1426 = vld [vmem:[%s1420 + $0x28] sm:$0xff]
        %v1427 = vld [vmem:[%s1420 + $0x30] sm:$0xff]
        %v1428 = vld [vmem:[%s1420 + $0x38] sm:$0xff]
        %v1429 = vld [vmem:[%s1420 + $0x40] sm:$0xff]
        %v1430 = vld [vmem:[%s1420 + $0x48] sm:$0xff]
        %v1431 = vld [vmem:[%s1420 + $0x50] sm:$0xff]
        %v1432 = vld [vmem:[%s1420 + $0x58] sm:$0xff]
        %v1433 = vld [vmem:[%s1420 + $0x60] sm:$0xff]
        %v1434 = vld [vmem:[%s1420 + $0x68] sm:$0xff]
        %v1435 = vld [vmem:[%s1420 + $0x70] sm:$0xff]
        %v1436 = vld [vmem:[%s1420 + $0x78] sm:$0xff]
        %1437 = vmatpush.msra.mxu0 %v1436
        %1438 = vmatpush.msra.mxu0 %v1435
        %1439 = vmatpush.msra.mxu0 %v1434
        %1440 = vmatpush.msra.mxu0 %v1433
        %1441 = vmatpush.msra.mxu0 %v1432
        %1442 = vmatpush.msra.mxu0 %v1431
        %1443 = vmatpush.msra.mxu0 %v1430
        %1444 = vmatpush.msra.mxu0 %v1429
        %1445 = vmatpush.msra.mxu0 %v1428
        %1446 = vmatpush.msra.mxu0 %v1427
        %1447 = vmatpush.msra.mxu0 %v1426
        %1448 = vmatpush.msra.mxu0 %v1425
        %1449 = vmatpush.msra.mxu0 %v1424
        %1450 = vmatpush.msra.mxu0 %v1423
        %1451 = vmatpush.msra.mxu0 %v1422
        %1452 = vmatpush.msra.mxu0 %v1421
        %1453 = vmatmul.f32.gmra.mxu0 %v641
        %v1454 = vpop.f32.mrf.mxu0
        %v1455 = vadd.f32 0.0, %v1454
        %1456 = vmatmul.f32.gmra.mxu0 %v642
        %v1457 = vpop.f32.mrf.mxu0
        %v1458 = vadd.f32 0.0, %v1457
        %1459 = vmatmul.f32.gmra.mxu0 %v643
        %v1460 = vpop.f32.mrf.mxu0
        %v1461 = vadd.f32 0.0, %v1460
        %1462 = vmatmul.f32.gmra.mxu0 %v644
        %v1463 = vpop.f32.mrf.mxu0
        %v1464 = vadd.f32 0.0, %v1463
        %1465 = vmatmul.f32.gmra.mxu0 %v645
        %v1466 = vpop.f32.mrf.mxu0
        %v1467 = vadd.f32 0.0, %v1466
        %1468 = vmatmul.f32.gmra.mxu0 %v646
        %v1469 = vpop.f32.mrf.mxu0
        %v1470 = vadd.f32 0.0, %v1469
        %1471 = vmatmul.f32.gmra.mxu0 %v647
        %v1472 = vpop.f32.mrf.mxu0
        %v1473 = vadd.f32 0.0, %v1472
        %1474 = vmatmul.f32.gmra.mxu0 %v648
        %v1475 = vpop.f32.mrf.mxu0
        %v1476 = vadd.f32 0.0, %v1475
        %1477 = vmatmul.f32.gmra.mxu0 %v649
        %v1478 = vpop.f32.mrf.mxu0
        %v1479 = vadd.f32 0.0, %v1478
        %1480 = vmatmul.f32.gmra.mxu0 %v650
        %v1481 = vpop.f32.mrf.mxu0
        %v1482 = vadd.f32 0.0, %v1481
        %1483 = vmatmul.f32.gmra.mxu0 %v651
        %v1484 = vpop.f32.mrf.mxu0
        %v1485 = vadd.f32 0.0, %v1484
        %1486 = vmatmul.f32.gmra.mxu0 %v652
        %v1487 = vpop.f32.mrf.mxu0
        %v1488 = vadd.f32 0.0, %v1487
        %1489 = vmatmul.f32.gmra.mxu0 %v653
        %v1490 = vpop.f32.mrf.mxu0
        %v1491 = vadd.f32 0.0, %v1490
        %1492 = vmatmul.f32.gmra.mxu0 %v654
        %v1493 = vpop.f32.mrf.mxu0
        %v1494 = vadd.f32 0.0, %v1493
        %1495 = vmatmul.f32.gmra.mxu0 %v655
        %v1496 = vpop.f32.mrf.mxu0
        %v1497 = vadd.f32 0.0, %v1496
        %1498 = vmatmul.f32.gmra.mxu0 %v656
        %v1499 = vpop.f32.mrf.mxu0
        %v1500 = vadd.f32 0.0, %v1499
        %1501 = vmatmul.f32.gmra.mxu0 %v657
        %v1502 = vpop.f32.mrf.mxu0
        %v1503 = vadd.f32 0.0, %v1502
        %1504 = vmatmul.f32.gmra.mxu0 %v658
        %v1505 = vpop.f32.mrf.mxu0
        %v1506 = vadd.f32 0.0, %v1505
        %1507 = vmatmul.f32.gmra.mxu0 %v659
        %v1508 = vpop.f32.mrf.mxu0
        %v1509 = vadd.f32 0.0, %v1508
        %1510 = vmatmul.f32.gmra.mxu0 %v660
        %v1511 = vpop.f32.mrf.mxu0
        %v1512 = vadd.f32 0.0, %v1511
        %1513 = vmatmul.f32.gmra.mxu0 %v661
        %v1514 = vpop.f32.mrf.mxu0
        %v1515 = vadd.f32 0.0, %v1514
        %1516 = vmatmul.f32.gmra.mxu0 %v662
        %v1517 = vpop.f32.mrf.mxu0
        %v1518 = vadd.f32 0.0, %v1517
        %1519 = vmatmul.f32.gmra.mxu0 %v663
        %v1520 = vpop.f32.mrf.mxu0
        %v1521 = vadd.f32 0.0, %v1520
        %1522 = vmatmul.f32.gmra.mxu0 %v664
        %v1523 = vpop.f32.mrf.mxu0
        %v1524 = vadd.f32 0.0, %v1523
        %1525 = vmatmul.f32.gmra.mxu0 %v665
        %v1526 = vpop.f32.mrf.mxu0
        %v1527 = vadd.f32 0.0, %v1526
        %1528 = vmatmul.f32.gmra.mxu0 %v666
        %v1529 = vpop.f32.mrf.mxu0
        %v1530 = vadd.f32 0.0, %v1529
        %1531 = vmatmul.f32.gmra.mxu0 %v667
        %v1532 = vpop.f32.mrf.mxu0
        %v1533 = vadd.f32 0.0, %v1532
        %1534 = vmatmul.f32.gmra.mxu0 %v668
        %v1535 = vpop.f32.mrf.mxu0
        %v1536 = vadd.f32 0.0, %v1535
        %1537 = vmatmul.f32.gmra.mxu0 %v669
        %v1538 = vpop.f32.mrf.mxu0
        %v1539 = vadd.f32 0.0, %v1538
        %1540 = vmatmul.f32.gmra.mxu0 %v670
        %v1541 = vpop.f32.mrf.mxu0
        %v1542 = vadd.f32 0.0, %v1541
        %1543 = vmatmul.f32.gmra.mxu0 %v671
        %v1544 = vpop.f32.mrf.mxu0
        %v1545 = vadd.f32 0.0, %v1544
        %1546 = vmatmul.f32.gmra.mxu0 %v672
        %v1547 = vpop.f32.mrf.mxu0
        %v1548 = vadd.f32 0.0, %v1547
        %1549 = vdwg.mxu0
        %v1550 = vadd.f32 %v1388, %v1455
        %v1551 = vadd.f32 %v1389, %v1458
        %v1552 = vadd.f32 %v1390, %v1461
        %v1553 = vadd.f32 %v1391, %v1464
        %v1554 = vadd.f32 %v1392, %v1467
        %v1555 = vadd.f32 %v1393, %v1470
        %v1556 = vadd.f32 %v1394, %v1473
        %v1557 = vadd.f32 %v1395, %v1476
        %v1558 = vadd.f32 %v1396, %v1479
        %v1559 = vadd.f32 %v1397, %v1482
        %v1560 = vadd.f32 %v1398, %v1485
        %v1561 = vadd.f32 %v1399, %v1488
        %v1562 = vadd.f32 %v1400, %v1491
        %v1563 = vadd.f32 %v1401, %v1494
        %v1564 = vadd.f32 %v1402, %v1497
        %v1565 = vadd.f32 %v1403, %v1500
        %v1566 = vadd.f32 %v1404, %v1503
        %v1567 = vadd.f32 %v1405, %v1506
        %v1568 = vadd.f32 %v1406, %v1509
        %v1569 = vadd.f32 %v1407, %v1512
        %v1570 = vadd.f32 %v1408, %v1515
        %v1571 = vadd.f32 %v1409, %v1518
        %v1572 = vadd.f32 %v1410, %v1521
        %v1573 = vadd.f32 %v1411, %v1524
        %v1574 = vadd.f32 %v1412, %v1527
        %v1575 = vadd.f32 %v1413, %v1530
        %v1576 = vadd.f32 %v1414, %v1533
        %v1577 = vadd.f32 %v1415, %v1536
        %v1578 = vadd.f32 %v1416, %v1539
        %v1579 = vadd.f32 %v1417, %v1542
        %v1580 = vadd.f32 %v1418, %v1545
        %v1581 = vadd.f32 %v1419, %v1548
        %s1582 = scalar_lea.vmem [#allocation6], 768
        %v1583 = vld [vmem:[%s1582] sm:$0xff]
        %v1584 = vld [vmem:[%s1582 + $0x8] sm:$0xff]
        %v1585 = vld [vmem:[%s1582 + $0x10] sm:$0xff]
        %v1586 = vld [vmem:[%s1582 + $0x18] sm:$0xff]
        %v1587 = vld [vmem:[%s1582 + $0x20] sm:$0xff]
        %v1588 = vld [vmem:[%s1582 + $0x28] sm:$0xff]
        %v1589 = vld [vmem:[%s1582 + $0x30] sm:$0xff]
        %v1590 = vld [vmem:[%s1582 + $0x38] sm:$0xff]
        %v1591 = vld [vmem:[%s1582 + $0x40] sm:$0xff]
        %v1592 = vld [vmem:[%s1582 + $0x48] sm:$0xff]
        %v1593 = vld [vmem:[%s1582 + $0x50] sm:$0xff]
        %v1594 = vld [vmem:[%s1582 + $0x58] sm:$0xff]
        %v1595 = vld [vmem:[%s1582 + $0x60] sm:$0xff]
        %v1596 = vld [vmem:[%s1582 + $0x68] sm:$0xff]
        %v1597 = vld [vmem:[%s1582 + $0x70] sm:$0xff]
        %v1598 = vld [vmem:[%s1582 + $0x78] sm:$0xff]
        %1599 = vmatpush.msra.mxu0 %v1598
        %1600 = vmatpush.msra.mxu0 %v1597
        %1601 = vmatpush.msra.mxu0 %v1596
        %1602 = vmatpush.msra.mxu0 %v1595
        %1603 = vmatpush.msra.mxu0 %v1594
        %1604 = vmatpush.msra.mxu0 %v1593
        %1605 = vmatpush.msra.mxu0 %v1592
        %1606 = vmatpush.msra.mxu0 %v1591
        %1607 = vmatpush.msra.mxu0 %v1590
        %1608 = vmatpush.msra.mxu0 %v1589
        %1609 = vmatpush.msra.mxu0 %v1588
        %1610 = vmatpush.msra.mxu0 %v1587
        %1611 = vmatpush.msra.mxu0 %v1586
        %1612 = vmatpush.msra.mxu0 %v1585
        %1613 = vmatpush.msra.mxu0 %v1584
        %1614 = vmatpush.msra.mxu0 %v1583
        %1615 = vmatmul.f32.gmra.mxu0 %v526
        %v1616 = vpop.f32.mrf.mxu0
        %v1617 = vadd.f32 0.0, %v1616
        %1618 = vmatmul.f32.gmra.mxu0 %v527
        %v1619 = vpop.f32.mrf.mxu0
        %v1620 = vadd.f32 0.0, %v1619
        %1621 = vmatmul.f32.gmra.mxu0 %v528
        %v1622 = vpop.f32.mrf.mxu0
        %v1623 = vadd.f32 0.0, %v1622
        %1624 = vmatmul.f32.gmra.mxu0 %v529
        %v1625 = vpop.f32.mrf.mxu0
        %v1626 = vadd.f32 0.0, %v1625
        %1627 = vmatmul.f32.gmra.mxu0 %v530
        %v1628 = vpop.f32.mrf.mxu0
        %v1629 = vadd.f32 0.0, %v1628
        %1630 = vmatmul.f32.gmra.mxu0 %v531
        %v1631 = vpop.f32.mrf.mxu0
        %v1632 = vadd.f32 0.0, %v1631
        %1633 = vmatmul.f32.gmra.mxu0 %v532
        %v1634 = vpop.f32.mrf.mxu0
        %v1635 = vadd.f32 0.0, %v1634
        %1636 = vmatmul.f32.gmra.mxu0 %v533
        %v1637 = vpop.f32.mrf.mxu0
        %v1638 = vadd.f32 0.0, %v1637
        %1639 = vmatmul.f32.gmra.mxu0 %v534
        %v1640 = vpop.f32.mrf.mxu0
        %v1641 = vadd.f32 0.0, %v1640
        %1642 = vmatmul.f32.gmra.mxu0 %v535
        %v1643 = vpop.f32.mrf.mxu0
        %v1644 = vadd.f32 0.0, %v1643
        %1645 = vmatmul.f32.gmra.mxu0 %v536
        %v1646 = vpop.f32.mrf.mxu0
        %v1647 = vadd.f32 0.0, %v1646
        %1648 = vmatmul.f32.gmra.mxu0 %v537
        %v1649 = vpop.f32.mrf.mxu0
        %v1650 = vadd.f32 0.0, %v1649
        %1651 = vmatmul.f32.gmra.mxu0 %v538
        %v1652 = vpop.f32.mrf.mxu0
        %v1653 = vadd.f32 0.0, %v1652
        %1654 = vmatmul.f32.gmra.mxu0 %v539
        %v1655 = vpop.f32.mrf.mxu0
        %v1656 = vadd.f32 0.0, %v1655
        %1657 = vmatmul.f32.gmra.mxu0 %v540
        %v1658 = vpop.f32.mrf.mxu0
        %v1659 = vadd.f32 0.0, %v1658
        %1660 = vmatmul.f32.gmra.mxu0 %v541
        %v1661 = vpop.f32.mrf.mxu0
        %v1662 = vadd.f32 0.0, %v1661
        %1663 = vmatmul.f32.gmra.mxu0 %v542
        %v1664 = vpop.f32.mrf.mxu0
        %v1665 = vadd.f32 0.0, %v1664
        %1666 = vmatmul.f32.gmra.mxu0 %v543
        %v1667 = vpop.f32.mrf.mxu0
        %v1668 = vadd.f32 0.0, %v1667
        %1669 = vmatmul.f32.gmra.mxu0 %v544
        %v1670 = vpop.f32.mrf.mxu0
        %v1671 = vadd.f32 0.0, %v1670
        %1672 = vmatmul.f32.gmra.mxu0 %v545
        %v1673 = vpop.f32.mrf.mxu0
        %v1674 = vadd.f32 0.0, %v1673
        %1675 = vmatmul.f32.gmra.mxu0 %v546
        %v1676 = vpop.f32.mrf.mxu0
        %v1677 = vadd.f32 0.0, %v1676
        %1678 = vmatmul.f32.gmra.mxu0 %v547
        %v1679 = vpop.f32.mrf.mxu0
        %v1680 = vadd.f32 0.0, %v1679
        %1681 = vmatmul.f32.gmra.mxu0 %v548
        %v1682 = vpop.f32.mrf.mxu0
        %v1683 = vadd.f32 0.0, %v1682
        %1684 = vmatmul.f32.gmra.mxu0 %v549
        %v1685 = vpop.f32.mrf.mxu0
        %v1686 = vadd.f32 0.0, %v1685
        %1687 = vmatmul.f32.gmra.mxu0 %v550
        %v1688 = vpop.f32.mrf.mxu0
        %v1689 = vadd.f32 0.0, %v1688
        %1690 = vmatmul.f32.gmra.mxu0 %v551
        %v1691 = vpop.f32.mrf.mxu0
        %v1692 = vadd.f32 0.0, %v1691
        %1693 = vmatmul.f32.gmra.mxu0 %v552
        %v1694 = vpop.f32.mrf.mxu0
        %v1695 = vadd.f32 0.0, %v1694
        %1696 = vmatmul.f32.gmra.mxu0 %v553
        %v1697 = vpop.f32.mrf.mxu0
        %v1698 = vadd.f32 0.0, %v1697
        %1699 = vmatmul.f32.gmra.mxu0 %v554
        %v1700 = vpop.f32.mrf.mxu0
        %v1701 = vadd.f32 0.0, %v1700
        %1702 = vmatmul.f32.gmra.mxu0 %v555
        %v1703 = vpop.f32.mrf.mxu0
        %v1704 = vadd.f32 0.0, %v1703
        %1705 = vmatmul.f32.gmra.mxu0 %v556
        %v1706 = vpop.f32.mrf.mxu0
        %v1707 = vadd.f32 0.0, %v1706
        %1708 = vmatmul.f32.gmra.mxu0 %v557
        %v1709 = vpop.f32.mrf.mxu0
        %v1710 = vadd.f32 0.0, %v1709
        %1711 = vdwg.mxu0
        %v1712 = vadd.f32 %v1550, %v1617
        %v1713 = vadd.f32 %v1551, %v1620
        %v1714 = vadd.f32 %v1552, %v1623
        %v1715 = vadd.f32 %v1553, %v1626
        %v1716 = vadd.f32 %v1554, %v1629
        %v1717 = vadd.f32 %v1555, %v1632
        %v1718 = vadd.f32 %v1556, %v1635
        %v1719 = vadd.f32 %v1557, %v1638
        %v1720 = vadd.f32 %v1558, %v1641
        %v1721 = vadd.f32 %v1559, %v1644
        %v1722 = vadd.f32 %v1560, %v1647
        %v1723 = vadd.f32 %v1561, %v1650
        %v1724 = vadd.f32 %v1562, %v1653
        %v1725 = vadd.f32 %v1563, %v1656
        %v1726 = vadd.f32 %v1564, %v1659
        %v1727 = vadd.f32 %v1565, %v1662
        %v1728 = vadd.f32 %v1566, %v1665
        %v1729 = vadd.f32 %v1567, %v1668
        %v1730 = vadd.f32 %v1568, %v1671
        %v1731 = vadd.f32 %v1569, %v1674
        %v1732 = vadd.f32 %v1570, %v1677
        %v1733 = vadd.f32 %v1571, %v1680
        %v1734 = vadd.f32 %v1572, %v1683
        %v1735 = vadd.f32 %v1573, %v1686
        %v1736 = vadd.f32 %v1574, %v1689
        %v1737 = vadd.f32 %v1575, %v1692
        %v1738 = vadd.f32 %v1576, %v1695
        %v1739 = vadd.f32 %v1577, %v1698
        %v1740 = vadd.f32 %v1578, %v1701
        %v1741 = vadd.f32 %v1579, %v1704
        %v1742 = vadd.f32 %v1580, %v1707
        %v1743 = vadd.f32 %v1581, %v1710
        %s1744 = scalar_lea.vmem [#allocation6], 896
        %v1745 = vld [vmem:[%s1744] sm:$0xff]
        %v1746 = vld [vmem:[%s1744 + $0x8] sm:$0xff]
        %v1747 = vld [vmem:[%s1744 + $0x10] sm:$0xff]
        %v1748 = vld [vmem:[%s1744 + $0x18] sm:$0xff]
        %v1749 = vld [vmem:[%s1744 + $0x20] sm:$0xff]
        %v1750 = vld [vmem:[%s1744 + $0x28] sm:$0xff]
        %v1751 = vld [vmem:[%s1744 + $0x30] sm:$0xff]
        %v1752 = vld [vmem:[%s1744 + $0x38] sm:$0xff]
        %v1753 = vld [vmem:[%s1744 + $0x40] sm:$0xff]
        %v1754 = vld [vmem:[%s1744 + $0x48] sm:$0xff]
        %v1755 = vld [vmem:[%s1744 + $0x50] sm:$0xff]
        %v1756 = vld [vmem:[%s1744 + $0x58] sm:$0xff]
        %v1757 = vld [vmem:[%s1744 + $0x60] sm:$0xff]
        %v1758 = vld [vmem:[%s1744 + $0x68] sm:$0xff]
        %v1759 = vld [vmem:[%s1744 + $0x70] sm:$0xff]
        %v1760 = vld [vmem:[%s1744 + $0x78] sm:$0xff]
        %1761 = vmatpush.msra.mxu0 %v1760
        %1762 = vmatpush.msra.mxu0 %v1759
        %1763 = vmatpush.msra.mxu0 %v1758
        %1764 = vmatpush.msra.mxu0 %v1757
        %1765 = vmatpush.msra.mxu0 %v1756
        %1766 = vmatpush.msra.mxu0 %v1755
        %1767 = vmatpush.msra.mxu0 %v1754
        %1768 = vmatpush.msra.mxu0 %v1753
        %1769 = vmatpush.msra.mxu0 %v1752
        %1770 = vmatpush.msra.mxu0 %v1751
        %1771 = vmatpush.msra.mxu0 %v1750
        %1772 = vmatpush.msra.mxu0 %v1749
        %1773 = vmatpush.msra.mxu0 %v1748
        %1774 = vmatpush.msra.mxu0 %v1747
        %1775 = vmatpush.msra.mxu0 %v1746
        %1776 = vmatpush.msra.mxu0 %v1745
        %1777 = vmatmul.f32.gmra.mxu0 %v409
        %v1778 = vpop.f32.mrf.mxu0
        %v1779 = vadd.f32 0.0, %v1778
        %1780 = vmatmul.f32.gmra.mxu0 %v410
        %v1781 = vpop.f32.mrf.mxu0
        %v1782 = vadd.f32 0.0, %v1781
        %1783 = vmatmul.f32.gmra.mxu0 %v411
        %v1784 = vpop.f32.mrf.mxu0
        %v1785 = vadd.f32 0.0, %v1784
        %1786 = vmatmul.f32.gmra.mxu0 %v412
        %v1787 = vpop.f32.mrf.mxu0
        %v1788 = vadd.f32 0.0, %v1787
        %1789 = vmatmul.f32.gmra.mxu0 %v413
        %v1790 = vpop.f32.mrf.mxu0
        %v1791 = vadd.f32 0.0, %v1790
        %1792 = vmatmul.f32.gmra.mxu0 %v414
        %v1793 = vpop.f32.mrf.mxu0
        %v1794 = vadd.f32 0.0, %v1793
        %1795 = vmatmul.f32.gmra.mxu0 %v415
        %v1796 = vpop.f32.mrf.mxu0
        %v1797 = vadd.f32 0.0, %v1796
        %1798 = vmatmul.f32.gmra.mxu0 %v416
        %v1799 = vpop.f32.mrf.mxu0
        %v1800 = vadd.f32 0.0, %v1799
        %1801 = vmatmul.f32.gmra.mxu0 %v417
        %v1802 = vpop.f32.mrf.mxu0
        %v1803 = vadd.f32 0.0, %v1802
        %1804 = vmatmul.f32.gmra.mxu0 %v418
        %v1805 = vpop.f32.mrf.mxu0
        %v1806 = vadd.f32 0.0, %v1805
        %1807 = vmatmul.f32.gmra.mxu0 %v419
        %v1808 = vpop.f32.mrf.mxu0
        %v1809 = vadd.f32 0.0, %v1808
        %1810 = vmatmul.f32.gmra.mxu0 %v420
        %v1811 = vpop.f32.mrf.mxu0
        %v1812 = vadd.f32 0.0, %v1811
        %1813 = vmatmul.f32.gmra.mxu0 %v421
        %v1814 = vpop.f32.mrf.mxu0
        %v1815 = vadd.f32 0.0, %v1814
        %1816 = vmatmul.f32.gmra.mxu0 %v422
        %v1817 = vpop.f32.mrf.mxu0
        %v1818 = vadd.f32 0.0, %v1817
        %1819 = vmatmul.f32.gmra.mxu0 %v423
        %v1820 = vpop.f32.mrf.mxu0
        %v1821 = vadd.f32 0.0, %v1820
        %1822 = vmatmul.f32.gmra.mxu0 %v424
        %v1823 = vpop.f32.mrf.mxu0
        %v1824 = vadd.f32 0.0, %v1823
        %1825 = vmatmul.f32.gmra.mxu0 %v425
        %v1826 = vpop.f32.mrf.mxu0
        %v1827 = vadd.f32 0.0, %v1826
        %1828 = vmatmul.f32.gmra.mxu0 %v426
        %v1829 = vpop.f32.mrf.mxu0
        %v1830 = vadd.f32 0.0, %v1829
        %1831 = vmatmul.f32.gmra.mxu0 %v427
        %v1832 = vpop.f32.mrf.mxu0
        %v1833 = vadd.f32 0.0, %v1832
        %1834 = vmatmul.f32.gmra.mxu0 %v428
        %v1835 = vpop.f32.mrf.mxu0
        %v1836 = vadd.f32 0.0, %v1835
        %1837 = vmatmul.f32.gmra.mxu0 %v429
        %v1838 = vpop.f32.mrf.mxu0
        %v1839 = vadd.f32 0.0, %v1838
        %1840 = vmatmul.f32.gmra.mxu0 %v430
        %v1841 = vpop.f32.mrf.mxu0
        %v1842 = vadd.f32 0.0, %v1841
        %1843 = vmatmul.f32.gmra.mxu0 %v431
        %v1844 = vpop.f32.mrf.mxu0
        %v1845 = vadd.f32 0.0, %v1844
        %1846 = vmatmul.f32.gmra.mxu0 %v432
        %v1847 = vpop.f32.mrf.mxu0
        %v1848 = vadd.f32 0.0, %v1847
        %1849 = vmatmul.f32.gmra.mxu0 %v433
        %v1850 = vpop.f32.mrf.mxu0
        %v1851 = vadd.f32 0.0, %v1850
        %1852 = vmatmul.f32.gmra.mxu0 %v434
        %v1853 = vpop.f32.mrf.mxu0
        %v1854 = vadd.f32 0.0, %v1853
        %1855 = vmatmul.f32.gmra.mxu0 %v435
        %v1856 = vpop.f32.mrf.mxu0
        %v1857 = vadd.f32 0.0, %v1856
        %1858 = vmatmul.f32.gmra.mxu0 %v436
        %v1859 = vpop.f32.mrf.mxu0
        %v1860 = vadd.f32 0.0, %v1859
        %1861 = vmatmul.f32.gmra.mxu0 %v437
        %v1862 = vpop.f32.mrf.mxu0
        %v1863 = vadd.f32 0.0, %v1862
        %1864 = vmatmul.f32.gmra.mxu0 %v438
        %v1865 = vpop.f32.mrf.mxu0
        %v1866 = vadd.f32 0.0, %v1865
        %1867 = vmatmul.f32.gmra.mxu0 %v439
        %v1868 = vpop.f32.mrf.mxu0
        %v1869 = vadd.f32 0.0, %v1868
        %1870 = vmatmul.f32.gmra.mxu0 %v440
        %v1871 = vpop.f32.mrf.mxu0
        %v1872 = vadd.f32 0.0, %v1871
        %1873 = vdwg.mxu0
        %v1874 = vadd.f32 %v1712, %v1779
        %v1875 = vadd.f32 %v1713, %v1782
        %v1876 = vadd.f32 %v1714, %v1785
        %v1877 = vadd.f32 %v1715, %v1788
        %v1878 = vadd.f32 %v1716, %v1791
        %v1879 = vadd.f32 %v1717, %v1794
        %v1880 = vadd.f32 %v1718, %v1797
        %v1881 = vadd.f32 %v1719, %v1800
        %v1882 = vadd.f32 %v1720, %v1803
        %v1883 = vadd.f32 %v1721, %v1806
        %v1884 = vadd.f32 %v1722, %v1809
        %v1885 = vadd.f32 %v1723, %v1812
        %v1886 = vadd.f32 %v1724, %v1815
        %v1887 = vadd.f32 %v1725, %v1818
        %v1888 = vadd.f32 %v1726, %v1821
        %v1889 = vadd.f32 %v1727, %v1824
        %v1890 = vadd.f32 %v1728, %v1827
        %v1891 = vadd.f32 %v1729, %v1830
        %v1892 = vadd.f32 %v1730, %v1833
        %v1893 = vadd.f32 %v1731, %v1836
        %v1894 = vadd.f32 %v1732, %v1839
        %v1895 = vadd.f32 %v1733, %v1842
        %v1896 = vadd.f32 %v1734, %v1845
        %v1897 = vadd.f32 %v1735, %v1848
        %v1898 = vadd.f32 %v1736, %v1851
        %v1899 = vadd.f32 %v1737, %v1854
        %v1900 = vadd.f32 %v1738, %v1857
        %v1901 = vadd.f32 %v1739, %v1860
        %v1902 = vadd.f32 %v1740, %v1863
        %v1903 = vadd.f32 %v1741, %v1866
        %v1904 = vadd.f32 %v1742, %v1869
        %v1905 = vadd.f32 %v1743, %v1872
        %s1906 = scalar_lea.vmem [#allocation6], 1024
        %v1907 = vld [vmem:[%s1906] sm:$0xff]
        %v1908 = vld [vmem:[%s1906 + $0x8] sm:$0xff]
        %v1909 = vld [vmem:[%s1906 + $0x10] sm:$0xff]
        %v1910 = vld [vmem:[%s1906 + $0x18] sm:$0xff]
        %v1911 = vld [vmem:[%s1906 + $0x20] sm:$0xff]
        %v1912 = vld [vmem:[%s1906 + $0x28] sm:$0xff]
        %v1913 = vld [vmem:[%s1906 + $0x30] sm:$0xff]
        %v1914 = vld [vmem:[%s1906 + $0x38] sm:$0xff]
        %v1915 = vld [vmem:[%s1906 + $0x40] sm:$0xff]
        %v1916 = vld [vmem:[%s1906 + $0x48] sm:$0xff]
        %v1917 = vld [vmem:[%s1906 + $0x50] sm:$0xff]
        %v1918 = vld [vmem:[%s1906 + $0x58] sm:$0xff]
        %v1919 = vld [vmem:[%s1906 + $0x60] sm:$0xff]
        %v1920 = vld [vmem:[%s1906 + $0x68] sm:$0xff]
        %v1921 = vld [vmem:[%s1906 + $0x70] sm:$0xff]
        %v1922 = vld [vmem:[%s1906 + $0x78] sm:$0xff]
        %1923 = vmatpush.msra.mxu0 %v1922
        %1924 = vmatpush.msra.mxu0 %v1921
        %1925 = vmatpush.msra.mxu0 %v1920
        %1926 = vmatpush.msra.mxu0 %v1919
        %1927 = vmatpush.msra.mxu0 %v1918
        %1928 = vmatpush.msra.mxu0 %v1917
        %1929 = vmatpush.msra.mxu0 %v1916
        %1930 = vmatpush.msra.mxu0 %v1915
        %1931 = vmatpush.msra.mxu0 %v1914
        %1932 = vmatpush.msra.mxu0 %v1913
        %1933 = vmatpush.msra.mxu0 %v1912
        %1934 = vmatpush.msra.mxu0 %v1911
        %1935 = vmatpush.msra.mxu0 %v1910
        %1936 = vmatpush.msra.mxu0 %v1909
        %1937 = vmatpush.msra.mxu0 %v1908
        %1938 = vmatpush.msra.mxu0 %v1907
        %1939 = vmatmul.f32.gmra.mxu0 %v643
        %v1940 = vpop.f32.mrf.mxu0
        %v1941 = vadd.f32 0.0, %v1940
        %1942 = vmatmul.f32.gmra.mxu0 %v644
        %v1943 = vpop.f32.mrf.mxu0
        %v1944 = vadd.f32 0.0, %v1943
        %1945 = vmatmul.f32.gmra.mxu0 %v645
        %v1946 = vpop.f32.mrf.mxu0
        %v1947 = vadd.f32 0.0, %v1946
        %1948 = vmatmul.f32.gmra.mxu0 %v646
        %v1949 = vpop.f32.mrf.mxu0
        %v1950 = vadd.f32 0.0, %v1949
        %1951 = vmatmul.f32.gmra.mxu0 %v647
        %v1952 = vpop.f32.mrf.mxu0
        %v1953 = vadd.f32 0.0, %v1952
        %1954 = vmatmul.f32.gmra.mxu0 %v648
        %v1955 = vpop.f32.mrf.mxu0
        %v1956 = vadd.f32 0.0, %v1955
        %1957 = vmatmul.f32.gmra.mxu0 %v649
        %v1958 = vpop.f32.mrf.mxu0
        %v1959 = vadd.f32 0.0, %v1958
        %1960 = vmatmul.f32.gmra.mxu0 %v650
        %v1961 = vpop.f32.mrf.mxu0
        %v1962 = vadd.f32 0.0, %v1961
        %1963 = vmatmul.f32.gmra.mxu0 %v651
        %v1964 = vpop.f32.mrf.mxu0
        %v1965 = vadd.f32 0.0, %v1964
        %1966 = vmatmul.f32.gmra.mxu0 %v652
        %v1967 = vpop.f32.mrf.mxu0
        %v1968 = vadd.f32 0.0, %v1967
        %1969 = vmatmul.f32.gmra.mxu0 %v653
        %v1970 = vpop.f32.mrf.mxu0
        %v1971 = vadd.f32 0.0, %v1970
        %1972 = vmatmul.f32.gmra.mxu0 %v654
        %v1973 = vpop.f32.mrf.mxu0
        %v1974 = vadd.f32 0.0, %v1973
        %1975 = vmatmul.f32.gmra.mxu0 %v655
        %v1976 = vpop.f32.mrf.mxu0
        %v1977 = vadd.f32 0.0, %v1976
        %1978 = vmatmul.f32.gmra.mxu0 %v656
        %v1979 = vpop.f32.mrf.mxu0
        %v1980 = vadd.f32 0.0, %v1979
        %1981 = vmatmul.f32.gmra.mxu0 %v657
        %v1982 = vpop.f32.mrf.mxu0
        %v1983 = vadd.f32 0.0, %v1982
        %1984 = vmatmul.f32.gmra.mxu0 %v658
        %v1985 = vpop.f32.mrf.mxu0
        %v1986 = vadd.f32 0.0, %v1985
        %1987 = vmatmul.f32.gmra.mxu0 %v659
        %v1988 = vpop.f32.mrf.mxu0
        %v1989 = vadd.f32 0.0, %v1988
        %1990 = vmatmul.f32.gmra.mxu0 %v660
        %v1991 = vpop.f32.mrf.mxu0
        %v1992 = vadd.f32 0.0, %v1991
        %1993 = vmatmul.f32.gmra.mxu0 %v661
        %v1994 = vpop.f32.mrf.mxu0
        %v1995 = vadd.f32 0.0, %v1994
        %1996 = vmatmul.f32.gmra.mxu0 %v662
        %v1997 = vpop.f32.mrf.mxu0
        %v1998 = vadd.f32 0.0, %v1997
        %1999 = vmatmul.f32.gmra.mxu0 %v663
        %v2000 = vpop.f32.mrf.mxu0
        %v2001 = vadd.f32 0.0, %v2000
        %2002 = vmatmul.f32.gmra.mxu0 %v664
        %v2003 = vpop.f32.mrf.mxu0
        %v2004 = vadd.f32 0.0, %v2003
        %2005 = vmatmul.f32.gmra.mxu0 %v665
        %v2006 = vpop.f32.mrf.mxu0
        %v2007 = vadd.f32 0.0, %v2006
        %2008 = vmatmul.f32.gmra.mxu0 %v666
        %v2009 = vpop.f32.mrf.mxu0
        %v2010 = vadd.f32 0.0, %v2009
        %2011 = vmatmul.f32.gmra.mxu0 %v667
        %v2012 = vpop.f32.mrf.mxu0
        %v2013 = vadd.f32 0.0, %v2012
        %2014 = vmatmul.f32.gmra.mxu0 %v668
        %v2015 = vpop.f32.mrf.mxu0
        %v2016 = vadd.f32 0.0, %v2015
        %2017 = vmatmul.f32.gmra.mxu0 %v669
        %v2018 = vpop.f32.mrf.mxu0
        %v2019 = vadd.f32 0.0, %v2018
        %2020 = vmatmul.f32.gmra.mxu0 %v670
        %v2021 = vpop.f32.mrf.mxu0
        %v2022 = vadd.f32 0.0, %v2021
        %2023 = vmatmul.f32.gmra.mxu0 %v671
        %v2024 = vpop.f32.mrf.mxu0
        %v2025 = vadd.f32 0.0, %v2024
        %2026 = vmatmul.f32.gmra.mxu0 %v672
        %v2027 = vpop.f32.mrf.mxu0
        %v2028 = vadd.f32 0.0, %v2027
        %2029 = vmatmul.f32.gmra.mxu0 %v673
        %v2030 = vpop.f32.mrf.mxu0
        %v2031 = vadd.f32 0.0, %v2030
        %2032 = vmatmul.f32.gmra.mxu0 %v674
        %v2033 = vpop.f32.mrf.mxu0
        %v2034 = vadd.f32 0.0, %v2033
        %2035 = vdwg.mxu0
        %v2036 = vadd.f32 %v1874, %v1941
        %v2037 = vadd.f32 %v1875, %v1944
        %v2038 = vadd.f32 %v1876, %v1947
        %v2039 = vadd.f32 %v1877, %v1950
        %v2040 = vadd.f32 %v1878, %v1953
        %v2041 = vadd.f32 %v1879, %v1956
        %v2042 = vadd.f32 %v1880, %v1959
        %v2043 = vadd.f32 %v1881, %v1962
        %v2044 = vadd.f32 %v1882, %v1965
        %v2045 = vadd.f32 %v1883, %v1968
        %v2046 = vadd.f32 %v1884, %v1971
        %v2047 = vadd.f32 %v1885, %v1974
        %v2048 = vadd.f32 %v1886, %v1977
        %v2049 = vadd.f32 %v1887, %v1980
        %v2050 = vadd.f32 %v1888, %v1983
        %v2051 = vadd.f32 %v1889, %v1986
        %v2052 = vadd.f32 %v1890, %v1989
        %v2053 = vadd.f32 %v1891, %v1992
        %v2054 = vadd.f32 %v1892, %v1995
        %v2055 = vadd.f32 %v1893, %v1998
        %v2056 = vadd.f32 %v1894, %v2001
        %v2057 = vadd.f32 %v1895, %v2004
        %v2058 = vadd.f32 %v1896, %v2007
        %v2059 = vadd.f32 %v1897, %v2010
        %v2060 = vadd.f32 %v1898, %v2013
        %v2061 = vadd.f32 %v1899, %v2016
        %v2062 = vadd.f32 %v1900, %v2019
        %v2063 = vadd.f32 %v1901, %v2022
        %v2064 = vadd.f32 %v1902, %v2025
        %v2065 = vadd.f32 %v1903, %v2028
        %v2066 = vadd.f32 %v1904, %v2031
        %v2067 = vadd.f32 %v1905, %v2034
        %v2068 = vld [vmem:[%s2] sm:$0x1]
        %v2070 = vperm.slane %v2068, 0
        %v2072 = vmul.f32 %v2036, %v2070
        %v2073 = vmul.f32 %v2037, %v2070
        %v2074 = vmul.f32 %v2038, %v2070
        %v2075 = vmul.f32 %v2039, %v2070
        %v2076 = vmul.f32 %v2040, %v2070
        %v2077 = vmul.f32 %v2041, %v2070
        %v2078 = vmul.f32 %v2042, %v2070
        %v2079 = vmul.f32 %v2043, %v2070
        %v2080 = vmul.f32 %v2044, %v2070
        %v2081 = vmul.f32 %v2045, %v2070
        %v2082 = vmul.f32 %v2046, %v2070
        %v2083 = vmul.f32 %v2047, %v2070
        %v2084 = vmul.f32 %v2048, %v2070
        %v2085 = vmul.f32 %v2049, %v2070
        %v2086 = vmul.f32 %v2050, %v2070
        %v2087 = vmul.f32 %v2051, %v2070
        %v2088 = vmul.f32 %v2052, %v2070
        %v2089 = vmul.f32 %v2053, %v2070
        %v2090 = vmul.f32 %v2054, %v2070
        %v2091 = vmul.f32 %v2055, %v2070
        %v2092 = vmul.f32 %v2056, %v2070
        %v2093 = vmul.f32 %v2057, %v2070
        %v2094 = vmul.f32 %v2058, %v2070
        %v2095 = vmul.f32 %v2059, %v2070
        %v2096 = vmul.f32 %v2060, %v2070
        %v2097 = vmul.f32 %v2061, %v2070
        %v2098 = vmul.f32 %v2062, %v2070
        %v2099 = vmul.f32 %v2063, %v2070
        %v2100 = vmul.f32 %v2064, %v2070
        %v2101 = vmul.f32 %v2065, %v2070
        %v2102 = vmul.f32 %v2066, %v2070
        %v2103 = vmul.f32 %v2067, %v2070
        %v2104 = vld [vmem:[%s3] sm:$0x1]
        %v2106 = vperm.slane %v2104, 0
        %v2108 = vadd.f32 %v2072, %v2106
        %v2109 = vadd.f32 %v2073, %v2106
        %v2110 = vadd.f32 %v2074, %v2106
        %v2111 = vadd.f32 %v2075, %v2106
        %v2112 = vadd.f32 %v2076, %v2106
        %v2113 = vadd.f32 %v2077, %v2106
        %v2114 = vadd.f32 %v2078, %v2106
        %v2115 = vadd.f32 %v2079, %v2106
        %v2116 = vadd.f32 %v2080, %v2106
        %v2117 = vadd.f32 %v2081, %v2106
        %v2118 = vadd.f32 %v2082, %v2106
        %v2119 = vadd.f32 %v2083, %v2106
        %v2120 = vadd.f32 %v2084, %v2106
        %v2121 = vadd.f32 %v2085, %v2106
        %v2122 = vadd.f32 %v2086, %v2106
        %v2123 = vadd.f32 %v2087, %v2106
        %v2124 = vadd.f32 %v2088, %v2106
        %v2125 = vadd.f32 %v2089, %v2106
        %v2126 = vadd.f32 %v2090, %v2106
        %v2127 = vadd.f32 %v2091, %v2106
        %v2128 = vadd.f32 %v2092, %v2106
        %v2129 = vadd.f32 %v2093, %v2106
        %v2130 = vadd.f32 %v2094, %v2106
        %v2131 = vadd.f32 %v2095, %v2106
        %v2132 = vadd.f32 %v2096, %v2106
        %v2133 = vadd.f32 %v2097, %v2106
        %v2134 = vadd.f32 %v2098, %v2106
        %v2135 = vadd.f32 %v2099, %v2106
        %v2136 = vadd.f32 %v2100, %v2106
        %v2137 = vadd.f32 %v2101, %v2106
        %v2138 = vadd.f32 %v2102, %v2106
        %v2139 = vadd.f32 %v2103, %v2106
        %v2140 = vmax.f32 %v2108, 0.0
        %v2141 = vmax.f32 %v2109, 0.0
        %v2142 = vmax.f32 %v2110, 0.0
        %v2143 = vmax.f32 %v2111, 0.0
        %v2144 = vmax.f32 %v2112, 0.0
        %v2145 = vmax.f32 %v2113, 0.0
        %v2146 = vmax.f32 %v2114, 0.0
        %v2147 = vmax.f32 %v2115, 0.0
        %v2148 = vmax.f32 %v2116, 0.0
        %v2149 = vmax.f32 %v2117, 0.0
        %v2150 = vmax.f32 %v2118, 0.0
        %v2151 = vmax.f32 %v2119, 0.0
        %v2152 = vmax.f32 %v2120, 0.0
        %v2153 = vmax.f32 %v2121, 0.0
        %v2154 = vmax.f32 %v2122, 0.0
        %v2155 = vmax.f32 %v2123, 0.0
        %v2156 = vmax.f32 %v2124, 0.0
        %v2157 = vmax.f32 %v2125, 0.0
        %v2158 = vmax.f32 %v2126, 0.0
        %v2159 = vmax.f32 %v2127, 0.0
        %v2160 = vmax.f32 %v2128, 0.0
        %v2161 = vmax.f32 %v2129, 0.0
        %v2162 = vmax.f32 %v2130, 0.0
        %v2163 = vmax.f32 %v2131, 0.0
        %v2164 = vmax.f32 %v2132, 0.0
        %v2165 = vmax.f32 %v2133, 0.0
        %v2166 = vmax.f32 %v2134, 0.0
        %v2167 = vmax.f32 %v2135, 0.0
        %v2168 = vmax.f32 %v2136, 0.0
        %v2169 = vmax.f32 %v2137, 0.0
        %v2170 = vmax.f32 %v2138, 0.0
        %v2171 = vmax.f32 %v2139, 0.0
        %2172 = vst [vmem:[%s372] sm:$0xff] %v2140
        %2173 = vst [vmem:[%s372 + $0x8] sm:$0xff] %v2141
        %2174 = vst [vmem:[%s372 + $0x10] sm:$0xff] %v2142
        %2175 = vst [vmem:[%s372 + $0x18] sm:$0xff] %v2143
        %2176 = vst [vmem:[%s372 + $0x20] sm:$0xff] %v2144
        %2177 = vst [vmem:[%s372 + $0x28] sm:$0xff] %v2145
        %2178 = vst [vmem:[%s372 + $0x30] sm:$0xff] %v2146
        %2179 = vst [vmem:[%s372 + $0x38] sm:$0xff] %v2147
        %2180 = vst [vmem:[%s372 + $0x40] sm:$0xff] %v2148
        %2181 = vst [vmem:[%s372 + $0x48] sm:$0xff] %v2149
        %2182 = vst [vmem:[%s372 + $0x50] sm:$0xff] %v2150
        %2183 = vst [vmem:[%s372 + $0x58] sm:$0xff] %v2151
        %2184 = vst [vmem:[%s372 + $0x60] sm:$0xff] %v2152
        %2185 = vst [vmem:[%s372 + $0x68] sm:$0xff] %v2153
        %2186 = vst [vmem:[%s372 + $0x70] sm:$0xff] %v2154
        %2187 = vst [vmem:[%s372 + $0x78] sm:$0xff] %v2155
        %2188 = vst [vmem:[%s372 + $0x80] sm:$0xff] %v2156
        %2189 = vst [vmem:[%s372 + $0x88] sm:$0xff] %v2157
        %2190 = vst [vmem:[%s372 + $0x90] sm:$0xff] %v2158
        %2191 = vst [vmem:[%s372 + $0x98] sm:$0xff] %v2159
        %2192 = vst [vmem:[%s372 + $0xa0] sm:$0xff] %v2160
        %2193 = vst [vmem:[%s372 + $0xa8] sm:$0xff] %v2161
        %2194 = vst [vmem:[%s372 + $0xb0] sm:$0xff] %v2162
        %2195 = vst [vmem:[%s372 + $0xb8] sm:$0xff] %v2163
        %2196 = vst [vmem:[%s372 + $0xc0] sm:$0xff] %v2164
        %2197 = vst [vmem:[%s372 + $0xc8] sm:$0xff] %v2165
        %2198 = vst [vmem:[%s372 + $0xd0] sm:$0xff] %v2166
        %2199 = vst [vmem:[%s372 + $0xd8] sm:$0xff] %v2167
        %2200 = vst [vmem:[%s372 + $0xe0] sm:$0xff] %v2168
        %2201 = vst [vmem:[%s372 + $0xe8] sm:$0xff] %v2169
        %2202 = vst [vmem:[%s372 + $0xf0] sm:$0xff] %v2170
        %2203 = vst [vmem:[%s372 + $0xf8] sm:$0xff] %v2171
        %v2204 = vld [vmem:[#allocation2] sm:$0xff]
        %v2205 = vld [vmem:[#allocation2 + $0x8] sm:$0xff]
        %v2206 = vld [vmem:[#allocation2 + $0x10] sm:$0xff]
        %v2207 = vld [vmem:[#allocation2 + $0x18] sm:$0xff]
        %v2208 = vld [vmem:[#allocation2 + $0x20] sm:$0xff]
        %v2209 = vld [vmem:[#allocation2 + $0x28] sm:$0xff]
        %v2210 = vld [vmem:[#allocation2 + $0x30] sm:$0xff]
        %v2211 = vld [vmem:[#allocation2 + $0x38] sm:$0xff]
        %v2212 = vld [vmem:[#allocation2 + $0x40] sm:$0xff]
        %v2213 = vld [vmem:[#allocation2 + $0x48] sm:$0xff]
        %v2214 = vld [vmem:[#allocation2 + $0x50] sm:$0xff]
        %v2215 = vld [vmem:[#allocation2 + $0x58] sm:$0xff]
        %v2216 = vld [vmem:[#allocation2 + $0x60] sm:$0xff]
        %v2217 = vld [vmem:[#allocation2 + $0x68] sm:$0xff]
        %v2218 = vld [vmem:[#allocation2 + $0x70] sm:$0xff]
        %v2219 = vld [vmem:[#allocation2 + $0x78] sm:$0xff]
        %v2220 = vld [vmem:[#allocation2 + $0x80] sm:$0xff]
        %v2221 = vld [vmem:[#allocation2 + $0x88] sm:$0xff]
        %v2222 = vld [vmem:[#allocation2 + $0x90] sm:$0xff]
        %v2223 = vld [vmem:[#allocation2 + $0x98] sm:$0xff]
        %v2224 = vld [vmem:[#allocation2 + $0xa0] sm:$0xff]
        %v2225 = vld [vmem:[#allocation2 + $0xa8] sm:$0xff]
        %v2226 = vld [vmem:[#allocation2 + $0xb0] sm:$0xff]
        %v2227 = vld [vmem:[#allocation2 + $0xb8] sm:$0xff]
        %v2228 = vld [vmem:[#allocation2 + $0xc0] sm:$0xff]
        %v2229 = vld [vmem:[#allocation2 + $0xc8] sm:$0xff]
        %v2230 = vld [vmem:[#allocation2 + $0xd0] sm:$0xff]
        %v2231 = vld [vmem:[#allocation2 + $0xd8] sm:$0xff]
        %v2232 = vld [vmem:[#allocation2 + $0xe0] sm:$0xff]
        %v2233 = vld [vmem:[#allocation2 + $0xe8] sm:$0xff]
        %v2234 = vld [vmem:[#allocation2 + $0xf0] sm:$0xff]
        %v2235 = vld [vmem:[#allocation2 + $0xf8] sm:$0xff]
        %v2236 = vld [vmem:[#allocation2 + $0x100] sm:$0xff]
        %v2237 = vld [vmem:[#allocation2 + $0x108] sm:$0xff]
        %v2238 = vld [vmem:[#allocation2 + $0x110] sm:$0xff]
        %v2239 = vld [vmem:[#allocation2 + $0x118] sm:$0xff]
        %v2240 = vrot.slane %v2204, 7
        %v2241 = vrot.slane %v2206, 7
        %v2242 = vrot.slane %v2208, 7
        %v2243 = vrot.slane %v2210, 7
        %v2244 = vrot.slane %v2212, 7
        %v2245 = vrot.slane %v2214, 7
        %v2246 = vrot.slane %v2216, 7
        %v2247 = vrot.slane %v2218, 7
        %v2248 = vrot.slane %v2220, 7
        %v2249 = vrot.slane %v2222, 7
        %v2250 = vrot.slane %v2224, 7
        %v2251 = vrot.slane %v2226, 7
        %v2252 = vrot.slane %v2228, 7
        %v2253 = vrot.slane %v2230, 7
        %v2254 = vrot.slane %v2232, 7
        %v2255 = vrot.slane %v2234, 7
        %v2256 = vrot.slane %v2236, 7
        %v2257 = vrot.slane %v2238, 7
        %v2258 = vrot.slane %v2205, 7
        %v2259 = vrot.slane %v2207, 7
        %v2260 = vrot.slane %v2209, 7
        %v2261 = vrot.slane %v2211, 7
        %v2262 = vrot.slane %v2213, 7
        %v2263 = vrot.slane %v2215, 7
        %v2264 = vrot.slane %v2217, 7
        %v2265 = vrot.slane %v2219, 7
        %v2266 = vrot.slane %v2221, 7
        %v2267 = vrot.slane %v2223, 7
        %v2268 = vrot.slane %v2225, 7
        %v2269 = vrot.slane %v2227, 7
        %v2270 = vrot.slane %v2229, 7
        %v2271 = vrot.slane %v2231, 7
        %v2272 = vrot.slane %v2233, 7
        %v2273 = vrot.slane %v2235, 7
        %v2274 = vrot.slane %v2237, 7
        %v2275 = vrot.slane %v2239, 7
        %v2276 = vsel %vm477, %v2240, %v2258
        %v2277 = vsel %vm477, %v2241, %v2259
        %v2278 = vsel %vm477, %v2242, %v2260
        %v2279 = vsel %vm477, %v2243, %v2261
        %v2280 = vsel %vm477, %v2244, %v2262
        %v2281 = vsel %vm477, %v2245, %v2263
        %v2282 = vsel %vm477, %v2246, %v2264
        %v2283 = vsel %vm477, %v2247, %v2265
        %v2284 = vsel %vm477, %v2248, %v2266
        %v2285 = vsel %vm477, %v2249, %v2267
        %v2286 = vsel %vm477, %v2250, %v2268
        %v2287 = vsel %vm477, %v2251, %v2269
        %v2288 = vsel %vm477, %v2252, %v2270
        %v2289 = vsel %vm477, %v2253, %v2271
        %v2290 = vsel %vm477, %v2254, %v2272
        %v2291 = vsel %vm477, %v2255, %v2273
        %v2292 = vsel %vm477, %v2256, %v2274
        %v2293 = vsel %vm477, %v2257, %v2275
        %v2294 = vsel %vm477, %v2258, %v2240
        %v2295 = vsel %vm477, %v2259, %v2241
        %v2296 = vsel %vm477, %v2260, %v2242
        %v2297 = vsel %vm477, %v2261, %v2243
        %v2298 = vsel %vm477, %v2262, %v2244
        %v2299 = vsel %vm477, %v2263, %v2245
        %v2300 = vsel %vm477, %v2264, %v2246
        %v2301 = vsel %vm477, %v2265, %v2247
        %v2302 = vsel %vm477, %v2266, %v2248
        %v2303 = vsel %vm477, %v2267, %v2249
        %v2304 = vsel %vm477, %v2268, %v2250
        %v2305 = vsel %vm477, %v2269, %v2251
        %v2306 = vsel %vm477, %v2270, %v2252
        %v2307 = vsel %vm477, %v2271, %v2253
        %v2308 = vsel %vm477, %v2272, %v2254
        %v2309 = vsel %vm477, %v2273, %v2255
        %v2310 = vsel %vm477, %v2274, %v2256
        %v2311 = vsel %vm477, %v2275, %v2257
        %v2312 = vsel %vm520, %v2294, 0.0
        %v2313 = vsel %vm521, %v2276, 0.0
        %v2314 = vsel %vm520, %v2295, 0.0
        %v2315 = vsel %vm521, %v2277, 0.0
        %v2316 = vsel %vm520, %v2296, 0.0
        %v2317 = vsel %vm521, %v2278, 0.0
        %v2318 = vsel %vm520, %v2297, 0.0
        %v2319 = vsel %vm521, %v2279, 0.0
        %v2320 = vsel %vm520, %v2298, 0.0
        %v2321 = vsel %vm521, %v2280, 0.0
        %v2322 = vsel %vm520, %v2299, 0.0
        %v2323 = vsel %vm521, %v2281, 0.0
        %v2324 = vsel %vm520, %v2300, 0.0
        %v2325 = vsel %vm521, %v2282, 0.0
        %v2326 = vsel %vm520, %v2301, 0.0
        %v2327 = vsel %vm521, %v2283, 0.0
        %v2328 = vsel %vm520, %v2302, 0.0
        %v2329 = vsel %vm521, %v2284, 0.0
        %v2330 = vsel %vm520, %v2303, 0.0
        %v2331 = vsel %vm521, %v2285, 0.0
        %v2332 = vsel %vm520, %v2304, 0.0
        %v2333 = vsel %vm521, %v2286, 0.0
        %v2334 = vsel %vm520, %v2305, 0.0
        %v2335 = vsel %vm521, %v2287, 0.0
        %v2336 = vsel %vm520, %v2306, 0.0
        %v2337 = vsel %vm521, %v2288, 0.0
        %v2338 = vsel %vm520, %v2307, 0.0
        %v2339 = vsel %vm521, %v2289, 0.0
        %v2340 = vsel %vm520, %v2308, 0.0
        %v2341 = vsel %vm521, %v2290, 0.0
        %v2342 = vsel %vm520, %v2309, 0.0
        %v2343 = vsel %vm521, %v2291, 0.0
        %v2344 = vsel %vm520, %v2310, 0.0
        %v2345 = vsel %vm521, %v2292, 0.0
        %v2346 = vsel %vm520, %v2311, 0.0
        %v2347 = vsel %vm521, %v2293, 0.0
        %v2348 = vrot.slane %v2204, 1
        %v2349 = vrot.slane %v2206, 1
        %v2350 = vrot.slane %v2208, 1
        %v2351 = vrot.slane %v2210, 1
        %v2352 = vrot.slane %v2212, 1
        %v2353 = vrot.slane %v2214, 1
        %v2354 = vrot.slane %v2216, 1
        %v2355 = vrot.slane %v2218, 1
        %v2356 = vrot.slane %v2220, 1
        %v2357 = vrot.slane %v2222, 1
        %v2358 = vrot.slane %v2224, 1
        %v2359 = vrot.slane %v2226, 1
        %v2360 = vrot.slane %v2228, 1
        %v2361 = vrot.slane %v2230, 1
        %v2362 = vrot.slane %v2232, 1
        %v2363 = vrot.slane %v2234, 1
        %v2364 = vrot.slane %v2236, 1
        %v2365 = vrot.slane %v2238, 1
        %v2366 = vrot.slane %v2205, 1
        %v2367 = vrot.slane %v2207, 1
        %v2368 = vrot.slane %v2209, 1
        %v2369 = vrot.slane %v2211, 1
        %v2370 = vrot.slane %v2213, 1
        %v2371 = vrot.slane %v2215, 1
        %v2372 = vrot.slane %v2217, 1
        %v2373 = vrot.slane %v2219, 1
        %v2374 = vrot.slane %v2221, 1
        %v2375 = vrot.slane %v2223, 1
        %v2376 = vrot.slane %v2225, 1
        %v2377 = vrot.slane %v2227, 1
        %v2378 = vrot.slane %v2229, 1
        %v2379 = vrot.slane %v2231, 1
        %v2380 = vrot.slane %v2233, 1
        %v2381 = vrot.slane %v2235, 1
        %v2382 = vrot.slane %v2237, 1
        %v2383 = vrot.slane %v2239, 1
        %v2384 = vsel %vm594, %v2348, %v2366
        %v2385 = vsel %vm594, %v2349, %v2367
        %v2386 = vsel %vm594, %v2350, %v2368
        %v2387 = vsel %vm594, %v2351, %v2369
        %v2388 = vsel %vm594, %v2352, %v2370
        %v2389 = vsel %vm594, %v2353, %v2371
        %v2390 = vsel %vm594, %v2354, %v2372
        %v2391 = vsel %vm594, %v2355, %v2373
        %v2392 = vsel %vm594, %v2356, %v2374
        %v2393 = vsel %vm594, %v2357, %v2375
        %v2394 = vsel %vm594, %v2358, %v2376
        %v2395 = vsel %vm594, %v2359, %v2377
        %v2396 = vsel %vm594, %v2360, %v2378
        %v2397 = vsel %vm594, %v2361, %v2379
        %v2398 = vsel %vm594, %v2362, %v2380
        %v2399 = vsel %vm594, %v2363, %v2381
        %v2400 = vsel %vm594, %v2364, %v2382
        %v2401 = vsel %vm594, %v2365, %v2383
        %v2402 = vsel %vm594, %v2366, %v2348
        %v2403 = vsel %vm594, %v2367, %v2349
        %v2404 = vsel %vm594, %v2368, %v2350
        %v2405 = vsel %vm594, %v2369, %v2351
        %v2406 = vsel %vm594, %v2370, %v2352
        %v2407 = vsel %vm594, %v2371, %v2353
        %v2408 = vsel %vm594, %v2372, %v2354
        %v2409 = vsel %vm594, %v2373, %v2355
        %v2410 = vsel %vm594, %v2374, %v2356
        %v2411 = vsel %vm594, %v2375, %v2357
        %v2412 = vsel %vm594, %v2376, %v2358
        %v2413 = vsel %vm594, %v2377, %v2359
        %v2414 = vsel %vm594, %v2378, %v2360
        %v2415 = vsel %vm594, %v2379, %v2361
        %v2416 = vsel %vm594, %v2380, %v2362
        %v2417 = vsel %vm594, %v2381, %v2363
        %v2418 = vsel %vm594, %v2382, %v2364
        %v2419 = vsel %vm594, %v2383, %v2365
        %v2420 = vsel %vm637, %v2384, 0.0
        %v2421 = vsel %vm638, %v2402, 0.0
        %v2422 = vsel %vm637, %v2385, 0.0
        %v2423 = vsel %vm638, %v2403, 0.0
        %v2424 = vsel %vm637, %v2386, 0.0
        %v2425 = vsel %vm638, %v2404, 0.0
        %v2426 = vsel %vm637, %v2387, 0.0
        %v2427 = vsel %vm638, %v2405, 0.0
        %v2428 = vsel %vm637, %v2388, 0.0
        %v2429 = vsel %vm638, %v2406, 0.0
        %v2430 = vsel %vm637, %v2389, 0.0
        %v2431 = vsel %vm638, %v2407, 0.0
        %v2432 = vsel %vm637, %v2390, 0.0
        %v2433 = vsel %vm638, %v2408, 0.0
        %v2434 = vsel %vm637, %v2391, 0.0
        %v2435 = vsel %vm638, %v2409, 0.0
        %v2436 = vsel %vm637, %v2392, 0.0
        %v2437 = vsel %vm638, %v2410, 0.0
        %v2438 = vsel %vm637, %v2393, 0.0
        %v2439 = vsel %vm638, %v2411, 0.0
        %v2440 = vsel %vm637, %v2394, 0.0
        %v2441 = vsel %vm638, %v2412, 0.0
        %v2442 = vsel %vm637, %v2395, 0.0
        %v2443 = vsel %vm638, %v2413, 0.0
        %v2444 = vsel %vm637, %v2396, 0.0
        %v2445 = vsel %vm638, %v2414, 0.0
        %v2446 = vsel %vm637, %v2397, 0.0
        %v2447 = vsel %vm638, %v2415, 0.0
        %v2448 = vsel %vm637, %v2398, 0.0
        %v2449 = vsel %vm638, %v2416, 0.0
        %v2450 = vsel %vm637, %v2399, 0.0
        %v2451 = vsel %vm638, %v2417, 0.0
        %v2452 = vsel %vm637, %v2400, 0.0
        %v2453 = vsel %vm638, %v2418, 0.0
        %v2454 = vsel %vm637, %v2401, 0.0
        %v2455 = vsel %vm638, %v2419, 0.0
        %v2456 = vld [vmem:[#allocation8] sm:$0xff]
        %v2457 = vld [vmem:[#allocation8 + $0x8] sm:$0xff]
        %v2458 = vld [vmem:[#allocation8 + $0x10] sm:$0xff]
        %v2459 = vld [vmem:[#allocation8 + $0x18] sm:$0xff]
        %v2460 = vld [vmem:[#allocation8 + $0x20] sm:$0xff]
        %v2461 = vld [vmem:[#allocation8 + $0x28] sm:$0xff]
        %v2462 = vld [vmem:[#allocation8 + $0x30] sm:$0xff]
        %v2463 = vld [vmem:[#allocation8 + $0x38] sm:$0xff]
        %v2464 = vld [vmem:[#allocation8 + $0x40] sm:$0xff]
        %v2465 = vld [vmem:[#allocation8 + $0x48] sm:$0xff]
        %v2466 = vld [vmem:[#allocation8 + $0x50] sm:$0xff]
        %v2467 = vld [vmem:[#allocation8 + $0x58] sm:$0xff]
        %v2468 = vld [vmem:[#allocation8 + $0x60] sm:$0xff]
        %v2469 = vld [vmem:[#allocation8 + $0x68] sm:$0xff]
        %v2470 = vld [vmem:[#allocation8 + $0x70] sm:$0xff]
        %v2471 = vld [vmem:[#allocation8 + $0x78] sm:$0xff]
        %s2472 = scalar_lea.vmem [#allocation8], 128
        %v2473 = vld [vmem:[%s2472] sm:$0xff]
        %v2474 = vld [vmem:[%s2472 + $0x8] sm:$0xff]
        %v2475 = vld [vmem:[%s2472 + $0x10] sm:$0xff]
        %v2476 = vld [vmem:[%s2472 + $0x18] sm:$0xff]
        %v2477 = vld [vmem:[%s2472 + $0x20] sm:$0xff]
        %v2478 = vld [vmem:[%s2472 + $0x28] sm:$0xff]
        %v2479 = vld [vmem:[%s2472 + $0x30] sm:$0xff]
        %v2480 = vld [vmem:[%s2472 + $0x38] sm:$0xff]
        %v2481 = vld [vmem:[%s2472 + $0x40] sm:$0xff]
        %v2482 = vld [vmem:[%s2472 + $0x48] sm:$0xff]
        %v2483 = vld [vmem:[%s2472 + $0x50] sm:$0xff]
        %v2484 = vld [vmem:[%s2472 + $0x58] sm:$0xff]
        %v2485 = vld [vmem:[%s2472 + $0x60] sm:$0xff]
        %v2486 = vld [vmem:[%s2472 + $0x68] sm:$0xff]
        %v2487 = vld [vmem:[%s2472 + $0x70] sm:$0xff]
        %v2488 = vld [vmem:[%s2472 + $0x78] sm:$0xff]
        %2489 = vmatpush.msra.mxu0 %v2488
        %2490 = vmatpush.msra.mxu0 %v2487
        %2491 = vmatpush.msra.mxu0 %v2486
        %2492 = vmatpush.msra.mxu0 %v2485
        %2493 = vmatpush.msra.mxu0 %v2484
        %2494 = vmatpush.msra.mxu0 %v2483
        %2495 = vmatpush.msra.mxu0 %v2482
        %2496 = vmatpush.msra.mxu0 %v2481
        %2497 = vmatpush.msra.mxu0 %v2480
        %2498 = vmatpush.msra.mxu0 %v2479
        %2499 = vmatpush.msra.mxu0 %v2478
        %2500 = vmatpush.msra.mxu0 %v2477
        %2501 = vmatpush.msra.mxu0 %v2476
        %2502 = vmatpush.msra.mxu0 %v2475
        %2503 = vmatpush.msra.mxu0 %v2474
        %2504 = vmatpush.msra.mxu0 %v2473
        %2505 = vmatmul.f32.gmra.mxu0 %v2204
        %v2506 = vpop.f32.mrf.mxu0
        %v2507 = vadd.f32 0.0, %v2506
        %2508 = vmatmul.f32.gmra.mxu0 %v2205
        %v2509 = vpop.f32.mrf.mxu0
        %v2510 = vadd.f32 0.0, %v2509
        %2511 = vmatmul.f32.gmra.mxu0 %v2206
        %v2512 = vpop.f32.mrf.mxu0
        %v2513 = vadd.f32 0.0, %v2512
        %2514 = vmatmul.f32.gmra.mxu0 %v2207
        %v2515 = vpop.f32.mrf.mxu0
        %v2516 = vadd.f32 0.0, %v2515
        %2517 = vmatmul.f32.gmra.mxu0 %v2208
        %v2518 = vpop.f32.mrf.mxu0
        %v2519 = vadd.f32 0.0, %v2518
        %2520 = vmatmul.f32.gmra.mxu0 %v2209
        %v2521 = vpop.f32.mrf.mxu0
        %v2522 = vadd.f32 0.0, %v2521
        %2523 = vmatmul.f32.gmra.mxu0 %v2210
        %v2524 = vpop.f32.mrf.mxu0
        %v2525 = vadd.f32 0.0, %v2524
        %2526 = vmatmul.f32.gmra.mxu0 %v2211
        %v2527 = vpop.f32.mrf.mxu0
        %v2528 = vadd.f32 0.0, %v2527
        %2529 = vmatmul.f32.gmra.mxu0 %v2212
        %v2530 = vpop.f32.mrf.mxu0
        %v2531 = vadd.f32 0.0, %v2530
        %2532 = vmatmul.f32.gmra.mxu0 %v2213
        %v2533 = vpop.f32.mrf.mxu0
        %v2534 = vadd.f32 0.0, %v2533
        %2535 = vmatmul.f32.gmra.mxu0 %v2214
        %v2536 = vpop.f32.mrf.mxu0
        %v2537 = vadd.f32 0.0, %v2536
        %2538 = vmatmul.f32.gmra.mxu0 %v2215
        %v2539 = vpop.f32.mrf.mxu0
        %v2540 = vadd.f32 0.0, %v2539
        %2541 = vmatmul.f32.gmra.mxu0 %v2216
        %v2542 = vpop.f32.mrf.mxu0
        %v2543 = vadd.f32 0.0, %v2542
        %2544 = vmatmul.f32.gmra.mxu0 %v2217
        %v2545 = vpop.f32.mrf.mxu0
        %v2546 = vadd.f32 0.0, %v2545
        %2547 = vmatmul.f32.gmra.mxu0 %v2218
        %v2548 = vpop.f32.mrf.mxu0
        %v2549 = vadd.f32 0.0, %v2548
        %2550 = vmatmul.f32.gmra.mxu0 %v2219
        %v2551 = vpop.f32.mrf.mxu0
        %v2552 = vadd.f32 0.0, %v2551
        %2553 = vmatmul.f32.gmra.mxu0 %v2220
        %v2554 = vpop.f32.mrf.mxu0
        %v2555 = vadd.f32 0.0, %v2554
        %2556 = vmatmul.f32.gmra.mxu0 %v2221
        %v2557 = vpop.f32.mrf.mxu0
        %v2558 = vadd.f32 0.0, %v2557
        %2559 = vmatmul.f32.gmra.mxu0 %v2222
        %v2560 = vpop.f32.mrf.mxu0
        %v2561 = vadd.f32 0.0, %v2560
        %2562 = vmatmul.f32.gmra.mxu0 %v2223
        %v2563 = vpop.f32.mrf.mxu0
        %v2564 = vadd.f32 0.0, %v2563
        %2565 = vmatmul.f32.gmra.mxu0 %v2224
        %v2566 = vpop.f32.mrf.mxu0
        %v2567 = vadd.f32 0.0, %v2566
        %2568 = vmatmul.f32.gmra.mxu0 %v2225
        %v2569 = vpop.f32.mrf.mxu0
        %v2570 = vadd.f32 0.0, %v2569
        %2571 = vmatmul.f32.gmra.mxu0 %v2226
        %v2572 = vpop.f32.mrf.mxu0
        %v2573 = vadd.f32 0.0, %v2572
        %2574 = vmatmul.f32.gmra.mxu0 %v2227
        %v2575 = vpop.f32.mrf.mxu0
        %v2576 = vadd.f32 0.0, %v2575
        %2577 = vmatmul.f32.gmra.mxu0 %v2228
        %v2578 = vpop.f32.mrf.mxu0
        %v2579 = vadd.f32 0.0, %v2578
        %2580 = vmatmul.f32.gmra.mxu0 %v2229
        %v2581 = vpop.f32.mrf.mxu0
        %v2582 = vadd.f32 0.0, %v2581
        %2583 = vmatmul.f32.gmra.mxu0 %v2230
        %v2584 = vpop.f32.mrf.mxu0
        %v2585 = vadd.f32 0.0, %v2584
        %2586 = vmatmul.f32.gmra.mxu0 %v2231
        %v2587 = vpop.f32.mrf.mxu0
        %v2588 = vadd.f32 0.0, %v2587
        %2589 = vmatmul.f32.gmra.mxu0 %v2232
        %v2590 = vpop.f32.mrf.mxu0
        %v2591 = vadd.f32 0.0, %v2590
        %2592 = vmatmul.f32.gmra.mxu0 %v2233
        %v2593 = vpop.f32.mrf.mxu0
        %v2594 = vadd.f32 0.0, %v2593
        %2595 = vmatmul.f32.gmra.mxu0 %v2234
        %v2596 = vpop.f32.mrf.mxu0
        %v2597 = vadd.f32 0.0, %v2596
        %2598 = vmatmul.f32.gmra.mxu0 %v2235
        %v2599 = vpop.f32.mrf.mxu0
        %v2600 = vadd.f32 0.0, %v2599
        %2601 = vdwg.mxu0
        %2602 = vmatpush.msra.mxu0 %v2471
        %2603 = vmatpush.msra.mxu0 %v2470
        %2604 = vmatpush.msra.mxu0 %v2469
        %2605 = vmatpush.msra.mxu0 %v2468
        %2606 = vmatpush.msra.mxu0 %v2467
        %2607 = vmatpush.msra.mxu0 %v2466
        %2608 = vmatpush.msra.mxu0 %v2465
        %2609 = vmatpush.msra.mxu0 %v2464
        %2610 = vmatpush.msra.mxu0 %v2463
        %2611 = vmatpush.msra.mxu0 %v2462
        %2612 = vmatpush.msra.mxu0 %v2461
        %2613 = vmatpush.msra.mxu0 %v2460
        %2614 = vmatpush.msra.mxu0 %v2459
        %2615 = vmatpush.msra.mxu0 %v2458
        %2616 = vmatpush.msra.mxu0 %v2457
        %2617 = vmatpush.msra.mxu0 %v2456
        %2618 = vmatmul.f32.gmra.mxu0 %v2312
        %v2619 = vpop.f32.mrf.mxu0
        %v2620 = vadd.f32 %v2507, %v2619
        %2621 = vmatmul.f32.gmra.mxu0 %v2313
        %v2622 = vpop.f32.mrf.mxu0
        %v2623 = vadd.f32 %v2510, %v2622
        %2624 = vmatmul.f32.gmra.mxu0 %v2314
        %v2625 = vpop.f32.mrf.mxu0
        %v2626 = vadd.f32 %v2513, %v2625
        %2627 = vmatmul.f32.gmra.mxu0 %v2315
        %v2628 = vpop.f32.mrf.mxu0
        %v2629 = vadd.f32 %v2516, %v2628
        %2630 = vmatmul.f32.gmra.mxu0 %v2316
        %v2631 = vpop.f32.mrf.mxu0
        %v2632 = vadd.f32 %v2519, %v2631
        %2633 = vmatmul.f32.gmra.mxu0 %v2317
        %v2634 = vpop.f32.mrf.mxu0
        %v2635 = vadd.f32 %v2522, %v2634
        %2636 = vmatmul.f32.gmra.mxu0 %v2318
        %v2637 = vpop.f32.mrf.mxu0
        %v2638 = vadd.f32 %v2525, %v2637
        %2639 = vmatmul.f32.gmra.mxu0 %v2319
        %v2640 = vpop.f32.mrf.mxu0
        %v2641 = vadd.f32 %v2528, %v2640
        %2642 = vmatmul.f32.gmra.mxu0 %v2320
        %v2643 = vpop.f32.mrf.mxu0
        %v2644 = vadd.f32 %v2531, %v2643
        %2645 = vmatmul.f32.gmra.mxu0 %v2321
        %v2646 = vpop.f32.mrf.mxu0
        %v2647 = vadd.f32 %v2534, %v2646
        %2648 = vmatmul.f32.gmra.mxu0 %v2322
        %v2649 = vpop.f32.mrf.mxu0
        %v2650 = vadd.f32 %v2537, %v2649
        %2651 = vmatmul.f32.gmra.mxu0 %v2323
        %v2652 = vpop.f32.mrf.mxu0
        %v2653 = vadd.f32 %v2540, %v2652
        %2654 = vmatmul.f32.gmra.mxu0 %v2324
        %v2655 = vpop.f32.mrf.mxu0
        %v2656 = vadd.f32 %v2543, %v2655
        %2657 = vmatmul.f32.gmra.mxu0 %v2325
        %v2658 = vpop.f32.mrf.mxu0
        %v2659 = vadd.f32 %v2546, %v2658
        %2660 = vmatmul.f32.gmra.mxu0 %v2326
        %v2661 = vpop.f32.mrf.mxu0
        %v2662 = vadd.f32 %v2549, %v2661
        %2663 = vmatmul.f32.gmra.mxu0 %v2327
        %v2664 = vpop.f32.mrf.mxu0
        %v2665 = vadd.f32 %v2552, %v2664
        %2666 = vmatmul.f32.gmra.mxu0 %v2328
        %v2667 = vpop.f32.mrf.mxu0
        %v2668 = vadd.f32 %v2555, %v2667
        %2669 = vmatmul.f32.gmra.mxu0 %v2329
        %v2670 = vpop.f32.mrf.mxu0
        %v2671 = vadd.f32 %v2558, %v2670
        %2672 = vmatmul.f32.gmra.mxu0 %v2330
        %v2673 = vpop.f32.mrf.mxu0
        %v2674 = vadd.f32 %v2561, %v2673
        %2675 = vmatmul.f32.gmra.mxu0 %v2331
        %v2676 = vpop.f32.mrf.mxu0
        %v2677 = vadd.f32 %v2564, %v2676
        %2678 = vmatmul.f32.gmra.mxu0 %v2332
        %v2679 = vpop.f32.mrf.mxu0
        %v2680 = vadd.f32 %v2567, %v2679
        %2681 = vmatmul.f32.gmra.mxu0 %v2333
        %v2682 = vpop.f32.mrf.mxu0
        %v2683 = vadd.f32 %v2570, %v2682
        %2684 = vmatmul.f32.gmra.mxu0 %v2334
        %v2685 = vpop.f32.mrf.mxu0
        %v2686 = vadd.f32 %v2573, %v2685
        %2687 = vmatmul.f32.gmra.mxu0 %v2335
        %v2688 = vpop.f32.mrf.mxu0
        %v2689 = vadd.f32 %v2576, %v2688
        %2690 = vmatmul.f32.gmra.mxu0 %v2336
        %v2691 = vpop.f32.mrf.mxu0
        %v2692 = vadd.f32 %v2579, %v2691
        %2693 = vmatmul.f32.gmra.mxu0 %v2337
        %v2694 = vpop.f32.mrf.mxu0
        %v2695 = vadd.f32 %v2582, %v2694
        %2696 = vmatmul.f32.gmra.mxu0 %v2338
        %v2697 = vpop.f32.mrf.mxu0
        %v2698 = vadd.f32 %v2585, %v2697
        %2699 = vmatmul.f32.gmra.mxu0 %v2339
        %v2700 = vpop.f32.mrf.mxu0
        %v2701 = vadd.f32 %v2588, %v2700
        %2702 = vmatmul.f32.gmra.mxu0 %v2340
        %v2703 = vpop.f32.mrf.mxu0
        %v2704 = vadd.f32 %v2591, %v2703
        %2705 = vmatmul.f32.gmra.mxu0 %v2341
        %v2706 = vpop.f32.mrf.mxu0
        %v2707 = vadd.f32 %v2594, %v2706
        %2708 = vmatmul.f32.gmra.mxu0 %v2342
        %v2709 = vpop.f32.mrf.mxu0
        %v2710 = vadd.f32 %v2597, %v2709
        %2711 = vmatmul.f32.gmra.mxu0 %v2343
        %v2712 = vpop.f32.mrf.mxu0
        %v2713 = vadd.f32 %v2600, %v2712
        %2714 = vdwg.mxu0
        %s2715 = scalar_lea.vmem [#allocation8], 256
        %v2716 = vld [vmem:[%s2715] sm:$0xff]
        %v2717 = vld [vmem:[%s2715 + $0x8] sm:$0xff]
        %v2718 = vld [vmem:[%s2715 + $0x10] sm:$0xff]
        %v2719 = vld [vmem:[%s2715 + $0x18] sm:$0xff]
        %v2720 = vld [vmem:[%s2715 + $0x20] sm:$0xff]
        %v2721 = vld [vmem:[%s2715 + $0x28] sm:$0xff]
        %v2722 = vld [vmem:[%s2715 + $0x30] sm:$0xff]
        %v2723 = vld [vmem:[%s2715 + $0x38] sm:$0xff]
        %v2724 = vld [vmem:[%s2715 + $0x40] sm:$0xff]
        %v2725 = vld [vmem:[%s2715 + $0x48] sm:$0xff]
        %v2726 = vld [vmem:[%s2715 + $0x50] sm:$0xff]
        %v2727 = vld [vmem:[%s2715 + $0x58] sm:$0xff]
        %v2728 = vld [vmem:[%s2715 + $0x60] sm:$0xff]
        %v2729 = vld [vmem:[%s2715 + $0x68] sm:$0xff]
        %v2730 = vld [vmem:[%s2715 + $0x70] sm:$0xff]
        %v2731 = vld [vmem:[%s2715 + $0x78] sm:$0xff]
        %2732 = vmatpush.msra.mxu0 %v2731
        %2733 = vmatpush.msra.mxu0 %v2730
        %2734 = vmatpush.msra.mxu0 %v2729
        %2735 = vmatpush.msra.mxu0 %v2728
        %2736 = vmatpush.msra.mxu0 %v2727
        %2737 = vmatpush.msra.mxu0 %v2726
        %2738 = vmatpush.msra.mxu0 %v2725
        %2739 = vmatpush.msra.mxu0 %v2724
        %2740 = vmatpush.msra.mxu0 %v2723
        %2741 = vmatpush.msra.mxu0 %v2722
        %2742 = vmatpush.msra.mxu0 %v2721
        %2743 = vmatpush.msra.mxu0 %v2720
        %2744 = vmatpush.msra.mxu0 %v2719
        %2745 = vmatpush.msra.mxu0 %v2718
        %2746 = vmatpush.msra.mxu0 %v2717
        %2747 = vmatpush.msra.mxu0 %v2716
        %2748 = vmatmul.f32.gmra.mxu0 %v2420
        %v2749 = vpop.f32.mrf.mxu0
        %v2750 = vadd.f32 0.0, %v2749
        %2751 = vmatmul.f32.gmra.mxu0 %v2421
        %v2752 = vpop.f32.mrf.mxu0
        %v2753 = vadd.f32 0.0, %v2752
        %2754 = vmatmul.f32.gmra.mxu0 %v2422
        %v2755 = vpop.f32.mrf.mxu0
        %v2756 = vadd.f32 0.0, %v2755
        %2757 = vmatmul.f32.gmra.mxu0 %v2423
        %v2758 = vpop.f32.mrf.mxu0
        %v2759 = vadd.f32 0.0, %v2758
        %2760 = vmatmul.f32.gmra.mxu0 %v2424
        %v2761 = vpop.f32.mrf.mxu0
        %v2762 = vadd.f32 0.0, %v2761
        %2763 = vmatmul.f32.gmra.mxu0 %v2425
        %v2764 = vpop.f32.mrf.mxu0
        %v2765 = vadd.f32 0.0, %v2764
        %2766 = vmatmul.f32.gmra.mxu0 %v2426
        %v2767 = vpop.f32.mrf.mxu0
        %v2768 = vadd.f32 0.0, %v2767
        %2769 = vmatmul.f32.gmra.mxu0 %v2427
        %v2770 = vpop.f32.mrf.mxu0
        %v2771 = vadd.f32 0.0, %v2770
        %2772 = vmatmul.f32.gmra.mxu0 %v2428
        %v2773 = vpop.f32.mrf.mxu0
        %v2774 = vadd.f32 0.0, %v2773
        %2775 = vmatmul.f32.gmra.mxu0 %v2429
        %v2776 = vpop.f32.mrf.mxu0
        %v2777 = vadd.f32 0.0, %v2776
        %2778 = vmatmul.f32.gmra.mxu0 %v2430
        %v2779 = vpop.f32.mrf.mxu0
        %v2780 = vadd.f32 0.0, %v2779
        %2781 = vmatmul.f32.gmra.mxu0 %v2431
        %v2782 = vpop.f32.mrf.mxu0
        %v2783 = vadd.f32 0.0, %v2782
        %2784 = vmatmul.f32.gmra.mxu0 %v2432
        %v2785 = vpop.f32.mrf.mxu0
        %v2786 = vadd.f32 0.0, %v2785
        %2787 = vmatmul.f32.gmra.mxu0 %v2433
        %v2788 = vpop.f32.mrf.mxu0
        %v2789 = vadd.f32 0.0, %v2788
        %2790 = vmatmul.f32.gmra.mxu0 %v2434
        %v2791 = vpop.f32.mrf.mxu0
        %v2792 = vadd.f32 0.0, %v2791
        %2793 = vmatmul.f32.gmra.mxu0 %v2435
        %v2794 = vpop.f32.mrf.mxu0
        %v2795 = vadd.f32 0.0, %v2794
        %2796 = vmatmul.f32.gmra.mxu0 %v2436
        %v2797 = vpop.f32.mrf.mxu0
        %v2798 = vadd.f32 0.0, %v2797
        %2799 = vmatmul.f32.gmra.mxu0 %v2437
        %v2800 = vpop.f32.mrf.mxu0
        %v2801 = vadd.f32 0.0, %v2800
        %2802 = vmatmul.f32.gmra.mxu0 %v2438
        %v2803 = vpop.f32.mrf.mxu0
        %v2804 = vadd.f32 0.0, %v2803
        %2805 = vmatmul.f32.gmra.mxu0 %v2439
        %v2806 = vpop.f32.mrf.mxu0
        %v2807 = vadd.f32 0.0, %v2806
        %2808 = vmatmul.f32.gmra.mxu0 %v2440
        %v2809 = vpop.f32.mrf.mxu0
        %v2810 = vadd.f32 0.0, %v2809
        %2811 = vmatmul.f32.gmra.mxu0 %v2441
        %v2812 = vpop.f32.mrf.mxu0
        %v2813 = vadd.f32 0.0, %v2812
        %2814 = vmatmul.f32.gmra.mxu0 %v2442
        %v2815 = vpop.f32.mrf.mxu0
        %v2816 = vadd.f32 0.0, %v2815
        %2817 = vmatmul.f32.gmra.mxu0 %v2443
        %v2818 = vpop.f32.mrf.mxu0
        %v2819 = vadd.f32 0.0, %v2818
        %2820 = vmatmul.f32.gmra.mxu0 %v2444
        %v2821 = vpop.f32.mrf.mxu0
        %v2822 = vadd.f32 0.0, %v2821
        %2823 = vmatmul.f32.gmra.mxu0 %v2445
        %v2824 = vpop.f32.mrf.mxu0
        %v2825 = vadd.f32 0.0, %v2824
        %2826 = vmatmul.f32.gmra.mxu0 %v2446
        %v2827 = vpop.f32.mrf.mxu0
        %v2828 = vadd.f32 0.0, %v2827
        %2829 = vmatmul.f32.gmra.mxu0 %v2447
        %v2830 = vpop.f32.mrf.mxu0
        %v2831 = vadd.f32 0.0, %v2830
        %2832 = vmatmul.f32.gmra.mxu0 %v2448
        %v2833 = vpop.f32.mrf.mxu0
        %v2834 = vadd.f32 0.0, %v2833
        %2835 = vmatmul.f32.gmra.mxu0 %v2449
        %v2836 = vpop.f32.mrf.mxu0
        %v2837 = vadd.f32 0.0, %v2836
        %2838 = vmatmul.f32.gmra.mxu0 %v2450
        %v2839 = vpop.f32.mrf.mxu0
        %v2840 = vadd.f32 0.0, %v2839
        %2841 = vmatmul.f32.gmra.mxu0 %v2451
        %v2842 = vpop.f32.mrf.mxu0
        %v2843 = vadd.f32 0.0, %v2842
        %2844 = vdwg.mxu0
        %v2845 = vadd.f32 %v2620, %v2750
        %v2846 = vadd.f32 %v2623, %v2753
        %v2847 = vadd.f32 %v2626, %v2756
        %v2848 = vadd.f32 %v2629, %v2759
        %v2849 = vadd.f32 %v2632, %v2762
        %v2850 = vadd.f32 %v2635, %v2765
        %v2851 = vadd.f32 %v2638, %v2768
        %v2852 = vadd.f32 %v2641, %v2771
        %v2853 = vadd.f32 %v2644, %v2774
        %v2854 = vadd.f32 %v2647, %v2777
        %v2855 = vadd.f32 %v2650, %v2780
        %v2856 = vadd.f32 %v2653, %v2783
        %v2857 = vadd.f32 %v2656, %v2786
        %v2858 = vadd.f32 %v2659, %v2789
        %v2859 = vadd.f32 %v2662, %v2792
        %v2860 = vadd.f32 %v2665, %v2795
        %v2861 = vadd.f32 %v2668, %v2798
        %v2862 = vadd.f32 %v2671, %v2801
        %v2863 = vadd.f32 %v2674, %v2804
        %v2864 = vadd.f32 %v2677, %v2807
        %v2865 = vadd.f32 %v2680, %v2810
        %v2866 = vadd.f32 %v2683, %v2813
        %v2867 = vadd.f32 %v2686, %v2816
        %v2868 = vadd.f32 %v2689, %v2819
        %v2869 = vadd.f32 %v2692, %v2822
        %v2870 = vadd.f32 %v2695, %v2825
        %v2871 = vadd.f32 %v2698, %v2828
        %v2872 = vadd.f32 %v2701, %v2831
        %v2873 = vadd.f32 %v2704, %v2834
        %v2874 = vadd.f32 %v2707, %v2837
        %v2875 = vadd.f32 %v2710, %v2840
        %v2876 = vadd.f32 %v2713, %v2843
        %s2877 = scalar_lea.vmem [#allocation8], 384
        %v2878 = vld [vmem:[%s2877] sm:$0xff]
        %v2879 = vld [vmem:[%s2877 + $0x8] sm:$0xff]
        %v2880 = vld [vmem:[%s2877 + $0x10] sm:$0xff]
        %v2881 = vld [vmem:[%s2877 + $0x18] sm:$0xff]
        %v2882 = vld [vmem:[%s2877 + $0x20] sm:$0xff]
        %v2883 = vld [vmem:[%s2877 + $0x28] sm:$0xff]
        %v2884 = vld [vmem:[%s2877 + $0x30] sm:$0xff]
        %v2885 = vld [vmem:[%s2877 + $0x38] sm:$0xff]
        %v2886 = vld [vmem:[%s2877 + $0x40] sm:$0xff]
        %v2887 = vld [vmem:[%s2877 + $0x48] sm:$0xff]
        %v2888 = vld [vmem:[%s2877 + $0x50] sm:$0xff]
        %v2889 = vld [vmem:[%s2877 + $0x58] sm:$0xff]
        %v2890 = vld [vmem:[%s2877 + $0x60] sm:$0xff]
        %v2891 = vld [vmem:[%s2877 + $0x68] sm:$0xff]
        %v2892 = vld [vmem:[%s2877 + $0x70] sm:$0xff]
        %v2893 = vld [vmem:[%s2877 + $0x78] sm:$0xff]
        %2894 = vmatpush.msra.mxu0 %v2893
        %2895 = vmatpush.msra.mxu0 %v2892
        %2896 = vmatpush.msra.mxu0 %v2891
        %2897 = vmatpush.msra.mxu0 %v2890
        %2898 = vmatpush.msra.mxu0 %v2889
        %2899 = vmatpush.msra.mxu0 %v2888
        %2900 = vmatpush.msra.mxu0 %v2887
        %2901 = vmatpush.msra.mxu0 %v2886
        %2902 = vmatpush.msra.mxu0 %v2885
        %2903 = vmatpush.msra.mxu0 %v2884
        %2904 = vmatpush.msra.mxu0 %v2883
        %2905 = vmatpush.msra.mxu0 %v2882
        %2906 = vmatpush.msra.mxu0 %v2881
        %2907 = vmatpush.msra.mxu0 %v2880
        %2908 = vmatpush.msra.mxu0 %v2879
        %2909 = vmatpush.msra.mxu0 %v2878
        %2910 = vmatmul.f32.gmra.mxu0 %v2314
        %v2911 = vpop.f32.mrf.mxu0
        %v2912 = vadd.f32 0.0, %v2911
        %2913 = vmatmul.f32.gmra.mxu0 %v2315
        %v2914 = vpop.f32.mrf.mxu0
        %v2915 = vadd.f32 0.0, %v2914
        %2916 = vmatmul.f32.gmra.mxu0 %v2316
        %v2917 = vpop.f32.mrf.mxu0
        %v2918 = vadd.f32 0.0, %v2917
        %2919 = vmatmul.f32.gmra.mxu0 %v2317
        %v2920 = vpop.f32.mrf.mxu0
        %v2921 = vadd.f32 0.0, %v2920
        %2922 = vmatmul.f32.gmra.mxu0 %v2318
        %v2923 = vpop.f32.mrf.mxu0
        %v2924 = vadd.f32 0.0, %v2923
        %2925 = vmatmul.f32.gmra.mxu0 %v2319
        %v2926 = vpop.f32.mrf.mxu0
        %v2927 = vadd.f32 0.0, %v2926
        %2928 = vmatmul.f32.gmra.mxu0 %v2320
        %v2929 = vpop.f32.mrf.mxu0
        %v2930 = vadd.f32 0.0, %v2929
        %2931 = vmatmul.f32.gmra.mxu0 %v2321
        %v2932 = vpop.f32.mrf.mxu0
        %v2933 = vadd.f32 0.0, %v2932
        %2934 = vmatmul.f32.gmra.mxu0 %v2322
        %v2935 = vpop.f32.mrf.mxu0
        %v2936 = vadd.f32 0.0, %v2935
        %2937 = vmatmul.f32.gmra.mxu0 %v2323
        %v2938 = vpop.f32.mrf.mxu0
        %v2939 = vadd.f32 0.0, %v2938
        %2940 = vmatmul.f32.gmra.mxu0 %v2324
        %v2941 = vpop.f32.mrf.mxu0
        %v2942 = vadd.f32 0.0, %v2941
        %2943 = vmatmul.f32.gmra.mxu0 %v2325
        %v2944 = vpop.f32.mrf.mxu0
        %v2945 = vadd.f32 0.0, %v2944
        %2946 = vmatmul.f32.gmra.mxu0 %v2326
        %v2947 = vpop.f32.mrf.mxu0
        %v2948 = vadd.f32 0.0, %v2947
        %2949 = vmatmul.f32.gmra.mxu0 %v2327
        %v2950 = vpop.f32.mrf.mxu0
        %v2951 = vadd.f32 0.0, %v2950
        %2952 = vmatmul.f32.gmra.mxu0 %v2328
        %v2953 = vpop.f32.mrf.mxu0
        %v2954 = vadd.f32 0.0, %v2953
        %2955 = vmatmul.f32.gmra.mxu0 %v2329
        %v2956 = vpop.f32.mrf.mxu0
        %v2957 = vadd.f32 0.0, %v2956
        %2958 = vmatmul.f32.gmra.mxu0 %v2330
        %v2959 = vpop.f32.mrf.mxu0
        %v2960 = vadd.f32 0.0, %v2959
        %2961 = vmatmul.f32.gmra.mxu0 %v2331
        %v2962 = vpop.f32.mrf.mxu0
        %v2963 = vadd.f32 0.0, %v2962
        %2964 = vmatmul.f32.gmra.mxu0 %v2332
        %v2965 = vpop.f32.mrf.mxu0
        %v2966 = vadd.f32 0.0, %v2965
        %2967 = vmatmul.f32.gmra.mxu0 %v2333
        %v2968 = vpop.f32.mrf.mxu0
        %v2969 = vadd.f32 0.0, %v2968
        %2970 = vmatmul.f32.gmra.mxu0 %v2334
        %v2971 = vpop.f32.mrf.mxu0
        %v2972 = vadd.f32 0.0, %v2971
        %2973 = vmatmul.f32.gmra.mxu0 %v2335
        %v2974 = vpop.f32.mrf.mxu0
        %v2975 = vadd.f32 0.0, %v2974
        %2976 = vmatmul.f32.gmra.mxu0 %v2336
        %v2977 = vpop.f32.mrf.mxu0
        %v2978 = vadd.f32 0.0, %v2977
        %2979 = vmatmul.f32.gmra.mxu0 %v2337
        %v2980 = vpop.f32.mrf.mxu0
        %v2981 = vadd.f32 0.0, %v2980
        %2982 = vmatmul.f32.gmra.mxu0 %v2338
        %v2983 = vpop.f32.mrf.mxu0
        %v2984 = vadd.f32 0.0, %v2983
        %2985 = vmatmul.f32.gmra.mxu0 %v2339
        %v2986 = vpop.f32.mrf.mxu0
        %v2987 = vadd.f32 0.0, %v2986
        %2988 = vmatmul.f32.gmra.mxu0 %v2340
        %v2989 = vpop.f32.mrf.mxu0
        %v2990 = vadd.f32 0.0, %v2989
        %2991 = vmatmul.f32.gmra.mxu0 %v2341
        %v2992 = vpop.f32.mrf.mxu0
        %v2993 = vadd.f32 0.0, %v2992
        %2994 = vmatmul.f32.gmra.mxu0 %v2342
        %v2995 = vpop.f32.mrf.mxu0
        %v2996 = vadd.f32 0.0, %v2995
        %2997 = vmatmul.f32.gmra.mxu0 %v2343
        %v2998 = vpop.f32.mrf.mxu0
        %v2999 = vadd.f32 0.0, %v2998
        %3000 = vmatmul.f32.gmra.mxu0 %v2344
        %v3001 = vpop.f32.mrf.mxu0
        %v3002 = vadd.f32 0.0, %v3001
        %3003 = vmatmul.f32.gmra.mxu0 %v2345
        %v3004 = vpop.f32.mrf.mxu0
        %v3005 = vadd.f32 0.0, %v3004
        %3006 = vdwg.mxu0
        %v3007 = vadd.f32 %v2845, %v2912
        %v3008 = vadd.f32 %v2846, %v2915
        %v3009 = vadd.f32 %v2847, %v2918
        %v3010 = vadd.f32 %v2848, %v2921
        %v3011 = vadd.f32 %v2849, %v2924
        %v3012 = vadd.f32 %v2850, %v2927
        %v3013 = vadd.f32 %v2851, %v2930
        %v3014 = vadd.f32 %v2852, %v2933
        %v3015 = vadd.f32 %v2853, %v2936
        %v3016 = vadd.f32 %v2854, %v2939
        %v3017 = vadd.f32 %v2855, %v2942
        %v3018 = vadd.f32 %v2856, %v2945
        %v3019 = vadd.f32 %v2857, %v2948
        %v3020 = vadd.f32 %v2858, %v2951
        %v3021 = vadd.f32 %v2859, %v2954
        %v3022 = vadd.f32 %v2860, %v2957
        %v3023 = vadd.f32 %v2861, %v2960
        %v3024 = vadd.f32 %v2862, %v2963
        %v3025 = vadd.f32 %v2863, %v2966
        %v3026 = vadd.f32 %v2864, %v2969
        %v3027 = vadd.f32 %v2865, %v2972
        %v3028 = vadd.f32 %v2866, %v2975
        %v3029 = vadd.f32 %v2867, %v2978
        %v3030 = vadd.f32 %v2868, %v2981
        %v3031 = vadd.f32 %v2869, %v2984
        %v3032 = vadd.f32 %v2870, %v2987
        %v3033 = vadd.f32 %v2871, %v2990
        %v3034 = vadd.f32 %v2872, %v2993
        %v3035 = vadd.f32 %v2873, %v2996
        %v3036 = vadd.f32 %v2874, %v2999
        %v3037 = vadd.f32 %v2875, %v3002
        %v3038 = vadd.f32 %v2876, %v3005
        %s3039 = scalar_lea.vmem [#allocation8], 512
        %v3040 = vld [vmem:[%s3039] sm:$0xff]
        %v3041 = vld [vmem:[%s3039 + $0x8] sm:$0xff]
        %v3042 = vld [vmem:[%s3039 + $0x10] sm:$0xff]
        %v3043 = vld [vmem:[%s3039 + $0x18] sm:$0xff]
        %v3044 = vld [vmem:[%s3039 + $0x20] sm:$0xff]
        %v3045 = vld [vmem:[%s3039 + $0x28] sm:$0xff]
        %v3046 = vld [vmem:[%s3039 + $0x30] sm:$0xff]
        %v3047 = vld [vmem:[%s3039 + $0x38] sm:$0xff]
        %v3048 = vld [vmem:[%s3039 + $0x40] sm:$0xff]
        %v3049 = vld [vmem:[%s3039 + $0x48] sm:$0xff]
        %v3050 = vld [vmem:[%s3039 + $0x50] sm:$0xff]
        %v3051 = vld [vmem:[%s3039 + $0x58] sm:$0xff]
        %v3052 = vld [vmem:[%s3039 + $0x60] sm:$0xff]
        %v3053 = vld [vmem:[%s3039 + $0x68] sm:$0xff]
        %v3054 = vld [vmem:[%s3039 + $0x70] sm:$0xff]
        %v3055 = vld [vmem:[%s3039 + $0x78] sm:$0xff]
        %3056 = vmatpush.msra.mxu0 %v3055
        %3057 = vmatpush.msra.mxu0 %v3054
        %3058 = vmatpush.msra.mxu0 %v3053
        %3059 = vmatpush.msra.mxu0 %v3052
        %3060 = vmatpush.msra.mxu0 %v3051
        %3061 = vmatpush.msra.mxu0 %v3050
        %3062 = vmatpush.msra.mxu0 %v3049
        %3063 = vmatpush.msra.mxu0 %v3048
        %3064 = vmatpush.msra.mxu0 %v3047
        %3065 = vmatpush.msra.mxu0 %v3046
        %3066 = vmatpush.msra.mxu0 %v3045
        %3067 = vmatpush.msra.mxu0 %v3044
        %3068 = vmatpush.msra.mxu0 %v3043
        %3069 = vmatpush.msra.mxu0 %v3042
        %3070 = vmatpush.msra.mxu0 %v3041
        %3071 = vmatpush.msra.mxu0 %v3040
        %3072 = vmatmul.f32.gmra.mxu0 %v2206
        %v3073 = vpop.f32.mrf.mxu0
        %v3074 = vadd.f32 0.0, %v3073
        %3075 = vmatmul.f32.gmra.mxu0 %v2207
        %v3076 = vpop.f32.mrf.mxu0
        %v3077 = vadd.f32 0.0, %v3076
        %3078 = vmatmul.f32.gmra.mxu0 %v2208
        %v3079 = vpop.f32.mrf.mxu0
        %v3080 = vadd.f32 0.0, %v3079
        %3081 = vmatmul.f32.gmra.mxu0 %v2209
        %v3082 = vpop.f32.mrf.mxu0
        %v3083 = vadd.f32 0.0, %v3082
        %3084 = vmatmul.f32.gmra.mxu0 %v2210
        %v3085 = vpop.f32.mrf.mxu0
        %v3086 = vadd.f32 0.0, %v3085
        %3087 = vmatmul.f32.gmra.mxu0 %v2211
        %v3088 = vpop.f32.mrf.mxu0
        %v3089 = vadd.f32 0.0, %v3088
        %3090 = vmatmul.f32.gmra.mxu0 %v2212
        %v3091 = vpop.f32.mrf.mxu0
        %v3092 = vadd.f32 0.0, %v3091
        %3093 = vmatmul.f32.gmra.mxu0 %v2213
        %v3094 = vpop.f32.mrf.mxu0
        %v3095 = vadd.f32 0.0, %v3094
        %3096 = vmatmul.f32.gmra.mxu0 %v2214
        %v3097 = vpop.f32.mrf.mxu0
        %v3098 = vadd.f32 0.0, %v3097
        %3099 = vmatmul.f32.gmra.mxu0 %v2215
        %v3100 = vpop.f32.mrf.mxu0
        %v3101 = vadd.f32 0.0, %v3100
        %3102 = vmatmul.f32.gmra.mxu0 %v2216
        %v3103 = vpop.f32.mrf.mxu0
        %v3104 = vadd.f32 0.0, %v3103
        %3105 = vmatmul.f32.gmra.mxu0 %v2217
        %v3106 = vpop.f32.mrf.mxu0
        %v3107 = vadd.f32 0.0, %v3106
        %3108 = vmatmul.f32.gmra.mxu0 %v2218
        %v3109 = vpop.f32.mrf.mxu0
        %v3110 = vadd.f32 0.0, %v3109
        %3111 = vmatmul.f32.gmra.mxu0 %v2219
        %v3112 = vpop.f32.mrf.mxu0
        %v3113 = vadd.f32 0.0, %v3112
        %3114 = vmatmul.f32.gmra.mxu0 %v2220
        %v3115 = vpop.f32.mrf.mxu0
        %v3116 = vadd.f32 0.0, %v3115
        %3117 = vmatmul.f32.gmra.mxu0 %v2221
        %v3118 = vpop.f32.mrf.mxu0
        %v3119 = vadd.f32 0.0, %v3118
        %3120 = vmatmul.f32.gmra.mxu0 %v2222
        %v3121 = vpop.f32.mrf.mxu0
        %v3122 = vadd.f32 0.0, %v3121
        %3123 = vmatmul.f32.gmra.mxu0 %v2223
        %v3124 = vpop.f32.mrf.mxu0
        %v3125 = vadd.f32 0.0, %v3124
        %3126 = vmatmul.f32.gmra.mxu0 %v2224
        %v3127 = vpop.f32.mrf.mxu0
        %v3128 = vadd.f32 0.0, %v3127
        %3129 = vmatmul.f32.gmra.mxu0 %v2225
        %v3130 = vpop.f32.mrf.mxu0
        %v3131 = vadd.f32 0.0, %v3130
        %3132 = vmatmul.f32.gmra.mxu0 %v2226
        %v3133 = vpop.f32.mrf.mxu0
        %v3134 = vadd.f32 0.0, %v3133
        %3135 = vmatmul.f32.gmra.mxu0 %v2227
        %v3136 = vpop.f32.mrf.mxu0
        %v3137 = vadd.f32 0.0, %v3136
        %3138 = vmatmul.f32.gmra.mxu0 %v2228
        %v3139 = vpop.f32.mrf.mxu0
        %v3140 = vadd.f32 0.0, %v3139
        %3141 = vmatmul.f32.gmra.mxu0 %v2229
        %v3142 = vpop.f32.mrf.mxu0
        %v3143 = vadd.f32 0.0, %v3142
        %3144 = vmatmul.f32.gmra.mxu0 %v2230
        %v3145 = vpop.f32.mrf.mxu0
        %v3146 = vadd.f32 0.0, %v3145
        %3147 = vmatmul.f32.gmra.mxu0 %v2231
        %v3148 = vpop.f32.mrf.mxu0
        %v3149 = vadd.f32 0.0, %v3148
        %3150 = vmatmul.f32.gmra.mxu0 %v2232
        %v3151 = vpop.f32.mrf.mxu0
        %v3152 = vadd.f32 0.0, %v3151
        %3153 = vmatmul.f32.gmra.mxu0 %v2233
        %v3154 = vpop.f32.mrf.mxu0
        %v3155 = vadd.f32 0.0, %v3154
        %3156 = vmatmul.f32.gmra.mxu0 %v2234
        %v3157 = vpop.f32.mrf.mxu0
        %v3158 = vadd.f32 0.0, %v3157
        %3159 = vmatmul.f32.gmra.mxu0 %v2235
        %v3160 = vpop.f32.mrf.mxu0
        %v3161 = vadd.f32 0.0, %v3160
        %3162 = vmatmul.f32.gmra.mxu0 %v2236
        %v3163 = vpop.f32.mrf.mxu0
        %v3164 = vadd.f32 0.0, %v3163
        %3165 = vmatmul.f32.gmra.mxu0 %v2237
        %v3166 = vpop.f32.mrf.mxu0
        %v3167 = vadd.f32 0.0, %v3166
        %3168 = vdwg.mxu0
        %v3169 = vadd.f32 %v3007, %v3074
        %v3170 = vadd.f32 %v3008, %v3077
        %v3171 = vadd.f32 %v3009, %v3080
        %v3172 = vadd.f32 %v3010, %v3083
        %v3173 = vadd.f32 %v3011, %v3086
        %v3174 = vadd.f32 %v3012, %v3089
        %v3175 = vadd.f32 %v3013, %v3092
        %v3176 = vadd.f32 %v3014, %v3095
        %v3177 = vadd.f32 %v3015, %v3098
        %v3178 = vadd.f32 %v3016, %v3101
        %v3179 = vadd.f32 %v3017, %v3104
        %v3180 = vadd.f32 %v3018, %v3107
        %v3181 = vadd.f32 %v3019, %v3110
        %v3182 = vadd.f32 %v3020, %v3113
        %v3183 = vadd.f32 %v3021, %v3116
        %v3184 = vadd.f32 %v3022, %v3119
        %v3185 = vadd.f32 %v3023, %v3122
        %v3186 = vadd.f32 %v3024, %v3125
        %v3187 = vadd.f32 %v3025, %v3128
        %v3188 = vadd.f32 %v3026, %v3131
        %v3189 = vadd.f32 %v3027, %v3134
        %v3190 = vadd.f32 %v3028, %v3137
        %v3191 = vadd.f32 %v3029, %v3140
        %v3192 = vadd.f32 %v3030, %v3143
        %v3193 = vadd.f32 %v3031, %v3146
        %v3194 = vadd.f32 %v3032, %v3149
        %v3195 = vadd.f32 %v3033, %v3152
        %v3196 = vadd.f32 %v3034, %v3155
        %v3197 = vadd.f32 %v3035, %v3158
        %v3198 = vadd.f32 %v3036, %v3161
        %v3199 = vadd.f32 %v3037, %v3164
        %v3200 = vadd.f32 %v3038, %v3167
        %s3201 = scalar_lea.vmem [#allocation8], 640
        %v3202 = vld [vmem:[%s3201] sm:$0xff]
        %v3203 = vld [vmem:[%s3201 + $0x8] sm:$0xff]
        %v3204 = vld [vmem:[%s3201 + $0x10] sm:$0xff]
        %v3205 = vld [vmem:[%s3201 + $0x18] sm:$0xff]
        %v3206 = vld [vmem:[%s3201 + $0x20] sm:$0xff]
        %v3207 = vld [vmem:[%s3201 + $0x28] sm:$0xff]
        %v3208 = vld [vmem:[%s3201 + $0x30] sm:$0xff]
        %v3209 = vld [vmem:[%s3201 + $0x38] sm:$0xff]
        %v3210 = vld [vmem:[%s3201 + $0x40] sm:$0xff]
        %v3211 = vld [vmem:[%s3201 + $0x48] sm:$0xff]
        %v3212 = vld [vmem:[%s3201 + $0x50] sm:$0xff]
        %v3213 = vld [vmem:[%s3201 + $0x58] sm:$0xff]
        %v3214 = vld [vmem:[%s3201 + $0x60] sm:$0xff]
        %v3215 = vld [vmem:[%s3201 + $0x68] sm:$0xff]
        %v3216 = vld [vmem:[%s3201 + $0x70] sm:$0xff]
        %v3217 = vld [vmem:[%s3201 + $0x78] sm:$0xff]
        %3218 = vmatpush.msra.mxu0 %v3217
        %3219 = vmatpush.msra.mxu0 %v3216
        %3220 = vmatpush.msra.mxu0 %v3215
        %3221 = vmatpush.msra.mxu0 %v3214
        %3222 = vmatpush.msra.mxu0 %v3213
        %3223 = vmatpush.msra.mxu0 %v3212
        %3224 = vmatpush.msra.mxu0 %v3211
        %3225 = vmatpush.msra.mxu0 %v3210
        %3226 = vmatpush.msra.mxu0 %v3209
        %3227 = vmatpush.msra.mxu0 %v3208
        %3228 = vmatpush.msra.mxu0 %v3207
        %3229 = vmatpush.msra.mxu0 %v3206
        %3230 = vmatpush.msra.mxu0 %v3205
        %3231 = vmatpush.msra.mxu0 %v3204
        %3232 = vmatpush.msra.mxu0 %v3203
        %3233 = vmatpush.msra.mxu0 %v3202
        %3234 = vmatmul.f32.gmra.mxu0 %v2422
        %v3235 = vpop.f32.mrf.mxu0
        %v3236 = vadd.f32 0.0, %v3235
        %3237 = vmatmul.f32.gmra.mxu0 %v2423
        %v3238 = vpop.f32.mrf.mxu0
        %v3239 = vadd.f32 0.0, %v3238
        %3240 = vmatmul.f32.gmra.mxu0 %v2424
        %v3241 = vpop.f32.mrf.mxu0
        %v3242 = vadd.f32 0.0, %v3241
        %3243 = vmatmul.f32.gmra.mxu0 %v2425
        %v3244 = vpop.f32.mrf.mxu0
        %v3245 = vadd.f32 0.0, %v3244
        %3246 = vmatmul.f32.gmra.mxu0 %v2426
        %v3247 = vpop.f32.mrf.mxu0
        %v3248 = vadd.f32 0.0, %v3247
        %3249 = vmatmul.f32.gmra.mxu0 %v2427
        %v3250 = vpop.f32.mrf.mxu0
        %v3251 = vadd.f32 0.0, %v3250
        %3252 = vmatmul.f32.gmra.mxu0 %v2428
        %v3253 = vpop.f32.mrf.mxu0
        %v3254 = vadd.f32 0.0, %v3253
        %3255 = vmatmul.f32.gmra.mxu0 %v2429
        %v3256 = vpop.f32.mrf.mxu0
        %v3257 = vadd.f32 0.0, %v3256
        %3258 = vmatmul.f32.gmra.mxu0 %v2430
        %v3259 = vpop.f32.mrf.mxu0
        %v3260 = vadd.f32 0.0, %v3259
        %3261 = vmatmul.f32.gmra.mxu0 %v2431
        %v3262 = vpop.f32.mrf.mxu0
        %v3263 = vadd.f32 0.0, %v3262
        %3264 = vmatmul.f32.gmra.mxu0 %v2432
        %v3265 = vpop.f32.mrf.mxu0
        %v3266 = vadd.f32 0.0, %v3265
        %3267 = vmatmul.f32.gmra.mxu0 %v2433
        %v3268 = vpop.f32.mrf.mxu0
        %v3269 = vadd.f32 0.0, %v3268
        %3270 = vmatmul.f32.gmra.mxu0 %v2434
        %v3271 = vpop.f32.mrf.mxu0
        %v3272 = vadd.f32 0.0, %v3271
        %3273 = vmatmul.f32.gmra.mxu0 %v2435
        %v3274 = vpop.f32.mrf.mxu0
        %v3275 = vadd.f32 0.0, %v3274
        %3276 = vmatmul.f32.gmra.mxu0 %v2436
        %v3277 = vpop.f32.mrf.mxu0
        %v3278 = vadd.f32 0.0, %v3277
        %3279 = vmatmul.f32.gmra.mxu0 %v2437
        %v3280 = vpop.f32.mrf.mxu0
        %v3281 = vadd.f32 0.0, %v3280
        %3282 = vmatmul.f32.gmra.mxu0 %v2438
        %v3283 = vpop.f32.mrf.mxu0
        %v3284 = vadd.f32 0.0, %v3283
        %3285 = vmatmul.f32.gmra.mxu0 %v2439
        %v3286 = vpop.f32.mrf.mxu0
        %v3287 = vadd.f32 0.0, %v3286
        %3288 = vmatmul.f32.gmra.mxu0 %v2440
        %v3289 = vpop.f32.mrf.mxu0
        %v3290 = vadd.f32 0.0, %v3289
        %3291 = vmatmul.f32.gmra.mxu0 %v2441
        %v3292 = vpop.f32.mrf.mxu0
        %v3293 = vadd.f32 0.0, %v3292
        %3294 = vmatmul.f32.gmra.mxu0 %v2442
        %v3295 = vpop.f32.mrf.mxu0
        %v3296 = vadd.f32 0.0, %v3295
        %3297 = vmatmul.f32.gmra.mxu0 %v2443
        %v3298 = vpop.f32.mrf.mxu0
        %v3299 = vadd.f32 0.0, %v3298
        %3300 = vmatmul.f32.gmra.mxu0 %v2444
        %v3301 = vpop.f32.mrf.mxu0
        %v3302 = vadd.f32 0.0, %v3301
        %3303 = vmatmul.f32.gmra.mxu0 %v2445
        %v3304 = vpop.f32.mrf.mxu0
        %v3305 = vadd.f32 0.0, %v3304
        %3306 = vmatmul.f32.gmra.mxu0 %v2446
        %v3307 = vpop.f32.mrf.mxu0
        %v3308 = vadd.f32 0.0, %v3307
        %3309 = vmatmul.f32.gmra.mxu0 %v2447
        %v3310 = vpop.f32.mrf.mxu0
        %v3311 = vadd.f32 0.0, %v3310
        %3312 = vmatmul.f32.gmra.mxu0 %v2448
        %v3313 = vpop.f32.mrf.mxu0
        %v3314 = vadd.f32 0.0, %v3313
        %3315 = vmatmul.f32.gmra.mxu0 %v2449
        %v3316 = vpop.f32.mrf.mxu0
        %v3317 = vadd.f32 0.0, %v3316
        %3318 = vmatmul.f32.gmra.mxu0 %v2450
        %v3319 = vpop.f32.mrf.mxu0
        %v3320 = vadd.f32 0.0, %v3319
        %3321 = vmatmul.f32.gmra.mxu0 %v2451
        %v3322 = vpop.f32.mrf.mxu0
        %v3323 = vadd.f32 0.0, %v3322
        %3324 = vmatmul.f32.gmra.mxu0 %v2452
        %v3325 = vpop.f32.mrf.mxu0
        %v3326 = vadd.f32 0.0, %v3325
        %3327 = vmatmul.f32.gmra.mxu0 %v2453
        %v3328 = vpop.f32.mrf.mxu0
        %v3329 = vadd.f32 0.0, %v3328
        %3330 = vdwg.mxu0
        %v3331 = vadd.f32 %v3169, %v3236
        %v3332 = vadd.f32 %v3170, %v3239
        %v3333 = vadd.f32 %v3171, %v3242
        %v3334 = vadd.f32 %v3172, %v3245
        %v3335 = vadd.f32 %v3173, %v3248
        %v3336 = vadd.f32 %v3174, %v3251
        %v3337 = vadd.f32 %v3175, %v3254
        %v3338 = vadd.f32 %v3176, %v3257
        %v3339 = vadd.f32 %v3177, %v3260
        %v3340 = vadd.f32 %v3178, %v3263
        %v3341 = vadd.f32 %v3179, %v3266
        %v3342 = vadd.f32 %v3180, %v3269
        %v3343 = vadd.f32 %v3181, %v3272
        %v3344 = vadd.f32 %v3182, %v3275
        %v3345 = vadd.f32 %v3183, %v3278
        %v3346 = vadd.f32 %v3184, %v3281
        %v3347 = vadd.f32 %v3185, %v3284
        %v3348 = vadd.f32 %v3186, %v3287
        %v3349 = vadd.f32 %v3187, %v3290
        %v3350 = vadd.f32 %v3188, %v3293
        %v3351 = vadd.f32 %v3189, %v3296
        %v3352 = vadd.f32 %v3190, %v3299
        %v3353 = vadd.f32 %v3191, %v3302
        %v3354 = vadd.f32 %v3192, %v3305
        %v3355 = vadd.f32 %v3193, %v3308
        %v3356 = vadd.f32 %v3194, %v3311
        %v3357 = vadd.f32 %v3195, %v3314
        %v3358 = vadd.f32 %v3196, %v3317
        %v3359 = vadd.f32 %v3197, %v3320
        %v3360 = vadd.f32 %v3198, %v3323
        %v3361 = vadd.f32 %v3199, %v3326
        %v3362 = vadd.f32 %v3200, %v3329
        %s3363 = scalar_lea.vmem [#allocation8], 768
        %v3364 = vld [vmem:[%s3363] sm:$0xff]
        %v3365 = vld [vmem:[%s3363 + $0x8] sm:$0xff]
        %v3366 = vld [vmem:[%s3363 + $0x10] sm:$0xff]
        %v3367 = vld [vmem:[%s3363 + $0x18] sm:$0xff]
        %v3368 = vld [vmem:[%s3363 + $0x20] sm:$0xff]
        %v3369 = vld [vmem:[%s3363 + $0x28] sm:$0xff]
        %v3370 = vld [vmem:[%s3363 + $0x30] sm:$0xff]
        %v3371 = vld [vmem:[%s3363 + $0x38] sm:$0xff]
        %v3372 = vld [vmem:[%s3363 + $0x40] sm:$0xff]
        %v3373 = vld [vmem:[%s3363 + $0x48] sm:$0xff]
        %v3374 = vld [vmem:[%s3363 + $0x50] sm:$0xff]
        %v3375 = vld [vmem:[%s3363 + $0x58] sm:$0xff]
        %v3376 = vld [vmem:[%s3363 + $0x60] sm:$0xff]
        %v3377 = vld [vmem:[%s3363 + $0x68] sm:$0xff]
        %v3378 = vld [vmem:[%s3363 + $0x70] sm:$0xff]
        %v3379 = vld [vmem:[%s3363 + $0x78] sm:$0xff]
        %3380 = vmatpush.msra.mxu0 %v3379
        %3381 = vmatpush.msra.mxu0 %v3378
        %3382 = vmatpush.msra.mxu0 %v3377
        %3383 = vmatpush.msra.mxu0 %v3376
        %3384 = vmatpush.msra.mxu0 %v3375
        %3385 = vmatpush.msra.mxu0 %v3374
        %3386 = vmatpush.msra.mxu0 %v3373
        %3387 = vmatpush.msra.mxu0 %v3372
        %3388 = vmatpush.msra.mxu0 %v3371
        %3389 = vmatpush.msra.mxu0 %v3370
        %3390 = vmatpush.msra.mxu0 %v3369
        %3391 = vmatpush.msra.mxu0 %v3368
        %3392 = vmatpush.msra.mxu0 %v3367
        %3393 = vmatpush.msra.mxu0 %v3366
        %3394 = vmatpush.msra.mxu0 %v3365
        %3395 = vmatpush.msra.mxu0 %v3364
        %3396 = vmatmul.f32.gmra.mxu0 %v2316
        %v3397 = vpop.f32.mrf.mxu0
        %v3398 = vadd.f32 0.0, %v3397
        %3399 = vmatmul.f32.gmra.mxu0 %v2317
        %v3400 = vpop.f32.mrf.mxu0
        %v3401 = vadd.f32 0.0, %v3400
        %3402 = vmatmul.f32.gmra.mxu0 %v2318
        %v3403 = vpop.f32.mrf.mxu0
        %v3404 = vadd.f32 0.0, %v3403
        %3405 = vmatmul.f32.gmra.mxu0 %v2319
        %v3406 = vpop.f32.mrf.mxu0
        %v3407 = vadd.f32 0.0, %v3406
        %3408 = vmatmul.f32.gmra.mxu0 %v2320
        %v3409 = vpop.f32.mrf.mxu0
        %v3410 = vadd.f32 0.0, %v3409
        %3411 = vmatmul.f32.gmra.mxu0 %v2321
        %v3412 = vpop.f32.mrf.mxu0
        %v3413 = vadd.f32 0.0, %v3412
        %3414 = vmatmul.f32.gmra.mxu0 %v2322
        %v3415 = vpop.f32.mrf.mxu0
        %v3416 = vadd.f32 0.0, %v3415
        %3417 = vmatmul.f32.gmra.mxu0 %v2323
        %v3418 = vpop.f32.mrf.mxu0
        %v3419 = vadd.f32 0.0, %v3418
        %3420 = vmatmul.f32.gmra.mxu0 %v2324
        %v3421 = vpop.f32.mrf.mxu0
        %v3422 = vadd.f32 0.0, %v3421
        %3423 = vmatmul.f32.gmra.mxu0 %v2325
        %v3424 = vpop.f32.mrf.mxu0
        %v3425 = vadd.f32 0.0, %v3424
        %3426 = vmatmul.f32.gmra.mxu0 %v2326
        %v3427 = vpop.f32.mrf.mxu0
        %v3428 = vadd.f32 0.0, %v3427
        %3429 = vmatmul.f32.gmra.mxu0 %v2327
        %v3430 = vpop.f32.mrf.mxu0
        %v3431 = vadd.f32 0.0, %v3430
        %3432 = vmatmul.f32.gmra.mxu0 %v2328
        %v3433 = vpop.f32.mrf.mxu0
        %v3434 = vadd.f32 0.0, %v3433
        %3435 = vmatmul.f32.gmra.mxu0 %v2329
        %v3436 = vpop.f32.mrf.mxu0
        %v3437 = vadd.f32 0.0, %v3436
        %3438 = vmatmul.f32.gmra.mxu0 %v2330
        %v3439 = vpop.f32.mrf.mxu0
        %v3440 = vadd.f32 0.0, %v3439
        %3441 = vmatmul.f32.gmra.mxu0 %v2331
        %v3442 = vpop.f32.mrf.mxu0
        %v3443 = vadd.f32 0.0, %v3442
        %3444 = vmatmul.f32.gmra.mxu0 %v2332
        %v3445 = vpop.f32.mrf.mxu0
        %v3446 = vadd.f32 0.0, %v3445
        %3447 = vmatmul.f32.gmra.mxu0 %v2333
        %v3448 = vpop.f32.mrf.mxu0
        %v3449 = vadd.f32 0.0, %v3448
        %3450 = vmatmul.f32.gmra.mxu0 %v2334
        %v3451 = vpop.f32.mrf.mxu0
        %v3452 = vadd.f32 0.0, %v3451
        %3453 = vmatmul.f32.gmra.mxu0 %v2335
        %v3454 = vpop.f32.mrf.mxu0
        %v3455 = vadd.f32 0.0, %v3454
        %3456 = vmatmul.f32.gmra.mxu0 %v2336
        %v3457 = vpop.f32.mrf.mxu0
        %v3458 = vadd.f32 0.0, %v3457
        %3459 = vmatmul.f32.gmra.mxu0 %v2337
        %v3460 = vpop.f32.mrf.mxu0
        %v3461 = vadd.f32 0.0, %v3460
        %3462 = vmatmul.f32.gmra.mxu0 %v2338
        %v3463 = vpop.f32.mrf.mxu0
        %v3464 = vadd.f32 0.0, %v3463
        %3465 = vmatmul.f32.gmra.mxu0 %v2339
        %v3466 = vpop.f32.mrf.mxu0
        %v3467 = vadd.f32 0.0, %v3466
        %3468 = vmatmul.f32.gmra.mxu0 %v2340
        %v3469 = vpop.f32.mrf.mxu0
        %v3470 = vadd.f32 0.0, %v3469
        %3471 = vmatmul.f32.gmra.mxu0 %v2341
        %v3472 = vpop.f32.mrf.mxu0
        %v3473 = vadd.f32 0.0, %v3472
        %3474 = vmatmul.f32.gmra.mxu0 %v2342
        %v3475 = vpop.f32.mrf.mxu0
        %v3476 = vadd.f32 0.0, %v3475
        %3477 = vmatmul.f32.gmra.mxu0 %v2343
        %v3478 = vpop.f32.mrf.mxu0
        %v3479 = vadd.f32 0.0, %v3478
        %3480 = vmatmul.f32.gmra.mxu0 %v2344
        %v3481 = vpop.f32.mrf.mxu0
        %v3482 = vadd.f32 0.0, %v3481
        %3483 = vmatmul.f32.gmra.mxu0 %v2345
        %v3484 = vpop.f32.mrf.mxu0
        %v3485 = vadd.f32 0.0, %v3484
        %3486 = vmatmul.f32.gmra.mxu0 %v2346
        %v3487 = vpop.f32.mrf.mxu0
        %v3488 = vadd.f32 0.0, %v3487
        %3489 = vmatmul.f32.gmra.mxu0 %v2347
        %v3490 = vpop.f32.mrf.mxu0
        %v3491 = vadd.f32 0.0, %v3490
        %3492 = vdwg.mxu0
        %v3493 = vadd.f32 %v3331, %v3398
        %v3494 = vadd.f32 %v3332, %v3401
        %v3495 = vadd.f32 %v3333, %v3404
        %v3496 = vadd.f32 %v3334, %v3407
        %v3497 = vadd.f32 %v3335, %v3410
        %v3498 = vadd.f32 %v3336, %v3413
        %v3499 = vadd.f32 %v3337, %v3416
        %v3500 = vadd.f32 %v3338, %v3419
        %v3501 = vadd.f32 %v3339, %v3422
        %v3502 = vadd.f32 %v3340, %v3425
        %v3503 = vadd.f32 %v3341, %v3428
        %v3504 = vadd.f32 %v3342, %v3431
        %v3505 = vadd.f32 %v3343, %v3434
        %v3506 = vadd.f32 %v3344, %v3437
        %v3507 = vadd.f32 %v3345, %v3440
        %v3508 = vadd.f32 %v3346, %v3443
        %v3509 = vadd.f32 %v3347, %v3446
        %v3510 = vadd.f32 %v3348, %v3449
        %v3511 = vadd.f32 %v3349, %v3452
        %v3512 = vadd.f32 %v3350, %v3455
        %v3513 = vadd.f32 %v3351, %v3458
        %v3514 = vadd.f32 %v3352, %v3461
        %v3515 = vadd.f32 %v3353, %v3464
        %v3516 = vadd.f32 %v3354, %v3467
        %v3517 = vadd.f32 %v3355, %v3470
        %v3518 = vadd.f32 %v3356, %v3473
        %v3519 = vadd.f32 %v3357, %v3476
        %v3520 = vadd.f32 %v3358, %v3479
        %v3521 = vadd.f32 %v3359, %v3482
        %v3522 = vadd.f32 %v3360, %v3485
        %v3523 = vadd.f32 %v3361, %v3488
        %v3524 = vadd.f32 %v3362, %v3491
        %s3525 = scalar_lea.vmem [#allocation8], 896
        %v3526 = vld [vmem:[%s3525] sm:$0xff]
        %v3527 = vld [vmem:[%s3525 + $0x8] sm:$0xff]
        %v3528 = vld [vmem:[%s3525 + $0x10] sm:$0xff]
        %v3529 = vld [vmem:[%s3525 + $0x18] sm:$0xff]
        %v3530 = vld [vmem:[%s3525 + $0x20] sm:$0xff]
        %v3531 = vld [vmem:[%s3525 + $0x28] sm:$0xff]
        %v3532 = vld [vmem:[%s3525 + $0x30] sm:$0xff]
        %v3533 = vld [vmem:[%s3525 + $0x38] sm:$0xff]
        %v3534 = vld [vmem:[%s3525 + $0x40] sm:$0xff]
        %v3535 = vld [vmem:[%s3525 + $0x48] sm:$0xff]
        %v3536 = vld [vmem:[%s3525 + $0x50] sm:$0xff]
        %v3537 = vld [vmem:[%s3525 + $0x58] sm:$0xff]
        %v3538 = vld [vmem:[%s3525 + $0x60] sm:$0xff]
        %v3539 = vld [vmem:[%s3525 + $0x68] sm:$0xff]
        %v3540 = vld [vmem:[%s3525 + $0x70] sm:$0xff]
        %v3541 = vld [vmem:[%s3525 + $0x78] sm:$0xff]
        %3542 = vmatpush.msra.mxu0 %v3541
        %3543 = vmatpush.msra.mxu0 %v3540
        %3544 = vmatpush.msra.mxu0 %v3539
        %3545 = vmatpush.msra.mxu0 %v3538
        %3546 = vmatpush.msra.mxu0 %v3537
        %3547 = vmatpush.msra.mxu0 %v3536
        %3548 = vmatpush.msra.mxu0 %v3535
        %3549 = vmatpush.msra.mxu0 %v3534
        %3550 = vmatpush.msra.mxu0 %v3533
        %3551 = vmatpush.msra.mxu0 %v3532
        %3552 = vmatpush.msra.mxu0 %v3531
        %3553 = vmatpush.msra.mxu0 %v3530
        %3554 = vmatpush.msra.mxu0 %v3529
        %3555 = vmatpush.msra.mxu0 %v3528
        %3556 = vmatpush.msra.mxu0 %v3527
        %3557 = vmatpush.msra.mxu0 %v3526
        %3558 = vmatmul.f32.gmra.mxu0 %v2208
        %v3559 = vpop.f32.mrf.mxu0
        %v3560 = vadd.f32 0.0, %v3559
        %3561 = vmatmul.f32.gmra.mxu0 %v2209
        %v3562 = vpop.f32.mrf.mxu0
        %v3563 = vadd.f32 0.0, %v3562
        %3564 = vmatmul.f32.gmra.mxu0 %v2210
        %v3565 = vpop.f32.mrf.mxu0
        %v3566 = vadd.f32 0.0, %v3565
        %3567 = vmatmul.f32.gmra.mxu0 %v2211
        %v3568 = vpop.f32.mrf.mxu0
        %v3569 = vadd.f32 0.0, %v3568
        %3570 = vmatmul.f32.gmra.mxu0 %v2212
        %v3571 = vpop.f32.mrf.mxu0
        %v3572 = vadd.f32 0.0, %v3571
        %3573 = vmatmul.f32.gmra.mxu0 %v2213
        %v3574 = vpop.f32.mrf.mxu0
        %v3575 = vadd.f32 0.0, %v3574
        %3576 = vmatmul.f32.gmra.mxu0 %v2214
        %v3577 = vpop.f32.mrf.mxu0
        %v3578 = vadd.f32 0.0, %v3577
        %3579 = vmatmul.f32.gmra.mxu0 %v2215
        %v3580 = vpop.f32.mrf.mxu0
        %v3581 = vadd.f32 0.0, %v3580
        %3582 = vmatmul.f32.gmra.mxu0 %v2216
        %v3583 = vpop.f32.mrf.mxu0
        %v3584 = vadd.f32 0.0, %v3583
        %3585 = vmatmul.f32.gmra.mxu0 %v2217
        %v3586 = vpop.f32.mrf.mxu0
        %v3587 = vadd.f32 0.0, %v3586
        %3588 = vmatmul.f32.gmra.mxu0 %v2218
        %v3589 = vpop.f32.mrf.mxu0
        %v3590 = vadd.f32 0.0, %v3589
        %3591 = vmatmul.f32.gmra.mxu0 %v2219
        %v3592 = vpop.f32.mrf.mxu0
        %v3593 = vadd.f32 0.0, %v3592
        %3594 = vmatmul.f32.gmra.mxu0 %v2220
        %v3595 = vpop.f32.mrf.mxu0
        %v3596 = vadd.f32 0.0, %v3595
        %3597 = vmatmul.f32.gmra.mxu0 %v2221
        %v3598 = vpop.f32.mrf.mxu0
        %v3599 = vadd.f32 0.0, %v3598
        %3600 = vmatmul.f32.gmra.mxu0 %v2222
        %v3601 = vpop.f32.mrf.mxu0
        %v3602 = vadd.f32 0.0, %v3601
        %3603 = vmatmul.f32.gmra.mxu0 %v2223
        %v3604 = vpop.f32.mrf.mxu0
        %v3605 = vadd.f32 0.0, %v3604
        %3606 = vmatmul.f32.gmra.mxu0 %v2224
        %v3607 = vpop.f32.mrf.mxu0
        %v3608 = vadd.f32 0.0, %v3607
        %3609 = vmatmul.f32.gmra.mxu0 %v2225
        %v3610 = vpop.f32.mrf.mxu0
        %v3611 = vadd.f32 0.0, %v3610
        %3612 = vmatmul.f32.gmra.mxu0 %v2226
        %v3613 = vpop.f32.mrf.mxu0
        %v3614 = vadd.f32 0.0, %v3613
        %3615 = vmatmul.f32.gmra.mxu0 %v2227
        %v3616 = vpop.f32.mrf.mxu0
        %v3617 = vadd.f32 0.0, %v3616
        %3618 = vmatmul.f32.gmra.mxu0 %v2228
        %v3619 = vpop.f32.mrf.mxu0
        %v3620 = vadd.f32 0.0, %v3619
        %3621 = vmatmul.f32.gmra.mxu0 %v2229
        %v3622 = vpop.f32.mrf.mxu0
        %v3623 = vadd.f32 0.0, %v3622
        %3624 = vmatmul.f32.gmra.mxu0 %v2230
        %v3625 = vpop.f32.mrf.mxu0
        %v3626 = vadd.f32 0.0, %v3625
        %3627 = vmatmul.f32.gmra.mxu0 %v2231
        %v3628 = vpop.f32.mrf.mxu0
        %v3629 = vadd.f32 0.0, %v3628
        %3630 = vmatmul.f32.gmra.mxu0 %v2232
        %v3631 = vpop.f32.mrf.mxu0
        %v3632 = vadd.f32 0.0, %v3631
        %3633 = vmatmul.f32.gmra.mxu0 %v2233
        %v3634 = vpop.f32.mrf.mxu0
        %v3635 = vadd.f32 0.0, %v3634
        %3636 = vmatmul.f32.gmra.mxu0 %v2234
        %v3637 = vpop.f32.mrf.mxu0
        %v3638 = vadd.f32 0.0, %v3637
        %3639 = vmatmul.f32.gmra.mxu0 %v2235
        %v3640 = vpop.f32.mrf.mxu0
        %v3641 = vadd.f32 0.0, %v3640
        %3642 = vmatmul.f32.gmra.mxu0 %v2236
        %v3643 = vpop.f32.mrf.mxu0
        %v3644 = vadd.f32 0.0, %v3643
        %3645 = vmatmul.f32.gmra.mxu0 %v2237
        %v3646 = vpop.f32.mrf.mxu0
        %v3647 = vadd.f32 0.0, %v3646
        %3648 = vmatmul.f32.gmra.mxu0 %v2238
        %v3649 = vpop.f32.mrf.mxu0
        %v3650 = vadd.f32 0.0, %v3649
        %3651 = vmatmul.f32.gmra.mxu0 %v2239
        %v3652 = vpop.f32.mrf.mxu0
        %v3653 = vadd.f32 0.0, %v3652
        %3654 = vdwg.mxu0
        %v3655 = vadd.f32 %v3493, %v3560
        %v3656 = vadd.f32 %v3494, %v3563
        %v3657 = vadd.f32 %v3495, %v3566
        %v3658 = vadd.f32 %v3496, %v3569
        %v3659 = vadd.f32 %v3497, %v3572
        %v3660 = vadd.f32 %v3498, %v3575
        %v3661 = vadd.f32 %v3499, %v3578
        %v3662 = vadd.f32 %v3500, %v3581
        %v3663 = vadd.f32 %v3501, %v3584
        %v3664 = vadd.f32 %v3502, %v3587
        %v3665 = vadd.f32 %v3503, %v3590
        %v3666 = vadd.f32 %v3504, %v3593
        %v3667 = vadd.f32 %v3505, %v3596
        %v3668 = vadd.f32 %v3506, %v3599
        %v3669 = vadd.f32 %v3507, %v3602
        %v3670 = vadd.f32 %v3508, %v3605
        %v3671 = vadd.f32 %v3509, %v3608
        %v3672 = vadd.f32 %v3510, %v3611
        %v3673 = vadd.f32 %v3511, %v3614
        %v3674 = vadd.f32 %v3512, %v3617
        %v3675 = vadd.f32 %v3513, %v3620
        %v3676 = vadd.f32 %v3514, %v3623
        %v3677 = vadd.f32 %v3515, %v3626
        %v3678 = vadd.f32 %v3516, %v3629
        %v3679 = vadd.f32 %v3517, %v3632
        %v3680 = vadd.f32 %v3518, %v3635
        %v3681 = vadd.f32 %v3519, %v3638
        %v3682 = vadd.f32 %v3520, %v3641
        %v3683 = vadd.f32 %v3521, %v3644
        %v3684 = vadd.f32 %v3522, %v3647
        %v3685 = vadd.f32 %v3523, %v3650
        %v3686 = vadd.f32 %v3524, %v3653
        %s3687 = scalar_lea.vmem [#allocation8], 1024
        %v3688 = vld [vmem:[%s3687] sm:$0xff]
        %v3689 = vld [vmem:[%s3687 + $0x8] sm:$0xff]
        %v3690 = vld [vmem:[%s3687 + $0x10] sm:$0xff]
        %v3691 = vld [vmem:[%s3687 + $0x18] sm:$0xff]
        %v3692 = vld [vmem:[%s3687 + $0x20] sm:$0xff]
        %v3693 = vld [vmem:[%s3687 + $0x28] sm:$0xff]
        %v3694 = vld [vmem:[%s3687 + $0x30] sm:$0xff]
        %v3695 = vld [vmem:[%s3687 + $0x38] sm:$0xff]
        %v3696 = vld [vmem:[%s3687 + $0x40] sm:$0xff]
        %v3697 = vld [vmem:[%s3687 + $0x48] sm:$0xff]
        %v3698 = vld [vmem:[%s3687 + $0x50] sm:$0xff]
        %v3699 = vld [vmem:[%s3687 + $0x58] sm:$0xff]
        %v3700 = vld [vmem:[%s3687 + $0x60] sm:$0xff]
        %v3701 = vld [vmem:[%s3687 + $0x68] sm:$0xff]
        %v3702 = vld [vmem:[%s3687 + $0x70] sm:$0xff]
        %v3703 = vld [vmem:[%s3687 + $0x78] sm:$0xff]
        %3704 = vmatpush.msra.mxu0 %v3703
        %3705 = vmatpush.msra.mxu0 %v3702
        %3706 = vmatpush.msra.mxu0 %v3701
        %3707 = vmatpush.msra.mxu0 %v3700
        %3708 = vmatpush.msra.mxu0 %v3699
        %3709 = vmatpush.msra.mxu0 %v3698
        %3710 = vmatpush.msra.mxu0 %v3697
        %3711 = vmatpush.msra.mxu0 %v3696
        %3712 = vmatpush.msra.mxu0 %v3695
        %3713 = vmatpush.msra.mxu0 %v3694
        %3714 = vmatpush.msra.mxu0 %v3693
        %3715 = vmatpush.msra.mxu0 %v3692
        %3716 = vmatpush.msra.mxu0 %v3691
        %3717 = vmatpush.msra.mxu0 %v3690
        %3718 = vmatpush.msra.mxu0 %v3689
        %3719 = vmatpush.msra.mxu0 %v3688
        %3720 = vmatmul.f32.gmra.mxu0 %v2424
        %v3721 = vpop.f32.mrf.mxu0
        %v3722 = vadd.f32 0.0, %v3721
        %3723 = vmatmul.f32.gmra.mxu0 %v2425
        %v3724 = vpop.f32.mrf.mxu0
        %v3725 = vadd.f32 0.0, %v3724
        %3726 = vmatmul.f32.gmra.mxu0 %v2426
        %v3727 = vpop.f32.mrf.mxu0
        %v3728 = vadd.f32 0.0, %v3727
        %3729 = vmatmul.f32.gmra.mxu0 %v2427
        %v3730 = vpop.f32.mrf.mxu0
        %v3731 = vadd.f32 0.0, %v3730
        %3732 = vmatmul.f32.gmra.mxu0 %v2428
        %v3733 = vpop.f32.mrf.mxu0
        %v3734 = vadd.f32 0.0, %v3733
        %3735 = vmatmul.f32.gmra.mxu0 %v2429
        %v3736 = vpop.f32.mrf.mxu0
        %v3737 = vadd.f32 0.0, %v3736
        %3738 = vmatmul.f32.gmra.mxu0 %v2430
        %v3739 = vpop.f32.mrf.mxu0
        %v3740 = vadd.f32 0.0, %v3739
        %3741 = vmatmul.f32.gmra.mxu0 %v2431
        %v3742 = vpop.f32.mrf.mxu0
        %v3743 = vadd.f32 0.0, %v3742
        %3744 = vmatmul.f32.gmra.mxu0 %v2432
        %v3745 = vpop.f32.mrf.mxu0
        %v3746 = vadd.f32 0.0, %v3745
        %3747 = vmatmul.f32.gmra.mxu0 %v2433
        %v3748 = vpop.f32.mrf.mxu0
        %v3749 = vadd.f32 0.0, %v3748
        %3750 = vmatmul.f32.gmra.mxu0 %v2434
        %v3751 = vpop.f32.mrf.mxu0
        %v3752 = vadd.f32 0.0, %v3751
        %3753 = vmatmul.f32.gmra.mxu0 %v2435
        %v3754 = vpop.f32.mrf.mxu0
        %v3755 = vadd.f32 0.0, %v3754
        %3756 = vmatmul.f32.gmra.mxu0 %v2436
        %v3757 = vpop.f32.mrf.mxu0
        %v3758 = vadd.f32 0.0, %v3757
        %3759 = vmatmul.f32.gmra.mxu0 %v2437
        %v3760 = vpop.f32.mrf.mxu0
        %v3761 = vadd.f32 0.0, %v3760
        %3762 = vmatmul.f32.gmra.mxu0 %v2438
        %v3763 = vpop.f32.mrf.mxu0
        %v3764 = vadd.f32 0.0, %v3763
        %3765 = vmatmul.f32.gmra.mxu0 %v2439
        %v3766 = vpop.f32.mrf.mxu0
        %v3767 = vadd.f32 0.0, %v3766
        %3768 = vmatmul.f32.gmra.mxu0 %v2440
        %v3769 = vpop.f32.mrf.mxu0
        %v3770 = vadd.f32 0.0, %v3769
        %3771 = vmatmul.f32.gmra.mxu0 %v2441
        %v3772 = vpop.f32.mrf.mxu0
        %v3773 = vadd.f32 0.0, %v3772
        %3774 = vmatmul.f32.gmra.mxu0 %v2442
        %v3775 = vpop.f32.mrf.mxu0
        %v3776 = vadd.f32 0.0, %v3775
        %3777 = vmatmul.f32.gmra.mxu0 %v2443
        %v3778 = vpop.f32.mrf.mxu0
        %v3779 = vadd.f32 0.0, %v3778
        %3780 = vmatmul.f32.gmra.mxu0 %v2444
        %v3781 = vpop.f32.mrf.mxu0
        %v3782 = vadd.f32 0.0, %v3781
        %3783 = vmatmul.f32.gmra.mxu0 %v2445
        %v3784 = vpop.f32.mrf.mxu0
        %v3785 = vadd.f32 0.0, %v3784
        %3786 = vmatmul.f32.gmra.mxu0 %v2446
        %v3787 = vpop.f32.mrf.mxu0
        %v3788 = vadd.f32 0.0, %v3787
        %3789 = vmatmul.f32.gmra.mxu0 %v2447
        %v3790 = vpop.f32.mrf.mxu0
        %v3791 = vadd.f32 0.0, %v3790
        %3792 = vmatmul.f32.gmra.mxu0 %v2448
        %v3793 = vpop.f32.mrf.mxu0
        %v3794 = vadd.f32 0.0, %v3793
        %3795 = vmatmul.f32.gmra.mxu0 %v2449
        %v3796 = vpop.f32.mrf.mxu0
        %v3797 = vadd.f32 0.0, %v3796
        %3798 = vmatmul.f32.gmra.mxu0 %v2450
        %v3799 = vpop.f32.mrf.mxu0
        %v3800 = vadd.f32 0.0, %v3799
        %3801 = vmatmul.f32.gmra.mxu0 %v2451
        %v3802 = vpop.f32.mrf.mxu0
        %v3803 = vadd.f32 0.0, %v3802
        %3804 = vmatmul.f32.gmra.mxu0 %v2452
        %v3805 = vpop.f32.mrf.mxu0
        %v3806 = vadd.f32 0.0, %v3805
        %3807 = vmatmul.f32.gmra.mxu0 %v2453
        %v3808 = vpop.f32.mrf.mxu0
        %v3809 = vadd.f32 0.0, %v3808
        %3810 = vmatmul.f32.gmra.mxu0 %v2454
        %v3811 = vpop.f32.mrf.mxu0
        %v3812 = vadd.f32 0.0, %v3811
        %3813 = vmatmul.f32.gmra.mxu0 %v2455
        %v3814 = vpop.f32.mrf.mxu0
        %v3815 = vadd.f32 0.0, %v3814
        %3816 = vdwg.mxu0
        %v3817 = vadd.f32 %v3655, %v3722
        %v3818 = vadd.f32 %v3656, %v3725
        %v3819 = vadd.f32 %v3657, %v3728
        %v3820 = vadd.f32 %v3658, %v3731
        %v3821 = vadd.f32 %v3659, %v3734
        %v3822 = vadd.f32 %v3660, %v3737
        %v3823 = vadd.f32 %v3661, %v3740
        %v3824 = vadd.f32 %v3662, %v3743
        %v3825 = vadd.f32 %v3663, %v3746
        %v3826 = vadd.f32 %v3664, %v3749
        %v3827 = vadd.f32 %v3665, %v3752
        %v3828 = vadd.f32 %v3666, %v3755
        %v3829 = vadd.f32 %v3667, %v3758
        %v3830 = vadd.f32 %v3668, %v3761
        %v3831 = vadd.f32 %v3669, %v3764
        %v3832 = vadd.f32 %v3670, %v3767
        %v3833 = vadd.f32 %v3671, %v3770
        %v3834 = vadd.f32 %v3672, %v3773
        %v3835 = vadd.f32 %v3673, %v3776
        %v3836 = vadd.f32 %v3674, %v3779
        %v3837 = vadd.f32 %v3675, %v3782
        %v3838 = vadd.f32 %v3676, %v3785
        %v3839 = vadd.f32 %v3677, %v3788
        %v3840 = vadd.f32 %v3678, %v3791
        %v3841 = vadd.f32 %v3679, %v3794
        %v3842 = vadd.f32 %v3680, %v3797
        %v3843 = vadd.f32 %v3681, %v3800
        %v3844 = vadd.f32 %v3682, %v3803
        %v3845 = vadd.f32 %v3683, %v3806
        %v3846 = vadd.f32 %v3684, %v3809
        %v3847 = vadd.f32 %v3685, %v3812
        %v3848 = vadd.f32 %v3686, %v3815
        %v3849 = vld [vmem:[%s5] sm:$0x1]
        %v3851 = vperm.slane %v3849, 0
        %v3853 = vmul.f32 %v3817, %v3851
        %v3854 = vmul.f32 %v3818, %v3851
        %v3855 = vmul.f32 %v3819, %v3851
        %v3856 = vmul.f32 %v3820, %v3851
        %v3857 = vmul.f32 %v3821, %v3851
        %v3858 = vmul.f32 %v3822, %v3851
        %v3859 = vmul.f32 %v3823, %v3851
        %v3860 = vmul.f32 %v3824, %v3851
        %v3861 = vmul.f32 %v3825, %v3851
        %v3862 = vmul.f32 %v3826, %v3851
        %v3863 = vmul.f32 %v3827, %v3851
        %v3864 = vmul.f32 %v3828, %v3851
        %v3865 = vmul.f32 %v3829, %v3851
        %v3866 = vmul.f32 %v3830, %v3851
        %v3867 = vmul.f32 %v3831, %v3851
        %v3868 = vmul.f32 %v3832, %v3851
        %v3869 = vmul.f32 %v3833, %v3851
        %v3870 = vmul.f32 %v3834, %v3851
        %v3871 = vmul.f32 %v3835, %v3851
        %v3872 = vmul.f32 %v3836, %v3851
        %v3873 = vmul.f32 %v3837, %v3851
        %v3874 = vmul.f32 %v3838, %v3851
        %v3875 = vmul.f32 %v3839, %v3851
        %v3876 = vmul.f32 %v3840, %v3851
        %v3877 = vmul.f32 %v3841, %v3851
        %v3878 = vmul.f32 %v3842, %v3851
        %v3879 = vmul.f32 %v3843, %v3851
        %v3880 = vmul.f32 %v3844, %v3851
        %v3881 = vmul.f32 %v3845, %v3851
        %v3882 = vmul.f32 %v3846, %v3851
        %v3883 = vmul.f32 %v3847, %v3851
        %v3884 = vmul.f32 %v3848, %v3851
        %v3885 = vld [vmem:[%s6] sm:$0x1]
        %v3887 = vperm.slane %v3885, 0
        %v3889 = vadd.f32 %v3853, %v3887
        %v3890 = vadd.f32 %v3854, %v3887
        %v3891 = vadd.f32 %v3855, %v3887
        %v3892 = vadd.f32 %v3856, %v3887
        %v3893 = vadd.f32 %v3857, %v3887
        %v3894 = vadd.f32 %v3858, %v3887
        %v3895 = vadd.f32 %v3859, %v3887
        %v3896 = vadd.f32 %v3860, %v3887
        %v3897 = vadd.f32 %v3861, %v3887
        %v3898 = vadd.f32 %v3862, %v3887
        %v3899 = vadd.f32 %v3863, %v3887
        %v3900 = vadd.f32 %v3864, %v3887
        %v3901 = vadd.f32 %v3865, %v3887
        %v3902 = vadd.f32 %v3866, %v3887
        %v3903 = vadd.f32 %v3867, %v3887
        %v3904 = vadd.f32 %v3868, %v3887
        %v3905 = vadd.f32 %v3869, %v3887
        %v3906 = vadd.f32 %v3870, %v3887
        %v3907 = vadd.f32 %v3871, %v3887
        %v3908 = vadd.f32 %v3872, %v3887
        %v3909 = vadd.f32 %v3873, %v3887
        %v3910 = vadd.f32 %v3874, %v3887
        %v3911 = vadd.f32 %v3875, %v3887
        %v3912 = vadd.f32 %v3876, %v3887
        %v3913 = vadd.f32 %v3877, %v3887
        %v3914 = vadd.f32 %v3878, %v3887
        %v3915 = vadd.f32 %v3879, %v3887
        %v3916 = vadd.f32 %v3880, %v3887
        %v3917 = vadd.f32 %v3881, %v3887
        %v3918 = vadd.f32 %v3882, %v3887
        %v3919 = vadd.f32 %v3883, %v3887
        %v3920 = vadd.f32 %v3884, %v3887
        %v3921 = vmax.f32 %v3889, 0.0
        %v3922 = vmax.f32 %v3890, 0.0
        %v3923 = vmax.f32 %v3891, 0.0
        %v3924 = vmax.f32 %v3892, 0.0
        %v3925 = vmax.f32 %v3893, 0.0
        %v3926 = vmax.f32 %v3894, 0.0
        %v3927 = vmax.f32 %v3895, 0.0
        %v3928 = vmax.f32 %v3896, 0.0
        %v3929 = vmax.f32 %v3897, 0.0
        %v3930 = vmax.f32 %v3898, 0.0
        %v3931 = vmax.f32 %v3899, 0.0
        %v3932 = vmax.f32 %v3900, 0.0
        %v3933 = vmax.f32 %v3901, 0.0
        %v3934 = vmax.f32 %v3902, 0.0
        %v3935 = vmax.f32 %v3903, 0.0
        %v3936 = vmax.f32 %v3904, 0.0
        %v3937 = vmax.f32 %v3905, 0.0
        %v3938 = vmax.f32 %v3906, 0.0
        %v3939 = vmax.f32 %v3907, 0.0
        %v3940 = vmax.f32 %v3908, 0.0
        %v3941 = vmax.f32 %v3909, 0.0
        %v3942 = vmax.f32 %v3910, 0.0
        %v3943 = vmax.f32 %v3911, 0.0
        %v3944 = vmax.f32 %v3912, 0.0
        %v3945 = vmax.f32 %v3913, 0.0
        %v3946 = vmax.f32 %v3914, 0.0
        %v3947 = vmax.f32 %v3915, 0.0
        %v3948 = vmax.f32 %v3916, 0.0
        %v3949 = vmax.f32 %v3917, 0.0
        %v3950 = vmax.f32 %v3918, 0.0
        %v3951 = vmax.f32 %v3919, 0.0
        %v3952 = vmax.f32 %v3920, 0.0
        %v3953 = vadd.f32 %v3921, %v332
        %v3954 = vadd.f32 %v3922, %v333
        %v3955 = vadd.f32 %v3923, %v334
        %v3956 = vadd.f32 %v3924, %v335
        %v3957 = vadd.f32 %v3925, %v336
        %v3958 = vadd.f32 %v3926, %v337
        %v3959 = vadd.f32 %v3927, %v338
        %v3960 = vadd.f32 %v3928, %v339
        %v3961 = vadd.f32 %v3929, %v340
        %v3962 = vadd.f32 %v3930, %v341
        %v3963 = vadd.f32 %v3931, %v342
        %v3964 = vadd.f32 %v3932, %v343
        %v3965 = vadd.f32 %v3933, %v344
        %v3966 = vadd.f32 %v3934, %v345
        %v3967 = vadd.f32 %v3935, %v346
        %v3968 = vadd.f32 %v3936, %v347
        %v3969 = vadd.f32 %v3937, %v348
        %v3970 = vadd.f32 %v3938, %v349
        %v3971 = vadd.f32 %v3939, %v350
        %v3972 = vadd.f32 %v3940, %v351
        %v3973 = vadd.f32 %v3941, %v352
        %v3974 = vadd.f32 %v3942, %v353
        %v3975 = vadd.f32 %v3943, %v354
        %v3976 = vadd.f32 %v3944, %v355
        %v3977 = vadd.f32 %v3945, %v356
        %v3978 = vadd.f32 %v3946, %v357
        %v3979 = vadd.f32 %v3947, %v358
        %v3980 = vadd.f32 %v3948, %v359
        %v3981 = vadd.f32 %v3949, %v360
        %v3982 = vadd.f32 %v3950, %v361
        %v3983 = vadd.f32 %v3951, %v362
        %v3984 = vadd.f32 %v3952, %v363
        %3985 = vst [vmem:[%s331] sm:$0xff] %v3953
        %3986 = vst [vmem:[%s331 + $0x8] sm:$0xff] %v3954
        %3987 = vst [vmem:[%s331 + $0x10] sm:$0xff] %v3955
        %3988 = vst [vmem:[%s331 + $0x18] sm:$0xff] %v3956
        %3989 = vst [vmem:[%s331 + $0x20] sm:$0xff] %v3957
        %3990 = vst [vmem:[%s331 + $0x28] sm:$0xff] %v3958
        %3991 = vst [vmem:[%s331 + $0x30] sm:$0xff] %v3959
        %3992 = vst [vmem:[%s331 + $0x38] sm:$0xff] %v3960
        %3993 = vst [vmem:[%s331 + $0x40] sm:$0xff] %v3961
        %3994 = vst [vmem:[%s331 + $0x48] sm:$0xff] %v3962
        %3995 = vst [vmem:[%s331 + $0x50] sm:$0xff] %v3963
        %3996 = vst [vmem:[%s331 + $0x58] sm:$0xff] %v3964
        %3997 = vst [vmem:[%s331 + $0x60] sm:$0xff] %v3965
        %3998 = vst [vmem:[%s331 + $0x68] sm:$0xff] %v3966
        %3999 = vst [vmem:[%s331 + $0x70] sm:$0xff] %v3967
        %4000 = vst [vmem:[%s331 + $0x78] sm:$0xff] %v3968
        %4001 = vst [vmem:[%s331 + $0x80] sm:$0xff] %v3969
        %4002 = vst [vmem:[%s331 + $0x88] sm:$0xff] %v3970
        %4003 = vst [vmem:[%s331 + $0x90] sm:$0xff] %v3971
        %4004 = vst [vmem:[%s331 + $0x98] sm:$0xff] %v3972
        %4005 = vst [vmem:[%s331 + $0xa0] sm:$0xff] %v3973
        %4006 = vst [vmem:[%s331 + $0xa8] sm:$0xff] %v3974
        %4007 = vst [vmem:[%s331 + $0xb0] sm:$0xff] %v3975
        %4008 = vst [vmem:[%s331 + $0xb8] sm:$0xff] %v3976
        %4009 = vst [vmem:[%s331 + $0xc0] sm:$0xff] %v3977
        %4010 = vst [vmem:[%s331 + $0xc8] sm:$0xff] %v3978
        %4011 = vst [vmem:[%s331 + $0xd0] sm:$0xff] %v3979
        %4012 = vst [vmem:[%s331 + $0xd8] sm:$0xff] %v3980
        %4013 = vst [vmem:[%s331 + $0xe0] sm:$0xff] %v3981
        %4014 = vst [vmem:[%s331 + $0xe8] sm:$0xff] %v3982
        %4015 = vst [vmem:[%s331 + $0xf0] sm:$0xff] %v3983
        %4016 = vst [vmem:[%s331 + $0xf8] sm:$0xff] %v3984
        %s4017 = sand.u32 %s185, 1
        %s4018 = scalar_lea.sflag [#allocation5], %s4017
        %s4019 = sand.u32 %s185, 1
        %s4020 = smul.addr %s4019, 256
        %s4021 = scalar_lea.vmem [#allocation9], %s4020
        // Predicated region
        $region61: #{tpu_custom_call.1} parent=47 // pred_check
          %p4022 = pneg %p195
        $region62: #{tpu_custom_call.1} parent=47 // pred_check_branch
          %4024 = sbr.rel (%p4022) target = $region64
        $region63: #{tpu_custom_call.1} parent=47 // pred_region
          %4026 = vsyncadd %s4018, 0
          %s4027 = smul.addr %s25, 32
          %s4028 = smul.addr %s4027, 8
          %s4029 = scalar_lea.hbm %s7, %s4028
          %s4030 = sshll.u32 %s4021, 4
          %s4031 = int_to_ptr.vmem [resolvable:$true] %s4030
          %s4032 = sshll.u32 %s4029, 4
          %s4033 = int_to_ptr.hbm [resolvable:$true] %s4032
          %4038 = dma.vmem_to_hbm [thread:$0]  %s4031, 4096, %s4033, %s4018, 128, 128, 8
        $region64: #{tpu_custom_call.1} parent=47 // pred_fallthru
          _
      $region48: #{tpu_custom_call.1} parent=5 // pred_fallthru
        _
      %p4039 = scmp.le.s32.totalorder 2, %s20
      // Predicated region
      $region65: #{tpu_custom_call.1} parent=5 // pred_check
        %p4040 = pneg %p4039
      $region66: #{tpu_custom_call.1} parent=5 // pred_check_branch
        %4042 = sbr.rel (%p4040) target = $region68
      $region67: #{tpu_custom_call.1} parent=5 // pred_region
        %s4043 = ssub.s32 %s20, 2
        // Predicated region
        $region69: #{tpu_custom_call.1} parent=67 // pred_check
          %p4044 = pneg %p201
        $region70: #{tpu_custom_call.1} parent=67 // pred_check_branch
          %4046 = sbr.rel (%p4044) target = $region72
        $region71: #{tpu_custom_call.1} parent=67 // pred_region
          %s4047 = sand.u32 %s186, 1
          %s4048 = scalar_lea.sflag [#allocation5], %s4047
          %s4049 = sand.u32 %s186, 1
          %s4050 = smul.addr %s4049, 256
          %s4051 = scalar_lea.vmem [#allocation9], %s4050
          %4053 = dma.done %s4048, 4096
        $region72: #{tpu_custom_call.1} parent=67 // pred_fallthru
          _
      $region68: #{tpu_custom_call.1} parent=5 // pred_fallthru
        _
    $region6: #{tpu_custom_call.1} parent=1 // loop_footer
      %s24 = sadd.s32 1, %s20
    $region7: #{tpu_custom_call.1} parent=1 // loop_footer_branch
      %19 = sbr.rel target = $region3
    $region8: #{tpu_custom_call.1} parent=1 // loop_exit
      _
    %4054 = vsyncpa [#allocation4], 1
    %s4055 = scalar_lea.sflag [#allocation4], 1
    %4056 = vsyncpa %s4055, 1
    %4057 = vsyncpa [#allocation7], 1
    %4058 = vsyncpa [#allocation5], 1
    %s4059 = scalar_lea.sflag [#allocation5], 1
    %4060 = vsyncpa %s4059, 1

</llo_original>
